<compile_context>
chip_gen: v6e
topology: v6e:2x2x1
jax: 0.10.0
libtpu: 0.0.40
codegen_flags: <defaults>
</compile_context>

<pallas_src>
import functools
import math

import jax
import jax.numpy as jnp
from jax import lax
from jax.experimental import pallas as pl
from jax.experimental.pallas import tpu as pltpu


def _layer_norm(t, gamma, beta, eps):
    mu = jnp.mean(t, axis=-1, keepdims=True)
    c = t - mu
    var = jnp.mean(c * c, axis=-1, keepdims=True)
    return c * lax.rsqrt(var + eps) * gamma + beta


def _encoder_layer_kernel(
    x_ref,
    wq_ref, bq_ref, wk_ref, bk_ref, wv_ref, bv_ref,
    wo_ref, bo_ref,
    w1_ref, b1_ref, w2_ref, b2_ref,
    g1_ref, be1_ref, g2_ref, be2_ref,
    o_ref,
    *, n_heads: int, eps: float,
):
    x = x_ref[...].astype(jnp.float32)                 # (L, D)
    L, D = x.shape
    dh = D // n_heads
    scale = jnp.float32(1.0 / math.sqrt(dh))

    # ---- multi-head self-attention (per-head weights; no lane slicing) ----
    attn = jnp.zeros((L, D), jnp.float32)
    for h in range(n_heads):                           # static unroll, H small
        q_h = jnp.dot(x, wq_ref[h].astype(jnp.float32),
                      preferred_element_type=jnp.float32) + bq_ref[h].astype(jnp.float32)
        k_h = jnp.dot(x, wk_ref[h].astype(jnp.float32),
                      preferred_element_type=jnp.float32) + bk_ref[h].astype(jnp.float32)
        v_h = jnp.dot(x, wv_ref[h].astype(jnp.float32),
                      preferred_element_type=jnp.float32) + bv_ref[h].astype(jnp.float32)
        # scores: contract head dim of q and k -> (L, L)
        s = jnp.einsum("ld,sd->ls", q_h, k_h,
                       preferred_element_type=jnp.float32) * scale
        s = s - jnp.max(s, axis=-1, keepdims=True)
        p = jnp.exp(s)
        p = p / jnp.sum(p, axis=-1, keepdims=True)
        ctx_h = jnp.dot(p, v_h, preferred_element_type=jnp.float32)       # (L, dh)
        attn = attn + jnp.dot(ctx_h, wo_ref[h].astype(jnp.float32),
                              preferred_element_type=jnp.float32)         # (L, D)
    attn = attn + bo_ref[...].astype(jnp.float32)

    # ---- residual + LayerNorm1 (dropout == identity in eval) ----
    x1 = x + attn
    y1 = _layer_norm(x1, g1_ref[...].astype(jnp.float32),
                     be1_ref[...].astype(jnp.float32), eps)

    # ---- position-wise FFN: conv1d(kernel_size=1) == per-position linear ----
    h1 = jnp.dot(y1, w1_ref[...].astype(jnp.float32),
                 preferred_element_type=jnp.float32) + b1_ref[...].astype(jnp.float32)
    h1 = jnp.maximum(h1, 0.0)                                             # relu
    h2 = jnp.dot(h1, w2_ref[...].astype(jnp.float32),
                 preferred_element_type=jnp.float32) + b2_ref[...].astype(jnp.float32)

    # ---- residual + LayerNorm2 ----
    out = _layer_norm(y1 + h2, g2_ref[...].astype(jnp.float32),
                      be2_ref[...].astype(jnp.float32), eps)
    o_ref[...] = out.astype(o_ref.dtype)


def encoder_layer_forward(x, params, *, n_heads, eps=1e-5):
    """Pallas equivalent of EncoderLayer.forward(x, attn_mask=None), eval mode."""
    # TODO(synk): attn_mask assumed None (standard encoder self-attention);
    #             dropout layers are identity (inference semantics).
    (wq, bq, wk, bk, wv, bv, wo, bo,
     w1, b1, w2, b2, g1, be1, g2, be2) = params
    B, L, D = x.shape
    assert D % n_heads == 0
    dh = D // n_heads
    d_ff = w1.shape[1]

    # Reshape projection weights to per-head form once, outside the kernel,
    # so the kernel never slices / concatenates the lane dimension.
    split_w = lambda w: w.reshape(D, n_heads, dh).transpose(1, 0, 2)   # (H, D, dh)
    split_b = lambda b: b.reshape(n_heads, 1, dh)                      # (H, 1, dh)
    operands = (
        split_w(wq), split_b(bq), split_w(wk), split_b(bk),
        split_w(wv), split_b(bv),
        wo.reshape(n_heads, dh, D), bo.reshape(1, D),
        w1, b1.reshape(1, d_ff), w2, b2.reshape(1, D),
        g1.reshape(1, D), be1.reshape(1, D), g2.reshape(1, D), be2.reshape(1, D),
    )

    def const_spec(a):
        zeros = (0,) * a.ndim
        return pl.BlockSpec(a.shape, lambda b: zeros)

    return pl.pallas_call(
        functools.partial(_encoder_layer_kernel, n_heads=n_heads, eps=eps),
        out_shape=jax.ShapeDtypeStruct((B, L, D), x.dtype),
        grid=(B,),
        in_specs=[pl.BlockSpec((None, L, D), lambda b: (b, 0, 0))]
                 + [const_spec(a) for a in operands],
        out_specs=pl.BlockSpec((None, L, D), lambda b: (b, 0, 0)),
        compiler_params=pltpu.CompilerParams(
            dimension_semantics=("parallel",),
        ),
    )(x, *operands)


def _reference_forward(x, params, *, n_heads, eps=1e-5):
    """Pure-JAX replica of PyTorch EncoderLayer with AttentionLayer(FullAttention), eval mode."""
    (wq, bq, wk, bk, wv, bv, wo, bo,
     w1, b1, w2, b2, g1, be1, g2, be2) = params
    B, L, D = x.shape
    dh = D // n_heads
    hp = lax.Precision.HIGHEST
    q = (jnp.matmul(x, wq, precision=hp) + bq).reshape(B, L, n_heads, dh)
    k = (jnp.matmul(x, wk, precision=hp) + bk).reshape(B, L, n_heads, dh)
    v = (jnp.matmul(x, wv, precision=hp) + bv).reshape(B, L, n_heads, dh)
    s = jnp.einsum("blhe,bshe->bhls", q, k, precision=hp) / math.sqrt(dh)
    a = jax.nn.softmax(s, axis=-1)
    ctx = jnp.einsum("bhls,bshe->blhe", a, v, precision=hp).reshape(B, L, D)
    new_x = jnp.matmul(ctx, wo, precision=hp) + bo
    x1 = x + new_x                                    # dropout == identity

    def ln(t, g, be):
        mu = jnp.mean(t, axis=-1, keepdims=True)
        var = jnp.mean((t - mu) ** 2, axis=-1, keepdims=True)
        return (t - mu) / jnp.sqrt(var + eps) * g + be

    y1 = ln(x1, g1, be1)
    h = jax.nn.relu(jnp.matmul(y1, w1, precision=hp) + b1)   # conv1 (k=1)
    y = jnp.matmul(h, w2, precision=hp) + b2                 # conv2 (k=1)
    return ln(y1 + y, g2, be2)


if __name__ == "__main__":
    key = jax.random.PRNGKey(0)
    B, L, D, H = 2, 8, 32, 4
    d_ff = 4 * D
    ks = jax.random.split(key, 18)

    def w(k, shape, fan_in):
        return jax.random.normal(k, shape, jnp.float32) / math.sqrt(fan_in)

    x = jax.random.normal(ks[0], (B, L, D), jnp.float32)
    params = (
        w(ks[1], (D, D), D), 0.1 * jax.random.normal(ks[2], (D,), jnp.float32),     # Wq, bq
        w(ks[3], (D, D), D), 0.1 * jax.random.normal(ks[4], (D,), jnp.float32),     # Wk, bk
        w(ks[5], (D, D), D), 0.1 * jax.random.normal(ks[6], (D,), jnp.float32),     # Wv, bv
        w(ks[7], (D, D), D), 0.1 * jax.random.normal(ks[8], (D,), jnp.float32),     # Wo, bo
        w(ks[9], (D, d_ff), D), 0.1 * jax.random.normal(ks[10], (d_ff,), jnp.float32),   # conv1
        w(ks[11], (d_ff, D), d_ff), 0.1 * jax.random.normal(ks[12], (D,), jnp.float32),  # conv2
        1.0 + 0.1 * jax.random.normal(ks[13], (D,), jnp.float32),                   # LN1 gamma
        0.1 * jax.random.normal(ks[14], (D,), jnp.float32),                         # LN1 beta
        1.0 + 0.1 * jax.random.normal(ks[15], (D,), jnp.float32),                   # LN2 gamma
        0.1 * jax.random.normal(ks[16], (D,), jnp.float32),                         # LN2 beta
    )

    out = encoder_layer_forward(x, params, n_heads=H)
    out = jax.block_until_ready(out)

    ref = jax.block_until_ready(_reference_forward(x, params, n_heads=H))
    assert out.shape == (B, L, D), out.shape
    max_diff = float(jnp.max(jnp.abs(out - ref)))
    assert max_diff < 2e-2, f"mismatch vs reference: max |diff| = {max_diff}"
    print("KERNEL_OK")
</pallas_src>

<mosaic_0001>
module attributes {stable_mosaic.version = 11 : i64} {
  func.func @_encoder_layer_kernel(%arg0: i32, %arg1: memref<1x8x32xf32, #tpu.memory_space<vmem>>, %arg2: memref<4x32x8xf32, #tpu.memory_space<vmem>>, %arg3: memref<4x1x8xf32, #tpu.memory_space<vmem>>, %arg4: memref<4x32x8xf32, #tpu.memory_space<vmem>>, %arg5: memref<4x1x8xf32, #tpu.memory_space<vmem>>, %arg6: memref<4x32x8xf32, #tpu.memory_space<vmem>>, %arg7: memref<4x1x8xf32, #tpu.memory_space<vmem>>, %arg8: memref<4x8x32xf32, #tpu.memory_space<vmem>>, %arg9: memref<1x32xf32, #tpu.memory_space<vmem>>, %arg10: memref<32x128xf32, #tpu.memory_space<vmem>>, %arg11: memref<1x128xf32, #tpu.memory_space<vmem>>, %arg12: memref<128x32xf32, #tpu.memory_space<vmem>>, %arg13: memref<1x32xf32, #tpu.memory_space<vmem>>, %arg14: memref<1x32xf32, #tpu.memory_space<vmem>>, %arg15: memref<1x32xf32, #tpu.memory_space<vmem>>, %arg16: memref<1x32xf32, #tpu.memory_space<vmem>>, %arg17: memref<1x32xf32, #tpu.memory_space<vmem>>, %arg18: memref<1x8x32xf32, #tpu.memory_space<vmem>>) attributes {dimension_semantics = [#tpu.dimension_semantics<parallel>], iteration_bounds = array<i64: 2>, scalar_prefetch = 0 : i64, scratch_operands = 0 : i64, tpu.core_type = #tpu.core_type<tc>, window_params = [{transform_indices = @transform_0, window_bounds = array<i64: 1, 8, 32>}, {pipeline_mode = #tpu.pipeline_mode<synchronous>, transform_indices = @transform_1, window_bounds = array<i64: 4, 32, 8>}, {pipeline_mode = #tpu.pipeline_mode<synchronous>, transform_indices = @transform_2, window_bounds = array<i64: 4, 1, 8>}, {pipeline_mode = #tpu.pipeline_mode<synchronous>, transform_indices = @transform_3, window_bounds = array<i64: 4, 32, 8>}, {pipeline_mode = #tpu.pipeline_mode<synchronous>, transform_indices = @transform_4, window_bounds = array<i64: 4, 1, 8>}, {pipeline_mode = #tpu.pipeline_mode<synchronous>, transform_indices = @transform_5, window_bounds = array<i64: 4, 32, 8>}, {pipeline_mode = #tpu.pipeline_mode<synchronous>, transform_indices = @transform_6, window_bounds = array<i64: 4, 1, 8>}, {pipeline_mode = #tpu.pipeline_mode<synchronous>, transform_indices = @transform_7, window_bounds = array<i64: 4, 8, 32>}, {pipeline_mode = #tpu.pipeline_mode<synchronous>, transform_indices = @transform_8, window_bounds = array<i64: 1, 32>}, {pipeline_mode = #tpu.pipeline_mode<synchronous>, transform_indices = @transform_9, window_bounds = array<i64: 32, 128>}, {pipeline_mode = #tpu.pipeline_mode<synchronous>, transform_indices = @transform_10, window_bounds = array<i64: 1, 128>}, {pipeline_mode = #tpu.pipeline_mode<synchronous>, transform_indices = @transform_11, window_bounds = array<i64: 128, 32>}, {pipeline_mode = #tpu.pipeline_mode<synchronous>, transform_indices = @transform_12, window_bounds = array<i64: 1, 32>}, {pipeline_mode = #tpu.pipeline_mode<synchronous>, transform_indices = @transform_13, window_bounds = array<i64: 1, 32>}, {pipeline_mode = #tpu.pipeline_mode<synchronous>, transform_indices = @transform_14, window_bounds = array<i64: 1, 32>}, {pipeline_mode = #tpu.pipeline_mode<synchronous>, transform_indices = @transform_15, window_bounds = array<i64: 1, 32>}, {pipeline_mode = #tpu.pipeline_mode<synchronous>, transform_indices = @transform_16, window_bounds = array<i64: 1, 32>}, {transform_indices = @transform_17, window_bounds = array<i64: 1, 8, 32>}]} {
    %c0 = arith.constant 0 : index
    %c0_0 = arith.constant 0 : index
    %c0_1 = arith.constant 0 : index
    %0 = vector.load %arg1[%c0, %c0_0, %c0_1] : memref<1x8x32xf32, #tpu.memory_space<vmem>>, vector<1x8x32xf32>
    %1 = vector.shape_cast %0 : vector<1x8x32xf32> to vector<8x32xf32>
    %cst = arith.constant 0.000000e+00 : f32
    %2 = vector.broadcast %cst : f32 to vector<8x32xf32>
    %c0_2 = arith.constant 0 : index
    %c0_3 = arith.constant 0 : index
    %c0_4 = arith.constant 0 : index
    %3 = vector.load %arg2[%c0_2, %c0_3, %c0_4] : memref<4x32x8xf32, #tpu.memory_space<vmem>>, vector<1x32x8xf32>
    %4 = vector.shape_cast %3 : vector<1x32x8xf32> to vector<32x8xf32>
    %cst_5 = arith.constant dense<0.000000e+00> : vector<8x8xf32>
    %5 = tpu.matmul %1, %4, %cst_5 {dimension_numbers = #tpu.dot_dimension_numbers<[1], [0], [0], [1], [0, 0, 1, 1], [], []>} : vector<8x32xf32>, vector<32x8xf32>, vector<8x8xf32> -> vector<8x8xf32>
    %c0_6 = arith.constant 0 : index
    %c0_7 = arith.constant 0 : index
    %c0_8 = arith.constant 0 : index
    %6 = vector.load %arg3[%c0_6, %c0_7, %c0_8] : memref<4x1x8xf32, #tpu.memory_space<vmem>>, vector<1x1x8xf32>
    %7 = vector.shape_cast %6 : vector<1x1x8xf32> to vector<1x8xf32>
    %8 = vector.broadcast %7 : vector<1x8xf32> to vector<8x8xf32>
    %9 = arith.addf %5, %8 : vector<8x8xf32>
    %c0_9 = arith.constant 0 : index
    %c0_10 = arith.constant 0 : index
    %c0_11 = arith.constant 0 : index
    %10 = vector.load %arg4[%c0_9, %c0_10, %c0_11] : memref<4x32x8xf32, #tpu.memory_space<vmem>>, vector<1x32x8xf32>
    %11 = vector.shape_cast %10 : vector<1x32x8xf32> to vector<32x8xf32>
    %cst_12 = arith.constant dense<0.000000e+00> : vector<8x8xf32>
    %12 = tpu.matmul %1, %11, %cst_12 {dimension_numbers = #tpu.dot_dimension_numbers<[1], [0], [0], [1], [0, 0, 1, 1], [], []>} : vector<8x32xf32>, vector<32x8xf32>, vector<8x8xf32> -> vector<8x8xf32>
    %c0_13 = arith.constant 0 : index
    %c0_14 = arith.constant 0 : index
    %c0_15 = arith.constant 0 : index
    %13 = vector.load %arg5[%c0_13, %c0_14, %c0_15] : memref<4x1x8xf32, #tpu.memory_space<vmem>>, vector<1x1x8xf32>
    %14 = vector.shape_cast %13 : vector<1x1x8xf32> to vector<1x8xf32>
    %15 = vector.broadcast %14 : vector<1x8xf32> to vector<8x8xf32>
    %16 = arith.addf %12, %15 : vector<8x8xf32>
    %c0_16 = arith.constant 0 : index
    %c0_17 = arith.constant 0 : index
    %c0_18 = arith.constant 0 : index
    %17 = vector.load %arg6[%c0_16, %c0_17, %c0_18] : memref<4x32x8xf32, #tpu.memory_space<vmem>>, vector<1x32x8xf32>
    %18 = vector.shape_cast %17 : vector<1x32x8xf32> to vector<32x8xf32>
    %cst_19 = arith.constant dense<0.000000e+00> : vector<8x8xf32>
    %19 = tpu.matmul %1, %18, %cst_19 {dimension_numbers = #tpu.dot_dimension_numbers<[1], [0], [0], [1], [0, 0, 1, 1], [], []>} : vector<8x32xf32>, vector<32x8xf32>, vector<8x8xf32> -> vector<8x8xf32>
    %c0_20 = arith.constant 0 : index
    %c0_21 = arith.constant 0 : index
    %c0_22 = arith.constant 0 : index
    %20 = vector.load %arg7[%c0_20, %c0_21, %c0_22] : memref<4x1x8xf32, #tpu.memory_space<vmem>>, vector<1x1x8xf32>
    %21 = vector.shape_cast %20 : vector<1x1x8xf32> to vector<1x8xf32>
    %22 = vector.broadcast %21 : vector<1x8xf32> to vector<8x8xf32>
    %23 = arith.addf %19, %22 : vector<8x8xf32>
    "tpu.trace_start"() <{level = 10 : i32, message = "ld,sd->ls"}> : () -> ()
    %cst_23 = arith.constant dense<0.000000e+00> : vector<8x8xf32>
    %24 = tpu.matmul %9, %16, %cst_23 {dimension_numbers = #tpu.dot_dimension_numbers<[1], [1], [0], [0], [0, 0, 1, 0], [], []>} : vector<8x8xf32>, vector<8x8xf32>, vector<8x8xf32> -> vector<8x8xf32>
    "tpu.trace_stop"() : () -> ()
    %cst_24 = arith.constant 0.353553385 : f32
    %25 = vector.broadcast %cst_24 : f32 to vector<8x8xf32>
    %26 = arith.mulf %24, %25 : vector<8x8xf32>
    %cst_25 = arith.constant dense<0xFF800000> : vector<8xf32>
    %27 = vector.multi_reduction <maximumf>, %26, %cst_25 [1] : vector<8x8xf32> to vector<8xf32>
    %28 = vector.shape_cast %27 : vector<8xf32> to vector<8x1xf32>
    %29 = vector.broadcast %28 : vector<8x1xf32> to vector<8x8xf32>
    %30 = arith.subf %26, %29 : vector<8x8xf32>
    %31 = math.exp %30 : vector<8x8xf32>
    %cst_26 = arith.constant dense<0.000000e+00> : vector<8xf32>
    %32 = vector.multi_reduction <add>, %31, %cst_26 [1] : vector<8x8xf32> to vector<8xf32>
    %33 = vector.shape_cast %32 : vector<8xf32> to vector<8x1xf32>
    %34 = vector.broadcast %33 : vector<8x1xf32> to vector<8x8xf32>
    %35 = arith.divf %31, %34 : vector<8x8xf32>
    %cst_27 = arith.constant dense<0.000000e+00> : vector<8x8xf32>
    %36 = tpu.matmul %35, %23, %cst_27 {dimension_numbers = #tpu.dot_dimension_numbers<[1], [0], [0], [1], [0, 0, 1, 1], [], []>} : vector<8x8xf32>, vector<8x8xf32>, vector<8x8xf32> -> vector<8x8xf32>
    %c0_28 = arith.constant 0 : index
    %c0_29 = arith.constant 0 : index
    %c0_30 = arith.constant 0 : index
    %37 = vector.load %arg8[%c0_28, %c0_29, %c0_30] : memref<4x8x32xf32, #tpu.memory_space<vmem>>, vector<1x8x32xf32>
    %38 = vector.shape_cast %37 : vector<1x8x32xf32> to vector<8x32xf32>
    %cst_31 = arith.constant dense<0.000000e+00> : vector<8x32xf32>
    %39 = tpu.matmul %36, %38, %cst_31 {dimension_numbers = #tpu.dot_dimension_numbers<[1], [0], [0], [1], [0, 0, 1, 1], [], []>} : vector<8x8xf32>, vector<8x32xf32>, vector<8x32xf32> -> vector<8x32xf32>
    %40 = arith.addf %2, %39 : vector<8x32xf32>
    %c1 = arith.constant 1 : index
    %c0_32 = arith.constant 0 : index
    %c0_33 = arith.constant 0 : index
    %41 = vector.load %arg2[%c1, %c0_32, %c0_33] : memref<4x32x8xf32, #tpu.memory_space<vmem>>, vector<1x32x8xf32>
    %42 = vector.shape_cast %41 : vector<1x32x8xf32> to vector<32x8xf32>
    %cst_34 = arith.constant dense<0.000000e+00> : vector<8x8xf32>
    %43 = tpu.matmul %1, %42, %cst_34 {dimension_numbers = #tpu.dot_dimension_numbers<[1], [0], [0], [1], [0, 0, 1, 1], [], []>} : vector<8x32xf32>, vector<32x8xf32>, vector<8x8xf32> -> vector<8x8xf32>
    %c1_35 = arith.constant 1 : index
    %c0_36 = arith.constant 0 : index
    %c0_37 = arith.constant 0 : index
    %44 = vector.load %arg3[%c1_35, %c0_36, %c0_37] : memref<4x1x8xf32, #tpu.memory_space<vmem>>, vector<1x1x8xf32>
    %45 = vector.shape_cast %44 : vector<1x1x8xf32> to vector<1x8xf32>
    %46 = vector.broadcast %45 : vector<1x8xf32> to vector<8x8xf32>
    %47 = arith.addf %43, %46 : vector<8x8xf32>
    %c1_38 = arith.constant 1 : index
    %c0_39 = arith.constant 0 : index
    %c0_40 = arith.constant 0 : index
    %48 = vector.load %arg4[%c1_38, %c0_39, %c0_40] : memref<4x32x8xf32, #tpu.memory_space<vmem>>, vector<1x32x8xf32>
    %49 = vector.shape_cast %48 : vector<1x32x8xf32> to vector<32x8xf32>
    %cst_41 = arith.constant dense<0.000000e+00> : vector<8x8xf32>
    %50 = tpu.matmul %1, %49, %cst_41 {dimension_numbers = #tpu.dot_dimension_numbers<[1], [0], [0], [1], [0, 0, 1, 1], [], []>} : vector<8x32xf32>, vector<32x8xf32>, vector<8x8xf32> -> vector<8x8xf32>
    %c1_42 = arith.constant 1 : index
    %c0_43 = arith.constant 0 : index
    %c0_44 = arith.constant 0 : index
    %51 = vector.load %arg5[%c1_42, %c0_43, %c0_44] : memref<4x1x8xf32, #tpu.memory_space<vmem>>, vector<1x1x8xf32>
    %52 = vector.shape_cast %51 : vector<1x1x8xf32> to vector<1x8xf32>
    %53 = vector.broadcast %52 : vector<1x8xf32> to vector<8x8xf32>
    %54 = arith.addf %50, %53 : vector<8x8xf32>
    %c1_45 = arith.constant 1 : index
    %c0_46 = arith.constant 0 : index
    %c0_47 = arith.constant 0 : index
    %55 = vector.load %arg6[%c1_45, %c0_46, %c0_47] : memref<4x32x8xf32, #tpu.memory_space<vmem>>, vector<1x32x8xf32>
    %56 = vector.shape_cast %55 : vector<1x32x8xf32> to vector<32x8xf32>
    %cst_48 = arith.constant dense<0.000000e+00> : vector<8x8xf32>
    %57 = tpu.matmul %1, %56, %cst_48 {dimension_numbers = #tpu.dot_dimension_numbers<[1], [0], [0], [1], [0, 0, 1, 1], [], []>} : vector<8x32xf32>, vector<32x8xf32>, vector<8x8xf32> -> vector<8x8xf32>
    %c1_49 = arith.constant 1 : index
    %c0_50 = arith.constant 0 : index
    %c0_51 = arith.constant 0 : index
    %58 = vector.load %arg7[%c1_49, %c0_50, %c0_51] : memref<4x1x8xf32, #tpu.memory_space<vmem>>, vector<1x1x8xf32>
    %59 = vector.shape_cast %58 : vector<1x1x8xf32> to vector<1x8xf32>
    %60 = vector.broadcast %59 : vector<1x8xf32> to vector<8x8xf32>
    %61 = arith.addf %57, %60 : vector<8x8xf32>
    "tpu.trace_start"() <{level = 10 : i32, message = "ld,sd->ls"}> : () -> ()
    %cst_52 = arith.constant dense<0.000000e+00> : vector<8x8xf32>
    %62 = tpu.matmul %47, %54, %cst_52 {dimension_numbers = #tpu.dot_dimension_numbers<[1], [1], [0], [0], [0, 0, 1, 0], [], []>} : vector<8x8xf32>, vector<8x8xf32>, vector<8x8xf32> -> vector<8x8xf32>
    "tpu.trace_stop"() : () -> ()
    %cst_53 = arith.constant 0.353553385 : f32
    %63 = vector.broadcast %cst_53 : f32 to vector<8x8xf32>
    %64 = arith.mulf %62, %63 : vector<8x8xf32>
    %cst_54 = arith.constant dense<0xFF800000> : vector<8xf32>
    %65 = vector.multi_reduction <maximumf>, %64, %cst_54 [1] : vector<8x8xf32> to vector<8xf32>
    %66 = vector.shape_cast %65 : vector<8xf32> to vector<8x1xf32>
    %67 = vector.broadcast %66 : vector<8x1xf32> to vector<8x8xf32>
    %68 = arith.subf %64, %67 : vector<8x8xf32>
    %69 = math.exp %68 : vector<8x8xf32>
    %cst_55 = arith.constant dense<0.000000e+00> : vector<8xf32>
    %70 = vector.multi_reduction <add>, %69, %cst_55 [1] : vector<8x8xf32> to vector<8xf32>
    %71 = vector.shape_cast %70 : vector<8xf32> to vector<8x1xf32>
    %72 = vector.broadcast %71 : vector<8x1xf32> to vector<8x8xf32>
    %73 = arith.divf %69, %72 : vector<8x8xf32>
    %cst_56 = arith.constant dense<0.000000e+00> : vector<8x8xf32>
    %74 = tpu.matmul %73, %61, %cst_56 {dimension_numbers = #tpu.dot_dimension_numbers<[1], [0], [0], [1], [0, 0, 1, 1], [], []>} : vector<8x8xf32>, vector<8x8xf32>, vector<8x8xf32> -> vector<8x8xf32>
    %c1_57 = arith.constant 1 : index
    %c0_58 = arith.constant 0 : index
    %c0_59 = arith.constant 0 : index
    %75 = vector.load %arg8[%c1_57, %c0_58, %c0_59] : memref<4x8x32xf32, #tpu.memory_space<vmem>>, vector<1x8x32xf32>
    %76 = vector.shape_cast %75 : vector<1x8x32xf32> to vector<8x32xf32>
    %cst_60 = arith.constant dense<0.000000e+00> : vector<8x32xf32>
    %77 = tpu.matmul %74, %76, %cst_60 {dimension_numbers = #tpu.dot_dimension_numbers<[1], [0], [0], [1], [0, 0, 1, 1], [], []>} : vector<8x8xf32>, vector<8x32xf32>, vector<8x32xf32> -> vector<8x32xf32>
    %78 = arith.addf %40, %77 : vector<8x32xf32>
    %c2 = arith.constant 2 : index
    %c0_61 = arith.constant 0 : index
    %c0_62 = arith.constant 0 : index
    %79 = vector.load %arg2[%c2, %c0_61, %c0_62] : memref<4x32x8xf32, #tpu.memory_space<vmem>>, vector<1x32x8xf32>
    %80 = vector.shape_cast %79 : vector<1x32x8xf32> to vector<32x8xf32>
    %cst_63 = arith.constant dense<0.000000e+00> : vector<8x8xf32>
    %81 = tpu.matmul %1, %80, %cst_63 {dimension_numbers = #tpu.dot_dimension_numbers<[1], [0], [0], [1], [0, 0, 1, 1], [], []>} : vector<8x32xf32>, vector<32x8xf32>, vector<8x8xf32> -> vector<8x8xf32>
    %c2_64 = arith.constant 2 : index
    %c0_65 = arith.constant 0 : index
    %c0_66 = arith.constant 0 : index
    %82 = vector.load %arg3[%c2_64, %c0_65, %c0_66] : memref<4x1x8xf32, #tpu.memory_space<vmem>>, vector<1x1x8xf32>
    %83 = vector.shape_cast %82 : vector<1x1x8xf32> to vector<1x8xf32>
    %84 = vector.broadcast %83 : vector<1x8xf32> to vector<8x8xf32>
    %85 = arith.addf %81, %84 : vector<8x8xf32>
    %c2_67 = arith.constant 2 : index
    %c0_68 = arith.constant 0 : index
    %c0_69 = arith.constant 0 : index
    %86 = vector.load %arg4[%c2_67, %c0_68, %c0_69] : memref<4x32x8xf32, #tpu.memory_space<vmem>>, vector<1x32x8xf32>
    %87 = vector.shape_cast %86 : vector<1x32x8xf32> to vector<32x8xf32>
    %cst_70 = arith.constant dense<0.000000e+00> : vector<8x8xf32>
    %88 = tpu.matmul %1, %87, %cst_70 {dimension_numbers = #tpu.dot_dimension_numbers<[1], [0], [0], [1], [0, 0, 1, 1], [], []>} : vector<8x32xf32>, vector<32x8xf32>, vector<8x8xf32> -> vector<8x8xf32>
    %c2_71 = arith.constant 2 : index
    %c0_72 = arith.constant 0 : index
    %c0_73 = arith.constant 0 : index
    %89 = vector.load %arg5[%c2_71, %c0_72, %c0_73] : memref<4x1x8xf32, #tpu.memory_space<vmem>>, vector<1x1x8xf32>
    %90 = vector.shape_cast %89 : vector<1x1x8xf32> to vector<1x8xf32>
    %91 = vector.broadcast %90 : vector<1x8xf32> to vector<8x8xf32>
    %92 = arith.addf %88, %91 : vector<8x8xf32>
    %c2_74 = arith.constant 2 : index
    %c0_75 = arith.constant 0 : index
    %c0_76 = arith.constant 0 : index
    %93 = vector.load %arg6[%c2_74, %c0_75, %c0_76] : memref<4x32x8xf32, #tpu.memory_space<vmem>>, vector<1x32x8xf32>
    %94 = vector.shape_cast %93 : vector<1x32x8xf32> to vector<32x8xf32>
    %cst_77 = arith.constant dense<0.000000e+00> : vector<8x8xf32>
    %95 = tpu.matmul %1, %94, %cst_77 {dimension_numbers = #tpu.dot_dimension_numbers<[1], [0], [0], [1], [0, 0, 1, 1], [], []>} : vector<8x32xf32>, vector<32x8xf32>, vector<8x8xf32> -> vector<8x8xf32>
    %c2_78 = arith.constant 2 : index
    %c0_79 = arith.constant 0 : index
    %c0_80 = arith.constant 0 : index
    %96 = vector.load %arg7[%c2_78, %c0_79, %c0_80] : memref<4x1x8xf32, #tpu.memory_space<vmem>>, vector<1x1x8xf32>
    %97 = vector.shape_cast %96 : vector<1x1x8xf32> to vector<1x8xf32>
    %98 = vector.broadcast %97 : vector<1x8xf32> to vector<8x8xf32>
    %99 = arith.addf %95, %98 : vector<8x8xf32>
    "tpu.trace_start"() <{level = 10 : i32, message = "ld,sd->ls"}> : () -> ()
    %cst_81 = arith.constant dense<0.000000e+00> : vector<8x8xf32>
    %100 = tpu.matmul %85, %92, %cst_81 {dimension_numbers = #tpu.dot_dimension_numbers<[1], [1], [0], [0], [0, 0, 1, 0], [], []>} : vector<8x8xf32>, vector<8x8xf32>, vector<8x8xf32> -> vector<8x8xf32>
    "tpu.trace_stop"() : () -> ()
    %cst_82 = arith.constant 0.353553385 : f32
    %101 = vector.broadcast %cst_82 : f32 to vector<8x8xf32>
    %102 = arith.mulf %100, %101 : vector<8x8xf32>
    %cst_83 = arith.constant dense<0xFF800000> : vector<8xf32>
    %103 = vector.multi_reduction <maximumf>, %102, %cst_83 [1] : vector<8x8xf32> to vector<8xf32>
    %104 = vector.shape_cast %103 : vector<8xf32> to vector<8x1xf32>
    %105 = vector.broadcast %104 : vector<8x1xf32> to vector<8x8xf32>
    %106 = arith.subf %102, %105 : vector<8x8xf32>
    %107 = math.exp %106 : vector<8x8xf32>
    %cst_84 = arith.constant dense<0.000000e+00> : vector<8xf32>
    %108 = vector.multi_reduction <add>, %107, %cst_84 [1] : vector<8x8xf32> to vector<8xf32>
    %109 = vector.shape_cast %108 : vector<8xf32> to vector<8x1xf32>
    %110 = vector.broadcast %109 : vector<8x1xf32> to vector<8x8xf32>
    %111 = arith.divf %107, %110 : vector<8x8xf32>
    %cst_85 = arith.constant dense<0.000000e+00> : vector<8x8xf32>
    %112 = tpu.matmul %111, %99, %cst_85 {dimension_numbers = #tpu.dot_dimension_numbers<[1], [0], [0], [1], [0, 0, 1, 1], [], []>} : vector<8x8xf32>, vector<8x8xf32>, vector<8x8xf32> -> vector<8x8xf32>
    %c2_86 = arith.constant 2 : index
    %c0_87 = arith.constant 0 : index
    %c0_88 = arith.constant 0 : index
    %113 = vector.load %arg8[%c2_86, %c0_87, %c0_88] : memref<4x8x32xf32, #tpu.memory_space<vmem>>, vector<1x8x32xf32>
    %114 = vector.shape_cast %113 : vector<1x8x32xf32> to vector<8x32xf32>
    %cst_89 = arith.constant dense<0.000000e+00> : vector<8x32xf32>
    %115 = tpu.matmul %112, %114, %cst_89 {dimension_numbers = #tpu.dot_dimension_numbers<[1], [0], [0], [1], [0, 0, 1, 1], [], []>} : vector<8x8xf32>, vector<8x32xf32>, vector<8x32xf32> -> vector<8x32xf32>
    %116 = arith.addf %78, %115 : vector<8x32xf32>
    %c3 = arith.constant 3 : index
    %c0_90 = arith.constant 0 : index
    %c0_91 = arith.constant 0 : index
    %117 = vector.load %arg2[%c3, %c0_90, %c0_91] : memref<4x32x8xf32, #tpu.memory_space<vmem>>, vector<1x32x8xf32>
    %118 = vector.shape_cast %117 : vector<1x32x8xf32> to vector<32x8xf32>
    %cst_92 = arith.constant dense<0.000000e+00> : vector<8x8xf32>
    %119 = tpu.matmul %1, %118, %cst_92 {dimension_numbers = #tpu.dot_dimension_numbers<[1], [0], [0], [1], [0, 0, 1, 1], [], []>} : vector<8x32xf32>, vector<32x8xf32>, vector<8x8xf32> -> vector<8x8xf32>
    %c3_93 = arith.constant 3 : index
    %c0_94 = arith.constant 0 : index
    %c0_95 = arith.constant 0 : index
    %120 = vector.load %arg3[%c3_93, %c0_94, %c0_95] : memref<4x1x8xf32, #tpu.memory_space<vmem>>, vector<1x1x8xf32>
    %121 = vector.shape_cast %120 : vector<1x1x8xf32> to vector<1x8xf32>
    %122 = vector.broadcast %121 : vector<1x8xf32> to vector<8x8xf32>
    %123 = arith.addf %119, %122 : vector<8x8xf32>
    %c3_96 = arith.constant 3 : index
    %c0_97 = arith.constant 0 : index
    %c0_98 = arith.constant 0 : index
    %124 = vector.load %arg4[%c3_96, %c0_97, %c0_98] : memref<4x32x8xf32, #tpu.memory_space<vmem>>, vector<1x32x8xf32>
    %125 = vector.shape_cast %124 : vector<1x32x8xf32> to vector<32x8xf32>
    %cst_99 = arith.constant dense<0.000000e+00> : vector<8x8xf32>
    %126 = tpu.matmul %1, %125, %cst_99 {dimension_numbers = #tpu.dot_dimension_numbers<[1], [0], [0], [1], [0, 0, 1, 1], [], []>} : vector<8x32xf32>, vector<32x8xf32>, vector<8x8xf32> -> vector<8x8xf32>
    %c3_100 = arith.constant 3 : index
    %c0_101 = arith.constant 0 : index
    %c0_102 = arith.constant 0 : index
    %127 = vector.load %arg5[%c3_100, %c0_101, %c0_102] : memref<4x1x8xf32, #tpu.memory_space<vmem>>, vector<1x1x8xf32>
    %128 = vector.shape_cast %127 : vector<1x1x8xf32> to vector<1x8xf32>
    %129 = vector.broadcast %128 : vector<1x8xf32> to vector<8x8xf32>
    %130 = arith.addf %126, %129 : vector<8x8xf32>
    %c3_103 = arith.constant 3 : index
    %c0_104 = arith.constant 0 : index
    %c0_105 = arith.constant 0 : index
    %131 = vector.load %arg6[%c3_103, %c0_104, %c0_105] : memref<4x32x8xf32, #tpu.memory_space<vmem>>, vector<1x32x8xf32>
    %132 = vector.shape_cast %131 : vector<1x32x8xf32> to vector<32x8xf32>
    %cst_106 = arith.constant dense<0.000000e+00> : vector<8x8xf32>
    %133 = tpu.matmul %1, %132, %cst_106 {dimension_numbers = #tpu.dot_dimension_numbers<[1], [0], [0], [1], [0, 0, 1, 1], [], []>} : vector<8x32xf32>, vector<32x8xf32>, vector<8x8xf32> -> vector<8x8xf32>
    %c3_107 = arith.constant 3 : index
    %c0_108 = arith.constant 0 : index
    %c0_109 = arith.constant 0 : index
    %134 = vector.load %arg7[%c3_107, %c0_108, %c0_109] : memref<4x1x8xf32, #tpu.memory_space<vmem>>, vector<1x1x8xf32>
    %135 = vector.shape_cast %134 : vector<1x1x8xf32> to vector<1x8xf32>
    %136 = vector.broadcast %135 : vector<1x8xf32> to vector<8x8xf32>
    %137 = arith.addf %133, %136 : vector<8x8xf32>
    "tpu.trace_start"() <{level = 10 : i32, message = "ld,sd->ls"}> : () -> ()
    %cst_110 = arith.constant dense<0.000000e+00> : vector<8x8xf32>
    %138 = tpu.matmul %123, %130, %cst_110 {dimension_numbers = #tpu.dot_dimension_numbers<[1], [1], [0], [0], [0, 0, 1, 0], [], []>} : vector<8x8xf32>, vector<8x8xf32>, vector<8x8xf32> -> vector<8x8xf32>
    "tpu.trace_stop"() : () -> ()
    %cst_111 = arith.constant 0.353553385 : f32
    %139 = vector.broadcast %cst_111 : f32 to vector<8x8xf32>
    %140 = arith.mulf %138, %139 : vector<8x8xf32>
    %cst_112 = arith.constant dense<0xFF800000> : vector<8xf32>
    %141 = vector.multi_reduction <maximumf>, %140, %cst_112 [1] : vector<8x8xf32> to vector<8xf32>
    %142 = vector.shape_cast %141 : vector<8xf32> to vector<8x1xf32>
    %143 = vector.broadcast %142 : vector<8x1xf32> to vector<8x8xf32>
    %144 = arith.subf %140, %143 : vector<8x8xf32>
    %145 = math.exp %144 : vector<8x8xf32>
    %cst_113 = arith.constant dense<0.000000e+00> : vector<8xf32>
    %146 = vector.multi_reduction <add>, %145, %cst_113 [1] : vector<8x8xf32> to vector<8xf32>
    %147 = vector.shape_cast %146 : vector<8xf32> to vector<8x1xf32>
    %148 = vector.broadcast %147 : vector<8x1xf32> to vector<8x8xf32>
    %149 = arith.divf %145, %148 : vector<8x8xf32>
    %cst_114 = arith.constant dense<0.000000e+00> : vector<8x8xf32>
    %150 = tpu.matmul %149, %137, %cst_114 {dimension_numbers = #tpu.dot_dimension_numbers<[1], [0], [0], [1], [0, 0, 1, 1], [], []>} : vector<8x8xf32>, vector<8x8xf32>, vector<8x8xf32> -> vector<8x8xf32>
    %c3_115 = arith.constant 3 : index
    %c0_116 = arith.constant 0 : index
    %c0_117 = arith.constant 0 : index
    %151 = vector.load %arg8[%c3_115, %c0_116, %c0_117] : memref<4x8x32xf32, #tpu.memory_space<vmem>>, vector<1x8x32xf32>
    %152 = vector.shape_cast %151 : vector<1x8x32xf32> to vector<8x32xf32>
    %cst_118 = arith.constant dense<0.000000e+00> : vector<8x32xf32>
    %153 = tpu.matmul %150, %152, %cst_118 {dimension_numbers = #tpu.dot_dimension_numbers<[1], [0], [0], [1], [0, 0, 1, 1], [], []>} : vector<8x8xf32>, vector<8x32xf32>, vector<8x32xf32> -> vector<8x32xf32>
    %154 = arith.addf %116, %153 : vector<8x32xf32>
    %c0_119 = arith.constant 0 : index
    %c0_120 = arith.constant 0 : index
    %155 = vector.load %arg9[%c0_119, %c0_120] : memref<1x32xf32, #tpu.memory_space<vmem>>, vector<1x32xf32>
    %156 = vector.broadcast %155 : vector<1x32xf32> to vector<8x32xf32>
    %157 = arith.addf %154, %156 : vector<8x32xf32>
    %158 = arith.addf %1, %157 : vector<8x32xf32>
    %c0_121 = arith.constant 0 : index
    %c0_122 = arith.constant 0 : index
    %159 = vector.load %arg14[%c0_121, %c0_122] : memref<1x32xf32, #tpu.memory_space<vmem>>, vector<1x32xf32>
    %c0_123 = arith.constant 0 : index
    %c0_124 = arith.constant 0 : index
    %160 = vector.load %arg15[%c0_123, %c0_124] : memref<1x32xf32, #tpu.memory_space<vmem>>, vector<1x32xf32>
    %cst_125 = arith.constant dense<0.000000e+00> : vector<8xf32>
    %161 = vector.multi_reduction <add>, %158, %cst_125 [1] : vector<8x32xf32> to vector<8xf32>
    %162 = vector.shape_cast %161 : vector<8xf32> to vector<8x1xf32>
    %cst_126 = arith.constant 3.200000e+01 : f32
    %163 = vector.broadcast %cst_126 : f32 to vector<8x1xf32>
    %164 = arith.divf %162, %163 : vector<8x1xf32>
    %165 = vector.broadcast %164 : vector<8x1xf32> to vector<8x32xf32>
    %166 = arith.subf %158, %165 : vector<8x32xf32>
    %167 = arith.mulf %166, %166 : vector<8x32xf32>
    %cst_127 = arith.constant dense<0.000000e+00> : vector<8xf32>
    %168 = vector.multi_reduction <add>, %167, %cst_127 [1] : vector<8x32xf32> to vector<8xf32>
    %169 = vector.shape_cast %168 : vector<8xf32> to vector<8x1xf32>
    %cst_128 = arith.constant 3.200000e+01 : f32
    %170 = vector.broadcast %cst_128 : f32 to vector<8x1xf32>
    %171 = arith.divf %169, %170 : vector<8x1xf32>
    %cst_129 = arith.constant 9.99999974E-6 : f32
    %172 = vector.broadcast %cst_129 : f32 to vector<8x1xf32>
    %173 = arith.addf %171, %172 : vector<8x1xf32>
    %174 = math.rsqrt %173 : vector<8x1xf32>
    %175 = vector.broadcast %174 : vector<8x1xf32> to vector<8x32xf32>
    %176 = arith.mulf %166, %175 : vector<8x32xf32>
    %177 = vector.broadcast %159 : vector<1x32xf32> to vector<8x32xf32>
    %178 = arith.mulf %176, %177 : vector<8x32xf32>
    %179 = vector.broadcast %160 : vector<1x32xf32> to vector<8x32xf32>
    %180 = arith.addf %178, %179 : vector<8x32xf32>
    %c0_130 = arith.constant 0 : index
    %c0_131 = arith.constant 0 : index
    %181 = vector.load %arg10[%c0_130, %c0_131] : memref<32x128xf32, #tpu.memory_space<vmem>>, vector<32x128xf32>
    %cst_132 = arith.constant dense<0.000000e+00> : vector<8x128xf32>
    %182 = tpu.matmul %180, %181, %cst_132 {dimension_numbers = #tpu.dot_dimension_numbers<[1], [0], [0], [1], [0, 0, 1, 1], [], []>} : vector<8x32xf32>, vector<32x128xf32>, vector<8x128xf32> -> vector<8x128xf32>
    %c0_133 = arith.constant 0 : index
    %c0_134 = arith.constant 0 : index
    %183 = vector.load %arg11[%c0_133, %c0_134] : memref<1x128xf32, #tpu.memory_space<vmem>>, vector<1x128xf32>
    %184 = vector.broadcast %183 : vector<1x128xf32> to vector<8x128xf32>
    %185 = arith.addf %182, %184 : vector<8x128xf32>
    %cst_135 = arith.constant 0.000000e+00 : f32
    %186 = vector.broadcast %cst_135 : f32 to vector<8x128xf32>
    %187 = arith.maximumf %185, %186 : vector<8x128xf32>
    %c0_136 = arith.constant 0 : index
    %c0_137 = arith.constant 0 : index
    %188 = vector.load %arg12[%c0_136, %c0_137] : memref<128x32xf32, #tpu.memory_space<vmem>>, vector<128x32xf32>
    %cst_138 = arith.constant dense<0.000000e+00> : vector<8x32xf32>
    %189 = tpu.matmul %187, %188, %cst_138 {dimension_numbers = #tpu.dot_dimension_numbers<[1], [0], [0], [1], [0, 0, 1, 1], [], []>} : vector<8x128xf32>, vector<128x32xf32>, vector<8x32xf32> -> vector<8x32xf32>
    %c0_139 = arith.constant 0 : index
    %c0_140 = arith.constant 0 : index
    %190 = vector.load %arg13[%c0_139, %c0_140] : memref<1x32xf32, #tpu.memory_space<vmem>>, vector<1x32xf32>
    %191 = vector.broadcast %190 : vector<1x32xf32> to vector<8x32xf32>
    %192 = arith.addf %189, %191 : vector<8x32xf32>
    %193 = arith.addf %180, %192 : vector<8x32xf32>
    %c0_141 = arith.constant 0 : index
    %c0_142 = arith.constant 0 : index
    %194 = vector.load %arg16[%c0_141, %c0_142] : memref<1x32xf32, #tpu.memory_space<vmem>>, vector<1x32xf32>
    %c0_143 = arith.constant 0 : index
    %c0_144 = arith.constant 0 : index
    %195 = vector.load %arg17[%c0_143, %c0_144] : memref<1x32xf32, #tpu.memory_space<vmem>>, vector<1x32xf32>
    %cst_145 = arith.constant dense<0.000000e+00> : vector<8xf32>
    %196 = vector.multi_reduction <add>, %193, %cst_145 [1] : vector<8x32xf32> to vector<8xf32>
    %197 = vector.shape_cast %196 : vector<8xf32> to vector<8x1xf32>
    %cst_146 = arith.constant 3.200000e+01 : f32
    %198 = vector.broadcast %cst_146 : f32 to vector<8x1xf32>
    %199 = arith.divf %197, %198 : vector<8x1xf32>
    %200 = vector.broadcast %199 : vector<8x1xf32> to vector<8x32xf32>
    %201 = arith.subf %193, %200 : vector<8x32xf32>
    %202 = arith.mulf %201, %201 : vector<8x32xf32>
    %cst_147 = arith.constant dense<0.000000e+00> : vector<8xf32>
    %203 = vector.multi_reduction <add>, %202, %cst_147 [1] : vector<8x32xf32> to vector<8xf32>
    %204 = vector.shape_cast %203 : vector<8xf32> to vector<8x1xf32>
    %cst_148 = arith.constant 3.200000e+01 : f32
    %205 = vector.broadcast %cst_148 : f32 to vector<8x1xf32>
    %206 = arith.divf %204, %205 : vector<8x1xf32>
    %cst_149 = arith.constant 9.99999974E-6 : f32
    %207 = vector.broadcast %cst_149 : f32 to vector<8x1xf32>
    %208 = arith.addf %206, %207 : vector<8x1xf32>
    %209 = math.rsqrt %208 : vector<8x1xf32>
    %210 = vector.broadcast %209 : vector<8x1xf32> to vector<8x32xf32>
    %211 = arith.mulf %201, %210 : vector<8x32xf32>
    %212 = vector.broadcast %194 : vector<1x32xf32> to vector<8x32xf32>
    %213 = arith.mulf %211, %212 : vector<8x32xf32>
    %214 = vector.broadcast %195 : vector<1x32xf32> to vector<8x32xf32>
    %215 = arith.addf %213, %214 : vector<8x32xf32>
    %c0_150 = arith.constant 0 : index
    %c0_151 = arith.constant 0 : index
    %c0_152 = arith.constant 0 : index
    %216 = vector.load %arg18[%c0_150, %c0_151, %c0_152] : memref<1x8x32xf32, #tpu.memory_space<vmem>>, vector<1x8x32xf32>
    %217 = vector.shape_cast %216 : vector<1x8x32xf32> to vector<8x32xf32>
    %218 = vector.shape_cast %215 : vector<8x32xf32> to vector<1x8x32xf32>
    tpu.vector_store %arg18[%c0_150, %c0_151, %c0_152], %218 {strides = array<i32>} : memref<1x8x32xf32, #tpu.memory_space<vmem>>, vector<1x8x32xf32>,
    return
  }
  func.func @transform_0(%arg0: i32) -> (i32, i32, i32) {
    %c0_i32 = arith.constant 0 : i32
    %c0_i32_0 = arith.constant 0 : i32
    %c0_i32_1 = arith.constant 0 : i32
    return %arg0, %c0_i32, %c0_i32_0 : i32, i32, i32
  }
  func.func @transform_1(%arg0: i32) -> (i32, i32, i32) {
    %c0_i32 = arith.constant 0 : i32
    %c0_i32_0 = arith.constant 0 : i32
    %c0_i32_1 = arith.constant 0 : i32
    %c0_i32_2 = arith.constant 0 : i32
    return %c0_i32, %c0_i32_0, %c0_i32_1 : i32, i32, i32
  }
  func.func @transform_2(%arg0: i32) -> (i32, i32, i32) {
    %c0_i32 = arith.constant 0 : i32
    %c0_i32_0 = arith.constant 0 : i32
    %c0_i32_1 = arith.constant 0 : i32
    %c0_i32_2 = arith.constant 0 : i32
    return %c0_i32, %c0_i32_0, %c0_i32_1 : i32, i32, i32
  }
  func.func @transform_3(%arg0: i32) -> (i32, i32, i32) {
    %c0_i32 = arith.constant 0 : i32
    %c0_i32_0 = arith.constant 0 : i32
    %c0_i32_1 = arith.constant 0 : i32
    %c0_i32_2 = arith.constant 0 : i32
    return %c0_i32, %c0_i32_0, %c0_i32_1 : i32, i32, i32
  }
  func.func @transform_4(%arg0: i32) -> (i32, i32, i32) {
    %c0_i32 = arith.constant 0 : i32
    %c0_i32_0 = arith.constant 0 : i32
    %c0_i32_1 = arith.constant 0 : i32
    %c0_i32_2 = arith.constant 0 : i32
    return %c0_i32, %c0_i32_0, %c0_i32_1 : i32, i32, i32
  }
  func.func @transform_5(%arg0: i32) -> (i32, i32, i32) {
    %c0_i32 = arith.constant 0 : i32
    %c0_i32_0 = arith.constant 0 : i32
    %c0_i32_1 = arith.constant 0 : i32
    %c0_i32_2 = arith.constant 0 : i32
    return %c0_i32, %c0_i32_0, %c0_i32_1 : i32, i32, i32
  }
  func.func @transform_6(%arg0: i32) -> (i32, i32, i32) {
    %c0_i32 = arith.constant 0 : i32
    %c0_i32_0 = arith.constant 0 : i32
    %c0_i32_1 = arith.constant 0 : i32
    %c0_i32_2 = arith.constant 0 : i32
    return %c0_i32, %c0_i32_0, %c0_i32_1 : i32, i32, i32
  }
  func.func @transform_7(%arg0: i32) -> (i32, i32, i32) {
    %c0_i32 = arith.constant 0 : i32
    %c0_i32_0 = arith.constant 0 : i32
    %c0_i32_1 = arith.constant 0 : i32
    %c0_i32_2 = arith.constant 0 : i32
    return %c0_i32, %c0_i32_0, %c0_i32_1 : i32, i32, i32
  }
  func.func @transform_8(%arg0: i32) -> (i32, i32) {
    %c0_i32 = arith.constant 0 : i32
    %c0_i32_0 = arith.constant 0 : i32
    %c0_i32_1 = arith.constant 0 : i32
    return %c0_i32, %c0_i32_0 : i32, i32
  }
  func.func @transform_9(%arg0: i32) -> (i32, i32) {
    %c0_i32 = arith.constant 0 : i32
    %c0_i32_0 = arith.constant 0 : i32
    %c0_i32_1 = arith.constant 0 : i32
    return %c0_i32, %c0_i32_0 : i32, i32
  }
  func.func @transform_10(%arg0: i32) -> (i32, i32) {
    %c0_i32 = arith.constant 0 : i32
    %c0_i32_0 = arith.constant 0 : i32
    %c0_i32_1 = arith.constant 0 : i32
    return %c0_i32, %c0_i32_0 : i32, i32
  }
  func.func @transform_11(%arg0: i32) -> (i32, i32) {
    %c0_i32 = arith.constant 0 : i32
    %c0_i32_0 = arith.constant 0 : i32
    %c0_i32_1 = arith.constant 0 : i32
    return %c0_i32, %c0_i32_0 : i32, i32
  }
  func.func @transform_12(%arg0: i32) -> (i32, i32) {
    %c0_i32 = arith.constant 0 : i32
    %c0_i32_0 = arith.constant 0 : i32
    %c0_i32_1 = arith.constant 0 : i32
    return %c0_i32, %c0_i32_0 : i32, i32
  }
  func.func @transform_13(%arg0: i32) -> (i32, i32) {
    %c0_i32 = arith.constant 0 : i32
    %c0_i32_0 = arith.constant 0 : i32
    %c0_i32_1 = arith.constant 0 : i32
    return %c0_i32, %c0_i32_0 : i32, i32
  }
  func.func @transform_14(%arg0: i32) -> (i32, i32) {
    %c0_i32 = arith.constant 0 : i32
    %c0_i32_0 = arith.constant 0 : i32
    %c0_i32_1 = arith.constant 0 : i32
    return %c0_i32, %c0_i32_0 : i32, i32
  }
  func.func @transform_15(%arg0: i32) -> (i32, i32) {
    %c0_i32 = arith.constant 0 : i32
    %c0_i32_0 = arith.constant 0 : i32
    %c0_i32_1 = arith.constant 0 : i32
    return %c0_i32, %c0_i32_0 : i32, i32
  }
  func.func @transform_16(%arg0: i32) -> (i32, i32) {
    %c0_i32 = arith.constant 0 : i32
    %c0_i32_0 = arith.constant 0 : i32
    %c0_i32_1 = arith.constant 0 : i32
    return %c0_i32, %c0_i32_0 : i32, i32
  }
  func.func @transform_17(%arg0: i32) -> (i32, i32, i32) {
    %c0_i32 = arith.constant 0 : i32
    %c0_i32_0 = arith.constant 0 : i32
    %c0_i32_1 = arith.constant 0 : i32
    return %arg0, %c0_i32, %c0_i32_0 : i32, i32, i32
  }
}

</mosaic_0001>

<llo_original>
// kernel: tpu_custom_call.1
$region0: #{tpu_custom_call.1}
  #allocation0 [shape = 'u32[]', space=smem, size = 0x4, offset = 0x4, fixed_abs, tag = 'smem constant byte address 0x4 - core index']
  #allocation1 [shape = 'u32[144,128]{1,0:T(1,128)}', space=vmem, size = 0x12000, scoped, tag = 'internal scratch']
  %s0 = inlined_call_operand.vmem [shape: f32[2,8,32], index: 0, kind: input, shape index: {}]
  %s1 = inlined_call_operand.vmem [shape: f32[4,32,8], index: 1, kind: input, shape index: {}]
  %s2 = inlined_call_operand.vmem [shape: f32[4,1,8], index: 2, kind: input, shape index: {}]
  %s3 = inlined_call_operand.vmem [shape: f32[4,32,8], index: 3, kind: input, shape index: {}]
  %s4 = inlined_call_operand.vmem [shape: f32[4,1,8], index: 4, kind: input, shape index: {}]
  %s5 = inlined_call_operand.vmem [shape: f32[4,32,8], index: 5, kind: input, shape index: {}]
  %s6 = inlined_call_operand.vmem [shape: f32[4,1,8], index: 6, kind: input, shape index: {}]
  %s7 = inlined_call_operand.vmem [shape: f32[4,8,32], index: 7, kind: input, shape index: {}]
  %s8 = inlined_call_operand.vmem [shape: f32[1,32], index: 8, kind: input, shape index: {}]
  %s9 = inlined_call_operand.vmem [shape: f32[32,128], index: 9, kind: input, shape index: {}]
  %s10 = inlined_call_operand.vmem [shape: f32[1,128], index: 10, kind: input, shape index: {}]
  %s11 = inlined_call_operand.vmem [shape: f32[128,32], index: 11, kind: input, shape index: {}]
  %s12 = inlined_call_operand.vmem [shape: f32[1,32], index: 12, kind: input, shape index: {}]
  %s13 = inlined_call_operand.vmem [shape: f32[1,32], index: 13, kind: input, shape index: {}]
  %s14 = inlined_call_operand.vmem [shape: f32[1,32], index: 14, kind: input, shape index: {}]
  %s15 = inlined_call_operand.vmem [shape: f32[1,32], index: 15, kind: input, shape index: {}]
  %s16 = inlined_call_operand.vmem [shape: f32[1,32], index: 16, kind: input, shape index: {}]
  %s17 = inlined_call_operand.hbm [shape: f32[2,8,32], index: 17, kind: output, shape index: {}]
  %s18 = sld [smem:[#allocation0]]
  $region101: #{tpu_custom_call.1} parent=0
    _
  %s20 = ssub.s32 1, %s18
  %s21 = scalar_select 0, %s20, %s18
  $region1: #{tpu_custom_call.1} parent=0
    #allocation2 [shape = 'u8[8192]{0}', space=vmem, size = 0x2000, scoped, tag = 'output window, operand 0']
    #allocation3 [shape = 's32[2]{0}', space=sflag, size = 0x8, scoped, tag = 'scoped memory for tpu_custom_call.1']
    %22 = vsyncpa [#allocation3], 0
    %s23 = scalar_lea.sflag [#allocation3], 1
    %24 = vsyncpa %s23, 0
    loop: start=0, step=1, limit=4
    $region2: #{tpu_custom_call.1} parent=1 // loop_pre_header
      _
    $region3: #{tpu_custom_call.1} parent=1 // loop_header
      %s26 = sphi 0, %s30
      %p27 = scmp.ge.s32.totalorder %s26, 4
      %s36 = sphi 0, %s38
      %s39 = sphi 0, %s36
      %s40 = sphi 0, %s39
      %s56 = sphi 0, %s40
      %s60 = sphi 0, %s60
      %s62 = sphi 0, %s60
      %s63 = sphi 0, %s62
      %s77 = sphi 0, %s63
      %s81 = sphi 0, %s81
      %s83 = sphi 0, %s81
      %s84 = sphi 0, %s83
      %s98 = sphi 0, %s84
      %s102 = sphi 0, %s102
      %s104 = sphi 0, %s102
      %s105 = sphi 0, %s104
      %s119 = sphi 0, %s105
      %s123 = sphi 0, %s123
      %s125 = sphi 0, %s123
      %s126 = sphi 0, %s125
      %s140 = sphi 0, %s126
      %s144 = sphi 0, %s144
      %s146 = sphi 0, %s144
      %s147 = sphi 0, %s146
      %s161 = sphi 0, %s147
      %s165 = sphi 0, %s165
      %s167 = sphi 0, %s165
      %s168 = sphi 0, %s167
      %s182 = sphi 0, %s168
      %s186 = sphi 0, %s186
      %s188 = sphi 0, %s186
      %s189 = sphi 0, %s188
      %s203 = sphi 0, %s189
      %s207 = sphi 0, %s207
      %s209 = sphi 0, %s207
      %s210 = sphi 0, %s209
      %s224 = sphi 0, %s210
      %s228 = sphi 0, %s228
      %s230 = sphi 0, %s228
      %s231 = sphi 0, %s230
      %s245 = sphi 0, %s231
      %s249 = sphi 0, %s249
      %s251 = sphi 0, %s249
      %s252 = sphi 0, %s251
      %s266 = sphi 0, %s252
      %s270 = sphi 0, %s270
      %s272 = sphi 0, %s270
      %s273 = sphi 0, %s272
      %s287 = sphi 0, %s273
      %s291 = sphi 0, %s291
      %s293 = sphi 0, %s291
      %s294 = sphi 0, %s293
      %s308 = sphi 0, %s294
      %s312 = sphi 0, %s312
      %s314 = sphi 0, %s312
      %s315 = sphi 0, %s314
      %s329 = sphi 0, %s315
      %s333 = sphi 0, %s333
      %s335 = sphi 0, %s333
      %s336 = sphi 0, %s335
      %s350 = sphi 0, %s336
      %s354 = sphi 0, %s354
      %s356 = sphi 0, %s354
      %s357 = sphi 0, %s356
      %s371 = sphi 0, %s357
      %s375 = sphi 0, %s375
      %s377 = sphi 0, %s375
      %s378 = sphi 0, %s377
      %s392 = sphi 0, %s378
      %s398 = sphi 0, %s400
      %s401 = sphi 0, %s398
      %s402 = sphi 0, %s401
      %s418 = sphi 0, %s402
    $region4: #{tpu_custom_call.1} parent=1 // loop_header_branch
      %29 = sbr.rel (%p27) target = $region8
    $region5: #{tpu_custom_call.1} parent=1 // loop_body
      %s31 = ssub.s32 %s26, 1
      %s32 = ssub.s32 %s26, 2
      %s33 = sadd.s32 %s26, 1
      %s34 = ssub.s32 %s26, %s33
      %p35 = scmp.eq.s32.totalorder %s34, 0
      %s37 = sadd.s32 %s36, 1
      %s38 = scalar_select %p35, %s36, %s37
      %p41 = pneg %p35
      %p42 = scmp.eq.s32.totalorder %s26, 1
      %p43 = por %p41, %p42
      %p44 = scmp.ne.s32.totalorder %s36, %s39
      %p45 = scmp.eq.s32.totalorder %s26, 0
      %p46 = por %p44, %p45
      %p47 = scmp.ne.s32.totalorder %s36, %s39
      %p48 = scmp.eq.s32.totalorder %s31, 1
      %p49 = por %p47, %p48
      %p50 = scmp.ne.s32.totalorder %s39, %s40
      %p51 = scmp.eq.s32.totalorder %s31, 0
      %p52 = por %p50, %p51
      %p53 = scmp.ne.s32.totalorder %s39, %s40
      %p54 = scmp.eq.s32.totalorder %s32, 1
      %p55 = por %p53, %p54
      %p57 = scmp.ne.s32.totalorder %s40, %s56
      %p58 = scmp.eq.s32.totalorder %s32, 0
      %p59 = por %p57, %p58
      %s61 = sadd.s32 %s60, 1
      %p64 = scmp.eq.s32.totalorder %s26, 1
      %p65 = scmp.ne.s32.totalorder %s60, %s62
      %p66 = scmp.eq.s32.totalorder %s26, 0
      %p67 = por %p65, %p66
      %p68 = scmp.ne.s32.totalorder %s60, %s62
      %p69 = scmp.eq.s32.totalorder %s31, 1
      %p70 = por %p68, %p69
      %p71 = scmp.ne.s32.totalorder %s62, %s63
      %p72 = scmp.eq.s32.totalorder %s31, 0
      %p73 = por %p71, %p72
      %p74 = scmp.ne.s32.totalorder %s62, %s63
      %p75 = scmp.eq.s32.totalorder %s32, 1
      %p76 = por %p74, %p75
      %p78 = scmp.ne.s32.totalorder %s63, %s77
      %p79 = scmp.eq.s32.totalorder %s32, 0
      %p80 = por %p78, %p79
      %s82 = sadd.s32 %s81, 1
      %p85 = scmp.eq.s32.totalorder %s26, 1
      %p86 = scmp.ne.s32.totalorder %s81, %s83
      %p87 = scmp.eq.s32.totalorder %s26, 0
      %p88 = por %p86, %p87
      %p89 = scmp.ne.s32.totalorder %s81, %s83
      %p90 = scmp.eq.s32.totalorder %s31, 1
      %p91 = por %p89, %p90
      %p92 = scmp.ne.s32.totalorder %s83, %s84
      %p93 = scmp.eq.s32.totalorder %s31, 0
      %p94 = por %p92, %p93
      %p95 = scmp.ne.s32.totalorder %s83, %s84
      %p96 = scmp.eq.s32.totalorder %s32, 1
      %p97 = por %p95, %p96
      %p99 = scmp.ne.s32.totalorder %s84, %s98
      %p100 = scmp.eq.s32.totalorder %s32, 0
      %p101 = por %p99, %p100
      %s103 = sadd.s32 %s102, 1
      %p106 = scmp.eq.s32.totalorder %s26, 1
      %p107 = scmp.ne.s32.totalorder %s102, %s104
      %p108 = scmp.eq.s32.totalorder %s26, 0
      %p109 = por %p107, %p108
      %p110 = scmp.ne.s32.totalorder %s102, %s104
      %p111 = scmp.eq.s32.totalorder %s31, 1
      %p112 = por %p110, %p111
      %p113 = scmp.ne.s32.totalorder %s104, %s105
      %p114 = scmp.eq.s32.totalorder %s31, 0
      %p115 = por %p113, %p114
      %p116 = scmp.ne.s32.totalorder %s104, %s105
      %p117 = scmp.eq.s32.totalorder %s32, 1
      %p118 = por %p116, %p117
      %p120 = scmp.ne.s32.totalorder %s105, %s119
      %p121 = scmp.eq.s32.totalorder %s32, 0
      %p122 = por %p120, %p121
      %s124 = sadd.s32 %s123, 1
      %p127 = scmp.eq.s32.totalorder %s26, 1
      %p128 = scmp.ne.s32.totalorder %s123, %s125
      %p129 = scmp.eq.s32.totalorder %s26, 0
      %p130 = por %p128, %p129
      %p131 = scmp.ne.s32.totalorder %s123, %s125
      %p132 = scmp.eq.s32.totalorder %s31, 1
      %p133 = por %p131, %p132
      %p134 = scmp.ne.s32.totalorder %s125, %s126
      %p135 = scmp.eq.s32.totalorder %s31, 0
      %p136 = por %p134, %p135
      %p137 = scmp.ne.s32.totalorder %s125, %s126
      %p138 = scmp.eq.s32.totalorder %s32, 1
      %p139 = por %p137, %p138
      %p141 = scmp.ne.s32.totalorder %s126, %s140
      %p142 = scmp.eq.s32.totalorder %s32, 0
      %p143 = por %p141, %p142
      %s145 = sadd.s32 %s144, 1
      %p148 = scmp.eq.s32.totalorder %s26, 1
      %p149 = scmp.ne.s32.totalorder %s144, %s146
      %p150 = scmp.eq.s32.totalorder %s26, 0
      %p151 = por %p149, %p150
      %p152 = scmp.ne.s32.totalorder %s144, %s146
      %p153 = scmp.eq.s32.totalorder %s31, 1
      %p154 = por %p152, %p153
      %p155 = scmp.ne.s32.totalorder %s146, %s147
      %p156 = scmp.eq.s32.totalorder %s31, 0
      %p157 = por %p155, %p156
      %p158 = scmp.ne.s32.totalorder %s146, %s147
      %p159 = scmp.eq.s32.totalorder %s32, 1
      %p160 = por %p158, %p159
      %p162 = scmp.ne.s32.totalorder %s147, %s161
      %p163 = scmp.eq.s32.totalorder %s32, 0
      %p164 = por %p162, %p163
      %s166 = sadd.s32 %s165, 1
      %p169 = scmp.eq.s32.totalorder %s26, 1
      %p170 = scmp.ne.s32.totalorder %s165, %s167
      %p171 = scmp.eq.s32.totalorder %s26, 0
      %p172 = por %p170, %p171
      %p173 = scmp.ne.s32.totalorder %s165, %s167
      %p174 = scmp.eq.s32.totalorder %s31, 1
      %p175 = por %p173, %p174
      %p176 = scmp.ne.s32.totalorder %s167, %s168
      %p177 = scmp.eq.s32.totalorder %s31, 0
      %p178 = por %p176, %p177
      %p179 = scmp.ne.s32.totalorder %s167, %s168
      %p180 = scmp.eq.s32.totalorder %s32, 1
      %p181 = por %p179, %p180
      %p183 = scmp.ne.s32.totalorder %s168, %s182
      %p184 = scmp.eq.s32.totalorder %s32, 0
      %p185 = por %p183, %p184
      %s187 = sadd.s32 %s186, 1
      %p190 = scmp.eq.s32.totalorder %s26, 1
      %p191 = scmp.ne.s32.totalorder %s186, %s188
      %p192 = scmp.eq.s32.totalorder %s26, 0
      %p193 = por %p191, %p192
      %p194 = scmp.ne.s32.totalorder %s186, %s188
      %p195 = scmp.eq.s32.totalorder %s31, 1
      %p196 = por %p194, %p195
      %p197 = scmp.ne.s32.totalorder %s188, %s189
      %p198 = scmp.eq.s32.totalorder %s31, 0
      %p199 = por %p197, %p198
      %p200 = scmp.ne.s32.totalorder %s188, %s189
      %p201 = scmp.eq.s32.totalorder %s32, 1
      %p202 = por %p200, %p201
      %p204 = scmp.ne.s32.totalorder %s189, %s203
      %p205 = scmp.eq.s32.totalorder %s32, 0
      %p206 = por %p204, %p205
      %s208 = sadd.s32 %s207, 1
      %p211 = scmp.eq.s32.totalorder %s26, 1
      %p212 = scmp.ne.s32.totalorder %s207, %s209
      %p213 = scmp.eq.s32.totalorder %s26, 0
      %p214 = por %p212, %p213
      %p215 = scmp.ne.s32.totalorder %s207, %s209
      %p216 = scmp.eq.s32.totalorder %s31, 1
      %p217 = por %p215, %p216
      %p218 = scmp.ne.s32.totalorder %s209, %s210
      %p219 = scmp.eq.s32.totalorder %s31, 0
      %p220 = por %p218, %p219
      %p221 = scmp.ne.s32.totalorder %s209, %s210
      %p222 = scmp.eq.s32.totalorder %s32, 1
      %p223 = por %p221, %p222
      %p225 = scmp.ne.s32.totalorder %s210, %s224
      %p226 = scmp.eq.s32.totalorder %s32, 0
      %p227 = por %p225, %p226
      %s229 = sadd.s32 %s228, 1
      %p232 = scmp.eq.s32.totalorder %s26, 1
      %p233 = scmp.ne.s32.totalorder %s228, %s230
      %p234 = scmp.eq.s32.totalorder %s26, 0
      %p235 = por %p233, %p234
      %p236 = scmp.ne.s32.totalorder %s228, %s230
      %p237 = scmp.eq.s32.totalorder %s31, 1
      %p238 = por %p236, %p237
      %p239 = scmp.ne.s32.totalorder %s230, %s231
      %p240 = scmp.eq.s32.totalorder %s31, 0
      %p241 = por %p239, %p240
      %p242 = scmp.ne.s32.totalorder %s230, %s231
      %p243 = scmp.eq.s32.totalorder %s32, 1
      %p244 = por %p242, %p243
      %p246 = scmp.ne.s32.totalorder %s231, %s245
      %p247 = scmp.eq.s32.totalorder %s32, 0
      %p248 = por %p246, %p247
      %s250 = sadd.s32 %s249, 1
      %p253 = scmp.eq.s32.totalorder %s26, 1
      %p254 = scmp.ne.s32.totalorder %s249, %s251
      %p255 = scmp.eq.s32.totalorder %s26, 0
      %p256 = por %p254, %p255
      %p257 = scmp.ne.s32.totalorder %s249, %s251
      %p258 = scmp.eq.s32.totalorder %s31, 1
      %p259 = por %p257, %p258
      %p260 = scmp.ne.s32.totalorder %s251, %s252
      %p261 = scmp.eq.s32.totalorder %s31, 0
      %p262 = por %p260, %p261
      %p263 = scmp.ne.s32.totalorder %s251, %s252
      %p264 = scmp.eq.s32.totalorder %s32, 1
      %p265 = por %p263, %p264
      %p267 = scmp.ne.s32.totalorder %s252, %s266
      %p268 = scmp.eq.s32.totalorder %s32, 0
      %p269 = por %p267, %p268
      %s271 = sadd.s32 %s270, 1
      %p274 = scmp.eq.s32.totalorder %s26, 1
      %p275 = scmp.ne.s32.totalorder %s270, %s272
      %p276 = scmp.eq.s32.totalorder %s26, 0
      %p277 = por %p275, %p276
      %p278 = scmp.ne.s32.totalorder %s270, %s272
      %p279 = scmp.eq.s32.totalorder %s31, 1
      %p280 = por %p278, %p279
      %p281 = scmp.ne.s32.totalorder %s272, %s273
      %p282 = scmp.eq.s32.totalorder %s31, 0
      %p283 = por %p281, %p282
      %p284 = scmp.ne.s32.totalorder %s272, %s273
      %p285 = scmp.eq.s32.totalorder %s32, 1
      %p286 = por %p284, %p285
      %p288 = scmp.ne.s32.totalorder %s273, %s287
      %p289 = scmp.eq.s32.totalorder %s32, 0
      %p290 = por %p288, %p289
      %s292 = sadd.s32 %s291, 1
      %p295 = scmp.eq.s32.totalorder %s26, 1
      %p296 = scmp.ne.s32.totalorder %s291, %s293
      %p297 = scmp.eq.s32.totalorder %s26, 0
      %p298 = por %p296, %p297
      %p299 = scmp.ne.s32.totalorder %s291, %s293
      %p300 = scmp.eq.s32.totalorder %s31, 1
      %p301 = por %p299, %p300
      %p302 = scmp.ne.s32.totalorder %s293, %s294
      %p303 = scmp.eq.s32.totalorder %s31, 0
      %p304 = por %p302, %p303
      %p305 = scmp.ne.s32.totalorder %s293, %s294
      %p306 = scmp.eq.s32.totalorder %s32, 1
      %p307 = por %p305, %p306
      %p309 = scmp.ne.s32.totalorder %s294, %s308
      %p310 = scmp.eq.s32.totalorder %s32, 0
      %p311 = por %p309, %p310
      %s313 = sadd.s32 %s312, 1
      %p316 = scmp.eq.s32.totalorder %s26, 1
      %p317 = scmp.ne.s32.totalorder %s312, %s314
      %p318 = scmp.eq.s32.totalorder %s26, 0
      %p319 = por %p317, %p318
      %p320 = scmp.ne.s32.totalorder %s312, %s314
      %p321 = scmp.eq.s32.totalorder %s31, 1
      %p322 = por %p320, %p321
      %p323 = scmp.ne.s32.totalorder %s314, %s315
      %p324 = scmp.eq.s32.totalorder %s31, 0
      %p325 = por %p323, %p324
      %p326 = scmp.ne.s32.totalorder %s314, %s315
      %p327 = scmp.eq.s32.totalorder %s32, 1
      %p328 = por %p326, %p327
      %p330 = scmp.ne.s32.totalorder %s315, %s329
      %p331 = scmp.eq.s32.totalorder %s32, 0
      %p332 = por %p330, %p331
      %s334 = sadd.s32 %s333, 1
      %p337 = scmp.eq.s32.totalorder %s26, 1
      %p338 = scmp.ne.s32.totalorder %s333, %s335
      %p339 = scmp.eq.s32.totalorder %s26, 0
      %p340 = por %p338, %p339
      %p341 = scmp.ne.s32.totalorder %s333, %s335
      %p342 = scmp.eq.s32.totalorder %s31, 1
      %p343 = por %p341, %p342
      %p344 = scmp.ne.s32.totalorder %s335, %s336
      %p345 = scmp.eq.s32.totalorder %s31, 0
      %p346 = por %p344, %p345
      %p347 = scmp.ne.s32.totalorder %s335, %s336
      %p348 = scmp.eq.s32.totalorder %s32, 1
      %p349 = por %p347, %p348
      %p351 = scmp.ne.s32.totalorder %s336, %s350
      %p352 = scmp.eq.s32.totalorder %s32, 0
      %p353 = por %p351, %p352
      %s355 = sadd.s32 %s354, 1
      %p358 = scmp.eq.s32.totalorder %s26, 1
      %p359 = scmp.ne.s32.totalorder %s354, %s356
      %p360 = scmp.eq.s32.totalorder %s26, 0
      %p361 = por %p359, %p360
      %p362 = scmp.ne.s32.totalorder %s354, %s356
      %p363 = scmp.eq.s32.totalorder %s31, 1
      %p364 = por %p362, %p363
      %p365 = scmp.ne.s32.totalorder %s356, %s357
      %p366 = scmp.eq.s32.totalorder %s31, 0
      %p367 = por %p365, %p366
      %p368 = scmp.ne.s32.totalorder %s356, %s357
      %p369 = scmp.eq.s32.totalorder %s32, 1
      %p370 = por %p368, %p369
      %p372 = scmp.ne.s32.totalorder %s357, %s371
      %p373 = scmp.eq.s32.totalorder %s32, 0
      %p374 = por %p372, %p373
      %s376 = sadd.s32 %s375, 1
      %p379 = scmp.eq.s32.totalorder %s26, 1
      %p380 = scmp.ne.s32.totalorder %s375, %s377
      %p381 = scmp.eq.s32.totalorder %s26, 0
      %p382 = por %p380, %p381
      %p383 = scmp.ne.s32.totalorder %s375, %s377
      %p384 = scmp.eq.s32.totalorder %s31, 1
      %p385 = por %p383, %p384
      %p386 = scmp.ne.s32.totalorder %s377, %s378
      %p387 = scmp.eq.s32.totalorder %s31, 0
      %p388 = por %p386, %p387
      %p389 = scmp.ne.s32.totalorder %s377, %s378
      %p390 = scmp.eq.s32.totalorder %s32, 1
      %p391 = por %p389, %p390
      %p393 = scmp.ne.s32.totalorder %s378, %s392
      %p394 = scmp.eq.s32.totalorder %s32, 0
      %p395 = por %p393, %p394
      %s396 = ssub.s32 %s26, %s33
      %p397 = scmp.eq.s32.totalorder %s396, 0
      %s399 = sadd.s32 %s398, 1
      %s400 = scalar_select %p397, %s398, %s399
      %p403 = pneg %p397
      %p404 = scmp.eq.s32.totalorder %s26, 1
      %p405 = por %p403, %p404
      %p406 = scmp.ne.s32.totalorder %s398, %s401
      %p407 = scmp.eq.s32.totalorder %s26, 0
      %p408 = por %p406, %p407
      %p409 = scmp.ne.s32.totalorder %s398, %s401
      %p410 = scmp.eq.s32.totalorder %s31, 1
      %p411 = por %p409, %p410
      %p412 = scmp.ne.s32.totalorder %s401, %s402
      %p413 = scmp.eq.s32.totalorder %s31, 0
      %p414 = por %p412, %p413
      %p415 = scmp.ne.s32.totalorder %s401, %s402
      %p416 = scmp.eq.s32.totalorder %s32, 1
      %p417 = por %p415, %p416
      %p419 = scmp.ne.s32.totalorder %s402, %s418
      %p420 = scmp.eq.s32.totalorder %s32, 0
      %p421 = por %p419, %p420
      %p422 = scmp.le.s32.totalorder 1, %s26
      %p423 = scmp.lt.s32.totalorder %s26, 3
      %p424 = pnand %p422, %p423
      %p425 = pneg %p424
      // Predicated region
      $region9: #{tpu_custom_call.1} parent=5 // pred_check
        _
      $region10: #{tpu_custom_call.1} parent=5 // pred_check_branch
        %427 = sbr.rel (%p424) target = $region12
      $region11: #{tpu_custom_call.1} parent=5 // pred_region
        %s428 = ssub.s32 %s26, 1
        // Predicated region
        $region13: #{tpu_custom_call.1} parent=11 // pred_check
          %p429 = pneg %p73
        $region14: #{tpu_custom_call.1} parent=11 // pred_check_branch
          %431 = sbr.rel (%p429) target = $region16
        $region15: #{tpu_custom_call.1} parent=11 // pred_region
          _
        $region16: #{tpu_custom_call.1} parent=11 // pred_fallthru
          _
        // Predicated region
        $region17: #{tpu_custom_call.1} parent=11 // pred_check
          %p432 = pneg %p94
        $region18: #{tpu_custom_call.1} parent=11 // pred_check_branch
          %434 = sbr.rel (%p432) target = $region20
        $region19: #{tpu_custom_call.1} parent=11 // pred_region
          _
        $region20: #{tpu_custom_call.1} parent=11 // pred_fallthru
          _
        // Predicated region
        $region21: #{tpu_custom_call.1} parent=11 // pred_check
          %p435 = pneg %p115
        $region22: #{tpu_custom_call.1} parent=11 // pred_check_branch
          %437 = sbr.rel (%p435) target = $region24
        $region23: #{tpu_custom_call.1} parent=11 // pred_region
          _
        $region24: #{tpu_custom_call.1} parent=11 // pred_fallthru
          _
        // Predicated region
        $region25: #{tpu_custom_call.1} parent=11 // pred_check
          %p438 = pneg %p136
        $region26: #{tpu_custom_call.1} parent=11 // pred_check_branch
          %440 = sbr.rel (%p438) target = $region28
        $region27: #{tpu_custom_call.1} parent=11 // pred_region
          _
        $region28: #{tpu_custom_call.1} parent=11 // pred_fallthru
          _
        // Predicated region
        $region29: #{tpu_custom_call.1} parent=11 // pred_check
          %p441 = pneg %p157
        $region30: #{tpu_custom_call.1} parent=11 // pred_check_branch
          %443 = sbr.rel (%p441) target = $region32
        $region31: #{tpu_custom_call.1} parent=11 // pred_region
          _
        $region32: #{tpu_custom_call.1} parent=11 // pred_fallthru
          _
        // Predicated region
        $region33: #{tpu_custom_call.1} parent=11 // pred_check
          %p444 = pneg %p178
        $region34: #{tpu_custom_call.1} parent=11 // pred_check_branch
          %446 = sbr.rel (%p444) target = $region36
        $region35: #{tpu_custom_call.1} parent=11 // pred_region
          _
        $region36: #{tpu_custom_call.1} parent=11 // pred_fallthru
          _
        // Predicated region
        $region37: #{tpu_custom_call.1} parent=11 // pred_check
          %p447 = pneg %p199
        $region38: #{tpu_custom_call.1} parent=11 // pred_check_branch
          %449 = sbr.rel (%p447) target = $region40
        $region39: #{tpu_custom_call.1} parent=11 // pred_region
          _
        $region40: #{tpu_custom_call.1} parent=11 // pred_fallthru
          _
        // Predicated region
        $region41: #{tpu_custom_call.1} parent=11 // pred_check
          %p450 = pneg %p220
        $region42: #{tpu_custom_call.1} parent=11 // pred_check_branch
          %452 = sbr.rel (%p450) target = $region44
        $region43: #{tpu_custom_call.1} parent=11 // pred_region
          _
        $region44: #{tpu_custom_call.1} parent=11 // pred_fallthru
          _
        // Predicated region
        $region45: #{tpu_custom_call.1} parent=11 // pred_check
          %p453 = pneg %p241
        $region46: #{tpu_custom_call.1} parent=11 // pred_check_branch
          %455 = sbr.rel (%p453) target = $region48
        $region47: #{tpu_custom_call.1} parent=11 // pred_region
          _
        $region48: #{tpu_custom_call.1} parent=11 // pred_fallthru
          _
        // Predicated region
        $region49: #{tpu_custom_call.1} parent=11 // pred_check
          %p456 = pneg %p262
        $region50: #{tpu_custom_call.1} parent=11 // pred_check_branch
          %458 = sbr.rel (%p456) target = $region52
        $region51: #{tpu_custom_call.1} parent=11 // pred_region
          _
        $region52: #{tpu_custom_call.1} parent=11 // pred_fallthru
          _
        // Predicated region
        $region53: #{tpu_custom_call.1} parent=11 // pred_check
          %p459 = pneg %p283
        $region54: #{tpu_custom_call.1} parent=11 // pred_check_branch
          %461 = sbr.rel (%p459) target = $region56
        $region55: #{tpu_custom_call.1} parent=11 // pred_region
          _
        $region56: #{tpu_custom_call.1} parent=11 // pred_fallthru
          _
        // Predicated region
        $region57: #{tpu_custom_call.1} parent=11 // pred_check
          %p462 = pneg %p304
        $region58: #{tpu_custom_call.1} parent=11 // pred_check_branch
          %464 = sbr.rel (%p462) target = $region60
        $region59: #{tpu_custom_call.1} parent=11 // pred_region
          _
        $region60: #{tpu_custom_call.1} parent=11 // pred_fallthru
          _
        // Predicated region
        $region61: #{tpu_custom_call.1} parent=11 // pred_check
          %p465 = pneg %p325
        $region62: #{tpu_custom_call.1} parent=11 // pred_check_branch
          %467 = sbr.rel (%p465) target = $region64
        $region63: #{tpu_custom_call.1} parent=11 // pred_region
          _
        $region64: #{tpu_custom_call.1} parent=11 // pred_fallthru
          _
        // Predicated region
        $region65: #{tpu_custom_call.1} parent=11 // pred_check
          %p468 = pneg %p346
        $region66: #{tpu_custom_call.1} parent=11 // pred_check_branch
          %470 = sbr.rel (%p468) target = $region68
        $region67: #{tpu_custom_call.1} parent=11 // pred_region
          _
        $region68: #{tpu_custom_call.1} parent=11 // pred_fallthru
          _
        // Predicated region
        $region69: #{tpu_custom_call.1} parent=11 // pred_check
          %p471 = pneg %p367
        $region70: #{tpu_custom_call.1} parent=11 // pred_check_branch
          %473 = sbr.rel (%p471) target = $region72
        $region71: #{tpu_custom_call.1} parent=11 // pred_region
          _
        $region72: #{tpu_custom_call.1} parent=11 // pred_fallthru
          _
        // Predicated region
        $region73: #{tpu_custom_call.1} parent=11 // pred_check
          %p474 = pneg %p388
        $region74: #{tpu_custom_call.1} parent=11 // pred_check_branch
          %476 = sbr.rel (%p474) target = $region76
        $region75: #{tpu_custom_call.1} parent=11 // pred_region
          _
        $region76: #{tpu_custom_call.1} parent=11 // pred_fallthru
          _
      $region12: #{tpu_custom_call.1} parent=5 // pred_fallthru
        _
      %p477 = scmp.lt.s32.totalorder %s26, 2
      // Predicated region
      $region77: #{tpu_custom_call.1} parent=5 // pred_check
        %p478 = pneg %p477
      $region78: #{tpu_custom_call.1} parent=5 // pred_check_branch
        %480 = sbr.rel (%p478) target = $region80
      $region79: #{tpu_custom_call.1} parent=5 // pred_region
        // Predicated region
        $region81: #{tpu_custom_call.1} parent=79 // pred_check
          %p481 = pneg %p46
        $region82: #{tpu_custom_call.1} parent=79 // pred_check_branch
          %483 = sbr.rel (%p481) target = $region84
        $region83: #{tpu_custom_call.1} parent=79 // pred_region
          %p484 = scmp.lt.s32.totalorder %s26, 1
          %s485 = scalar_select %p484, %s26, 1
          %s486 = smul.addr %s485, 8
          %s487 = scalar_lea.vmem %s0, %s486
        $region84: #{tpu_custom_call.1} parent=79 // pred_fallthru
          _
      $region80: #{tpu_custom_call.1} parent=5 // pred_fallthru
        _
      %p488 = scmp.le.s32.totalorder 1, %s26
      %p489 = scmp.lt.s32.totalorder %s26, 3
      %p490 = pnand %p488, %p489
      %p491 = pneg %p490
      // Predicated region
      $region85: #{tpu_custom_call.1} parent=5 // pred_check
        _
      $region86: #{tpu_custom_call.1} parent=5 // pred_check_branch
        %493 = sbr.rel (%p490) target = $region88
      $region87: #{tpu_custom_call.1} parent=5 // pred_region
        %s494 = ssub.s32 %s26, 1
        %p495 = scmp.lt.s32.totalorder %s31, 1
        %s496 = scalar_select %p495, %s31, 1
        %s497 = smul.addr %s496, 8
        %s498 = scalar_lea.vmem %s0, %s497
        %p499 = pneg %p52
        %p500 = pneg %p49
        %p501 = pneg %p73
        %p502 = pneg %p70
        %p503 = pneg %p94
        %p504 = pneg %p91
        %p505 = pneg %p115
        %p506 = pneg %p112
        %p507 = pneg %p136
        %p508 = pneg %p133
        %p509 = pneg %p157
        %p510 = pneg %p154
        %p511 = pneg %p178
        %p512 = pneg %p175
        %p513 = pneg %p199
        %p514 = pneg %p196
        %p515 = pneg %p220
        %p516 = pneg %p217
        %p517 = pneg %p241
        %p518 = pneg %p238
        %p519 = pneg %p262
        %p520 = pneg %p259
        %p521 = pneg %p283
        %p522 = pneg %p280
        %p523 = pneg %p304
        %p524 = pneg %p301
        %p525 = pneg %p325
        %p526 = pneg %p322
        %p527 = pneg %p346
        %p528 = pneg %p343
        %p529 = pneg %p367
        %p530 = pneg %p364
        %p531 = pneg %p388
        %p532 = pneg %p385
        %p533 = pneg %p414
        %p534 = pneg %p411
        %s535 = sand.u32 %s401, 1
        %s536 = scalar_lea.sflag [#allocation3], %s535
        %s537 = sand.u32 %s401, 1
        %s538 = smul.addr %s537, 8
        %s539 = scalar_lea.vmem [#allocation2], %s538
        %p540 = scmp.lt.s32.totalorder %s31, 1
        %s541 = scalar_select %p540, %s31, 1
        %s542 = smul.addr %s541, 8
        %s543 = scalar_lea.vmem %s0, %s542
        %v544 = vld [vmem:[%s543] sm:$0xff]
        %v545 = vld [vmem:[%s1] sm:$0xff]
        %v546 = vld [vmem:[%s1 + $0x8] sm:$0xff]
        %v547 = vld [vmem:[%s1 + $0x10] sm:$0xff]
        %v548 = vld [vmem:[%s1 + $0x18] sm:$0xff]
        %v549 = vld [vmem:[%s2] sm:$0x1]
        %v551 = vlaneseq
        %v552 = vshrl.u32 %v551, 7
        %v553 = vsub.s32 0, %v552
        %v554 = vrot.slane %v549, %v553
        %vm556 = vcmask 261120
        %v558 = vsel %vm556, %v544, 0
        %560 = vmatprep.subr.mxu0 0.0
        %561 = vmatpush1.msra.mxu0 0.0
        %562 = vmatprep.subr.mxu0 0.0
        %563 = vmatpush1.msra.mxu0 0.0
        %564 = vmatprep.subr.mxu0 0.0
        %565 = vmatpush1.msra.mxu0 0.0
        %566 = vmatprep.subr.mxu0 0.0
        %567 = vmatpush1.msra.mxu0 0.0
        %568 = vmatprep.subr.mxu0 0.0
        %569 = vmatpush1.msra.mxu0 0.0
        %570 = vmatprep.subr.mxu0 0.0
        %571 = vmatpush1.msra.mxu0 0.0
        %572 = vmatprep.subr.mxu0 0.0
        %573 = vmatpush1.msra.mxu0 0.0
        %574 = vmatprep.subr.mxu0 0.0
        %575 = vmatpush1.msra.mxu0 0.0
        %576 = vmatprep.subr.mxu0 0.0
        %577 = vmatpush1.msra.mxu0 0.0
        %578 = vmatprep.subr.mxu0 0.0
        %579 = vmatpush1.msra.mxu0 0.0
        %580 = vmatprep.subr.mxu0 0.0
        %581 = vmatpush1.msra.mxu0 0.0
        %582 = vmatprep.subr.mxu0 0.0
        %583 = vmatpush1.msra.mxu0 0.0
        %584 = vmatprep.subr.mxu0 0.0
        %585 = vmatpush1.msra.mxu0 %v548
        %586 = vmatprep.subr.mxu0 0.0
        %587 = vmatpush1.msra.mxu0 %v547
        %588 = vmatprep.subr.mxu0 0.0
        %589 = vmatpush1.msra.mxu0 %v546
        %590 = vmatprep.subr.mxu0 0.0
        %591 = vmatpush1.msra.mxu0 %v545
        %592 = vmatprep.subr.mxu0 0.0
        %593 = vmatpush2.msra.mxu0 0.0
        %594 = vmatprep.subr.mxu0 0.0
        %595 = vmatpush2.msra.mxu0 0.0
        %596 = vmatprep.subr.mxu0 0.0
        %597 = vmatpush2.msra.mxu0 0.0
        %598 = vmatprep.subr.mxu0 0.0
        %599 = vmatpush2.msra.mxu0 0.0
        %600 = vmatprep.subr.mxu0 0.0
        %601 = vmatpush2.msra.mxu0 0.0
        %602 = vmatprep.subr.mxu0 0.0
        %603 = vmatpush2.msra.mxu0 0.0
        %604 = vmatprep.subr.mxu0 0.0
        %605 = vmatpush2.msra.mxu0 0.0
        %606 = vmatprep.subr.mxu0 0.0
        %607 = vmatpush2.msra.mxu0 0.0
        %608 = vmatprep.subr.mxu0 0.0
        %609 = vmatpush2.msra.mxu0 0.0
        %610 = vmatprep.subr.mxu0 0.0
        %611 = vmatpush2.msra.mxu0 0.0
        %612 = vmatprep.subr.mxu0 0.0
        %613 = vmatpush2.msra.mxu0 0.0
        %614 = vmatprep.subr.mxu0 0.0
        %615 = vmatpush2.msra.mxu0 0.0
        %616 = vmatprep.subr.mxu0 0.0
        %617 = vmatpush2.msra.mxu0 0.0
        %618 = vmatprep.subr.mxu0 0.0
        %619 = vmatpush2.msra.mxu0 0.0
        %620 = vmatprep.subr.mxu0 0.0
        %621 = vmatpush2.msra.mxu0 0.0
        %622 = vmatprep.subr.mxu0 0.0
        %623 = vmatpush2.msra.mxu0 0.0
        %624 = vmatprep.mubr.f32.mxu0 0.0
        %625 = vmatmul.mubr.f32.gmra.mxu0 %v558
        %v626 = vpop.f32.mrf.mxu0
        %v627 = vadd.f32 %v554, %v626
        %v628 = vpop.f32.mrf.mxu0
        %629 = vdwg.mxu0
        %v630 = vld [vmem:[%s3] sm:$0xff]
        %v631 = vld [vmem:[%s3 + $0x8] sm:$0xff]
        %v632 = vld [vmem:[%s3 + $0x10] sm:$0xff]
        %v633 = vld [vmem:[%s3 + $0x18] sm:$0xff]
        %v634 = vld [vmem:[%s4] sm:$0x1]
        %v636 = vlaneseq
        %v637 = vshrl.u32 %v636, 7
        %v638 = vsub.s32 0, %v637
        %v639 = vrot.slane %v634, %v638
        %641 = vmatprep.subr.mxu0 0.0
        %642 = vmatpush1.msra.mxu0 0.0
        %643 = vmatprep.subr.mxu0 0.0
        %644 = vmatpush1.msra.mxu0 0.0
        %645 = vmatprep.subr.mxu0 0.0
        %646 = vmatpush1.msra.mxu0 0.0
        %647 = vmatprep.subr.mxu0 0.0
        %648 = vmatpush1.msra.mxu0 0.0
        %649 = vmatprep.subr.mxu0 0.0
        %650 = vmatpush1.msra.mxu0 0.0
        %651 = vmatprep.subr.mxu0 0.0
        %652 = vmatpush1.msra.mxu0 0.0
        %653 = vmatprep.subr.mxu0 0.0
        %654 = vmatpush1.msra.mxu0 0.0
        %655 = vmatprep.subr.mxu0 0.0
        %656 = vmatpush1.msra.mxu0 0.0
        %657 = vmatprep.subr.mxu0 0.0
        %658 = vmatpush1.msra.mxu0 0.0
        %659 = vmatprep.subr.mxu0 0.0
        %660 = vmatpush1.msra.mxu0 0.0
        %661 = vmatprep.subr.mxu0 0.0
        %662 = vmatpush1.msra.mxu0 0.0
        %663 = vmatprep.subr.mxu0 0.0
        %664 = vmatpush1.msra.mxu0 0.0
        %665 = vmatprep.subr.mxu0 0.0
        %666 = vmatpush1.msra.mxu0 %v633
        %667 = vmatprep.subr.mxu0 0.0
        %668 = vmatpush1.msra.mxu0 %v632
        %669 = vmatprep.subr.mxu0 0.0
        %670 = vmatpush1.msra.mxu0 %v631
        %671 = vmatprep.subr.mxu0 0.0
        %672 = vmatpush1.msra.mxu0 %v630
        %673 = vmatprep.subr.mxu0 0.0
        %674 = vmatpush2.msra.mxu0 0.0
        %675 = vmatprep.subr.mxu0 0.0
        %676 = vmatpush2.msra.mxu0 0.0
        %677 = vmatprep.subr.mxu0 0.0
        %678 = vmatpush2.msra.mxu0 0.0
        %679 = vmatprep.subr.mxu0 0.0
        %680 = vmatpush2.msra.mxu0 0.0
        %681 = vmatprep.subr.mxu0 0.0
        %682 = vmatpush2.msra.mxu0 0.0
        %683 = vmatprep.subr.mxu0 0.0
        %684 = vmatpush2.msra.mxu0 0.0
        %685 = vmatprep.subr.mxu0 0.0
        %686 = vmatpush2.msra.mxu0 0.0
        %687 = vmatprep.subr.mxu0 0.0
        %688 = vmatpush2.msra.mxu0 0.0
        %689 = vmatprep.subr.mxu0 0.0
        %690 = vmatpush2.msra.mxu0 0.0
        %691 = vmatprep.subr.mxu0 0.0
        %692 = vmatpush2.msra.mxu0 0.0
        %693 = vmatprep.subr.mxu0 0.0
        %694 = vmatpush2.msra.mxu0 0.0
        %695 = vmatprep.subr.mxu0 0.0
        %696 = vmatpush2.msra.mxu0 0.0
        %697 = vmatprep.subr.mxu0 0.0
        %698 = vmatpush2.msra.mxu0 0.0
        %699 = vmatprep.subr.mxu0 0.0
        %700 = vmatpush2.msra.mxu0 0.0
        %701 = vmatprep.subr.mxu0 0.0
        %702 = vmatpush2.msra.mxu0 0.0
        %703 = vmatprep.subr.mxu0 0.0
        %704 = vmatpush2.msra.mxu0 0.0
        %705 = vmatprep.mubr.f32.mxu0 0.0
        %706 = vmatmul.mubr.f32.gmra.mxu0 %v558
        %v707 = vpop.f32.mrf.mxu0
        %v708 = vadd.f32 %v639, %v707
        %v709 = vpop.f32.mrf.mxu0
        %710 = vdwg.mxu0
        %v711 = vld [vmem:[%s5] sm:$0xff]
        %v712 = vld [vmem:[%s5 + $0x8] sm:$0xff]
        %v713 = vld [vmem:[%s5 + $0x10] sm:$0xff]
        %v714 = vld [vmem:[%s5 + $0x18] sm:$0xff]
        %v715 = vld [vmem:[%s6] sm:$0x1]
        %v717 = vlaneseq
        %v718 = vshrl.u32 %v717, 7
        %v719 = vsub.s32 0, %v718
        %v720 = vrot.slane %v715, %v719
        %722 = vmatprep.subr.mxu0 0.0
        %723 = vmatpush1.msra.mxu0 0.0
        %724 = vmatprep.subr.mxu0 0.0
        %725 = vmatpush1.msra.mxu0 0.0
        %726 = vmatprep.subr.mxu0 0.0
        %727 = vmatpush1.msra.mxu0 0.0
        %728 = vmatprep.subr.mxu0 0.0
        %729 = vmatpush1.msra.mxu0 0.0
        %730 = vmatprep.subr.mxu0 0.0
        %731 = vmatpush1.msra.mxu0 0.0
        %732 = vmatprep.subr.mxu0 0.0
        %733 = vmatpush1.msra.mxu0 0.0
        %734 = vmatprep.subr.mxu0 0.0
        %735 = vmatpush1.msra.mxu0 0.0
        %736 = vmatprep.subr.mxu0 0.0
        %737 = vmatpush1.msra.mxu0 0.0
        %738 = vmatprep.subr.mxu0 0.0
        %739 = vmatpush1.msra.mxu0 0.0
        %740 = vmatprep.subr.mxu0 0.0
        %741 = vmatpush1.msra.mxu0 0.0
        %742 = vmatprep.subr.mxu0 0.0
        %743 = vmatpush1.msra.mxu0 0.0
        %744 = vmatprep.subr.mxu0 0.0
        %745 = vmatpush1.msra.mxu0 0.0
        %746 = vmatprep.subr.mxu0 0.0
        %747 = vmatpush1.msra.mxu0 %v714
        %748 = vmatprep.subr.mxu0 0.0
        %749 = vmatpush1.msra.mxu0 %v713
        %750 = vmatprep.subr.mxu0 0.0
        %751 = vmatpush1.msra.mxu0 %v712
        %752 = vmatprep.subr.mxu0 0.0
        %753 = vmatpush1.msra.mxu0 %v711
        %754 = vmatprep.subr.mxu0 0.0
        %755 = vmatpush2.msra.mxu0 0.0
        %756 = vmatprep.subr.mxu0 0.0
        %757 = vmatpush2.msra.mxu0 0.0
        %758 = vmatprep.subr.mxu0 0.0
        %759 = vmatpush2.msra.mxu0 0.0
        %760 = vmatprep.subr.mxu0 0.0
        %761 = vmatpush2.msra.mxu0 0.0
        %762 = vmatprep.subr.mxu0 0.0
        %763 = vmatpush2.msra.mxu0 0.0
        %764 = vmatprep.subr.mxu0 0.0
        %765 = vmatpush2.msra.mxu0 0.0
        %766 = vmatprep.subr.mxu0 0.0
        %767 = vmatpush2.msra.mxu0 0.0
        %768 = vmatprep.subr.mxu0 0.0
        %769 = vmatpush2.msra.mxu0 0.0
        %770 = vmatprep.subr.mxu0 0.0
        %771 = vmatpush2.msra.mxu0 0.0
        %772 = vmatprep.subr.mxu0 0.0
        %773 = vmatpush2.msra.mxu0 0.0
        %774 = vmatprep.subr.mxu0 0.0
        %775 = vmatpush2.msra.mxu0 0.0
        %776 = vmatprep.subr.mxu0 0.0
        %777 = vmatpush2.msra.mxu0 0.0
        %778 = vmatprep.subr.mxu0 0.0
        %779 = vmatpush2.msra.mxu0 0.0
        %780 = vmatprep.subr.mxu0 0.0
        %781 = vmatpush2.msra.mxu0 0.0
        %782 = vmatprep.subr.mxu0 0.0
        %783 = vmatpush2.msra.mxu0 0.0
        %784 = vmatprep.subr.mxu0 0.0
        %785 = vmatpush2.msra.mxu0 0.0
        %786 = vmatprep.mubr.f32.mxu0 0.0
        %787 = vmatmul.mubr.f32.gmra.mxu0 %v558
        %v788 = vpop.f32.mrf.mxu0
        %v789 = vadd.f32 %v720, %v788
        %v790 = vpop.f32.mrf.mxu0
        %791 = vdwg.mxu0
        %vm792 = vcmask 64512
        %v794 = vsel %vm792, %v627, 0
        %v797 = vsel %vm792, %v708, 0
        %799 = vmatprep.subr.mxu0 0.0
        %800 = vmatpush1.xpose.msra.mxu0 0.0
        %801 = vmatprep.subr.mxu0 0.0
        %802 = vmatpush1.xpose.msra.mxu0 0.0
        %803 = vmatprep.subr.mxu0 0.0
        %804 = vmatpush1.xpose.msra.mxu0 0.0
        %805 = vmatprep.subr.mxu0 0.0
        %806 = vmatpush1.xpose.msra.mxu0 0.0
        %807 = vmatprep.subr.mxu0 0.0
        %808 = vmatpush1.xpose.msra.mxu0 0.0
        %809 = vmatprep.subr.mxu0 0.0
        %810 = vmatpush1.xpose.msra.mxu0 0.0
        %811 = vmatprep.subr.mxu0 0.0
        %812 = vmatpush1.xpose.msra.mxu0 0.0
        %813 = vmatprep.subr.mxu0 0.0
        %814 = vmatpush1.xpose.msra.mxu0 0.0
        %815 = vmatprep.subr.mxu0 0.0
        %816 = vmatpush1.xpose.msra.mxu0 0.0
        %817 = vmatprep.subr.mxu0 0.0
        %818 = vmatpush1.xpose.msra.mxu0 0.0
        %819 = vmatprep.subr.mxu0 0.0
        %820 = vmatpush1.xpose.msra.mxu0 0.0
        %821 = vmatprep.subr.mxu0 0.0
        %822 = vmatpush1.xpose.msra.mxu0 0.0
        %823 = vmatprep.subr.mxu0 0.0
        %824 = vmatpush1.xpose.msra.mxu0 0.0
        %825 = vmatprep.subr.mxu0 0.0
        %826 = vmatpush1.xpose.msra.mxu0 0.0
        %827 = vmatprep.subr.mxu0 0.0
        %828 = vmatpush1.xpose.msra.mxu0 0.0
        %829 = vmatprep.subr.mxu0 0.0
        %830 = vmatpush1.xpose.msra.mxu0 %v797
        %831 = vmatprep.subr.mxu0 0.0
        %832 = vmatpush2.xpose.msra.mxu0 0.0
        %833 = vmatprep.subr.mxu0 0.0
        %834 = vmatpush2.xpose.msra.mxu0 0.0
        %835 = vmatprep.subr.mxu0 0.0
        %836 = vmatpush2.xpose.msra.mxu0 0.0
        %837 = vmatprep.subr.mxu0 0.0
        %838 = vmatpush2.xpose.msra.mxu0 0.0
        %839 = vmatprep.subr.mxu0 0.0
        %840 = vmatpush2.xpose.msra.mxu0 0.0
        %841 = vmatprep.subr.mxu0 0.0
        %842 = vmatpush2.xpose.msra.mxu0 0.0
        %843 = vmatprep.subr.mxu0 0.0
        %844 = vmatpush2.xpose.msra.mxu0 0.0
        %845 = vmatprep.subr.mxu0 0.0
        %846 = vmatpush2.xpose.msra.mxu0 0.0
        %847 = vmatprep.subr.mxu0 0.0
        %848 = vmatpush2.xpose.msra.mxu0 0.0
        %849 = vmatprep.subr.mxu0 0.0
        %850 = vmatpush2.xpose.msra.mxu0 0.0
        %851 = vmatprep.subr.mxu0 0.0
        %852 = vmatpush2.xpose.msra.mxu0 0.0
        %853 = vmatprep.subr.mxu0 0.0
        %854 = vmatpush2.xpose.msra.mxu0 0.0
        %855 = vmatprep.subr.mxu0 0.0
        %856 = vmatpush2.xpose.msra.mxu0 0.0
        %857 = vmatprep.subr.mxu0 0.0
        %858 = vmatpush2.xpose.msra.mxu0 0.0
        %859 = vmatprep.subr.mxu0 0.0
        %860 = vmatpush2.xpose.msra.mxu0 0.0
        %861 = vmatprep.subr.mxu0 0.0
        %862 = vmatpush2.xpose.msra.mxu0 0.0
        %863 = vmatprep.mubr.f32.mxu0 0.0
        %864 = vmatmul.mubr.f32.gmra.mxu0 %v794
        %v865 = vpop.f32.mrf.mxu0
        %v866 = vadd.f32 0.0, %v865
        %v867 = vpop.f32.mrf.mxu0
        %868 = vdwg.mxu0
        %v869 = vmul.f32 %v866, 0.35355338
        %v870 = vsel %vm792, %v869, -inf
        %871 = vmax.xlane.f32.xlu0 %v870
        %v872 = vpop.xlane.xlu0 %871
        %v873 = vsub.f32 %v869, %v872
        %v874 = vmul.f32 %v873, 1.442695
        %v875 = vpow.pop %v874
        %v876 = vsel %vm792, %v875, 0.0
        %877 = vadd.xlane.f32.xlu0 %v876
        %v878 = vpop.xlane.xlu0 %877
        %v879 = vrcp.pop %v878
        %v880 = vmul.f32 %v875, %v879
        %v882 = vsel %vm792, %v880, 0
        %884 = vmatprep.subr.mxu0 0.0
        %885 = vmatpush1.msra.mxu0 0.0
        %886 = vmatprep.subr.mxu0 0.0
        %887 = vmatpush1.msra.mxu0 0.0
        %888 = vmatprep.subr.mxu0 0.0
        %889 = vmatpush1.msra.mxu0 0.0
        %890 = vmatprep.subr.mxu0 0.0
        %891 = vmatpush1.msra.mxu0 0.0
        %892 = vmatprep.subr.mxu0 0.0
        %893 = vmatpush1.msra.mxu0 0.0
        %894 = vmatprep.subr.mxu0 0.0
        %895 = vmatpush1.msra.mxu0 0.0
        %896 = vmatprep.subr.mxu0 0.0
        %897 = vmatpush1.msra.mxu0 0.0
        %898 = vmatprep.subr.mxu0 0.0
        %899 = vmatpush1.msra.mxu0 0.0
        %900 = vmatprep.subr.mxu0 0.0
        %901 = vmatpush1.msra.mxu0 0.0
        %902 = vmatprep.subr.mxu0 0.0
        %903 = vmatpush1.msra.mxu0 0.0
        %904 = vmatprep.subr.mxu0 0.0
        %905 = vmatpush1.msra.mxu0 0.0
        %906 = vmatprep.subr.mxu0 0.0
        %907 = vmatpush1.msra.mxu0 0.0
        %908 = vmatprep.subr.mxu0 0.0
        %909 = vmatpush1.msra.mxu0 0.0
        %910 = vmatprep.subr.mxu0 0.0
        %911 = vmatpush1.msra.mxu0 0.0
        %912 = vmatprep.subr.mxu0 0.0
        %913 = vmatpush1.msra.mxu0 0.0
        %914 = vmatprep.subr.mxu0 0.0
        %915 = vmatpush1.msra.mxu0 %v789
        %916 = vmatprep.subr.mxu0 0.0
        %917 = vmatpush2.msra.mxu0 0.0
        %918 = vmatprep.subr.mxu0 0.0
        %919 = vmatpush2.msra.mxu0 0.0
        %920 = vmatprep.subr.mxu0 0.0
        %921 = vmatpush2.msra.mxu0 0.0
        %922 = vmatprep.subr.mxu0 0.0
        %923 = vmatpush2.msra.mxu0 0.0
        %924 = vmatprep.subr.mxu0 0.0
        %925 = vmatpush2.msra.mxu0 0.0
        %926 = vmatprep.subr.mxu0 0.0
        %927 = vmatpush2.msra.mxu0 0.0
        %928 = vmatprep.subr.mxu0 0.0
        %929 = vmatpush2.msra.mxu0 0.0
        %930 = vmatprep.subr.mxu0 0.0
        %931 = vmatpush2.msra.mxu0 0.0
        %932 = vmatprep.subr.mxu0 0.0
        %933 = vmatpush2.msra.mxu0 0.0
        %934 = vmatprep.subr.mxu0 0.0
        %935 = vmatpush2.msra.mxu0 0.0
        %936 = vmatprep.subr.mxu0 0.0
        %937 = vmatpush2.msra.mxu0 0.0
        %938 = vmatprep.subr.mxu0 0.0
        %939 = vmatpush2.msra.mxu0 0.0
        %940 = vmatprep.subr.mxu0 0.0
        %941 = vmatpush2.msra.mxu0 0.0
        %942 = vmatprep.subr.mxu0 0.0
        %943 = vmatpush2.msra.mxu0 0.0
        %944 = vmatprep.subr.mxu0 0.0
        %945 = vmatpush2.msra.mxu0 0.0
        %946 = vmatprep.subr.mxu0 0.0
        %947 = vmatpush2.msra.mxu0 0.0
        %948 = vmatprep.mubr.f32.mxu0 0.0
        %949 = vmatmul.mubr.f32.gmra.mxu0 %v882
        %v950 = vpop.f32.mrf.mxu0
        %v951 = vadd.f32 0.0, %v950
        %v952 = vpop.f32.mrf.mxu0
        %953 = vdwg.mxu0
        %v954 = vld [vmem:[%s7] sm:$0xff]
        %s955 = scalar_lea.vmem %s1, 32
        %v956 = vld [vmem:[%s955] sm:$0xff]
        %v957 = vld [vmem:[%s955 + $0x8] sm:$0xff]
        %v958 = vld [vmem:[%s955 + $0x10] sm:$0xff]
        %v959 = vld [vmem:[%s955 + $0x18] sm:$0xff]
        %s960 = scalar_lea.vmem %s2, 1
        %v961 = vld [vmem:[%s960] sm:$0x1]
        %v963 = vlaneseq
        %v964 = vshrl.u32 %v963, 7
        %v965 = vsub.s32 0, %v964
        %v966 = vrot.slane %v961, %v965
        %968 = vmatprep.subr.mxu0 0.0
        %969 = vmatpush1.msra.mxu0 0.0
        %970 = vmatprep.subr.mxu0 0.0
        %971 = vmatpush1.msra.mxu0 0.0
        %972 = vmatprep.subr.mxu0 0.0
        %973 = vmatpush1.msra.mxu0 0.0
        %974 = vmatprep.subr.mxu0 0.0
        %975 = vmatpush1.msra.mxu0 0.0
        %976 = vmatprep.subr.mxu0 0.0
        %977 = vmatpush1.msra.mxu0 0.0
        %978 = vmatprep.subr.mxu0 0.0
        %979 = vmatpush1.msra.mxu0 0.0
        %980 = vmatprep.subr.mxu0 0.0
        %981 = vmatpush1.msra.mxu0 0.0
        %982 = vmatprep.subr.mxu0 0.0
        %983 = vmatpush1.msra.mxu0 0.0
        %984 = vmatprep.subr.mxu0 0.0
        %985 = vmatpush1.msra.mxu0 0.0
        %986 = vmatprep.subr.mxu0 0.0
        %987 = vmatpush1.msra.mxu0 0.0
        %988 = vmatprep.subr.mxu0 0.0
        %989 = vmatpush1.msra.mxu0 0.0
        %990 = vmatprep.subr.mxu0 0.0
        %991 = vmatpush1.msra.mxu0 0.0
        %992 = vmatprep.subr.mxu0 0.0
        %993 = vmatpush1.msra.mxu0 %v959
        %994 = vmatprep.subr.mxu0 0.0
        %995 = vmatpush1.msra.mxu0 %v958
        %996 = vmatprep.subr.mxu0 0.0
        %997 = vmatpush1.msra.mxu0 %v957
        %998 = vmatprep.subr.mxu0 0.0
        %999 = vmatpush1.msra.mxu0 %v956
        %1000 = vmatprep.subr.mxu0 0.0
        %1001 = vmatpush2.msra.mxu0 0.0
        %1002 = vmatprep.subr.mxu0 0.0
        %1003 = vmatpush2.msra.mxu0 0.0
        %1004 = vmatprep.subr.mxu0 0.0
        %1005 = vmatpush2.msra.mxu0 0.0
        %1006 = vmatprep.subr.mxu0 0.0
        %1007 = vmatpush2.msra.mxu0 0.0
        %1008 = vmatprep.subr.mxu0 0.0
        %1009 = vmatpush2.msra.mxu0 0.0
        %1010 = vmatprep.subr.mxu0 0.0
        %1011 = vmatpush2.msra.mxu0 0.0
        %1012 = vmatprep.subr.mxu0 0.0
        %1013 = vmatpush2.msra.mxu0 0.0
        %1014 = vmatprep.subr.mxu0 0.0
        %1015 = vmatpush2.msra.mxu0 0.0
        %1016 = vmatprep.subr.mxu0 0.0
        %1017 = vmatpush2.msra.mxu0 0.0
        %1018 = vmatprep.subr.mxu0 0.0
        %1019 = vmatpush2.msra.mxu0 0.0
        %1020 = vmatprep.subr.mxu0 0.0
        %1021 = vmatpush2.msra.mxu0 0.0
        %1022 = vmatprep.subr.mxu0 0.0
        %1023 = vmatpush2.msra.mxu0 0.0
        %1024 = vmatprep.subr.mxu0 0.0
        %1025 = vmatpush2.msra.mxu0 0.0
        %1026 = vmatprep.subr.mxu0 0.0
        %1027 = vmatpush2.msra.mxu0 0.0
        %1028 = vmatprep.subr.mxu0 0.0
        %1029 = vmatpush2.msra.mxu0 0.0
        %1030 = vmatprep.subr.mxu0 0.0
        %1031 = vmatpush2.msra.mxu0 0.0
        %1032 = vmatprep.mubr.f32.mxu0 0.0
        %1033 = vmatmul.mubr.f32.gmra.mxu0 %v558
        %v1034 = vpop.f32.mrf.mxu0
        %v1035 = vadd.f32 %v966, %v1034
        %v1036 = vpop.f32.mrf.mxu0
        %1037 = vdwg.mxu0
        %s1038 = scalar_lea.vmem %s3, 32
        %v1039 = vld [vmem:[%s1038] sm:$0xff]
        %v1040 = vld [vmem:[%s1038 + $0x8] sm:$0xff]
        %v1041 = vld [vmem:[%s1038 + $0x10] sm:$0xff]
        %v1042 = vld [vmem:[%s1038 + $0x18] sm:$0xff]
        %s1043 = scalar_lea.vmem %s4, 1
        %v1044 = vld [vmem:[%s1043] sm:$0x1]
        %v1046 = vlaneseq
        %v1047 = vshrl.u32 %v1046, 7
        %v1048 = vsub.s32 0, %v1047
        %v1049 = vrot.slane %v1044, %v1048
        %1051 = vmatprep.subr.mxu0 0.0
        %1052 = vmatpush1.msra.mxu0 0.0
        %1053 = vmatprep.subr.mxu0 0.0
        %1054 = vmatpush1.msra.mxu0 0.0
        %1055 = vmatprep.subr.mxu0 0.0
        %1056 = vmatpush1.msra.mxu0 0.0
        %1057 = vmatprep.subr.mxu0 0.0
        %1058 = vmatpush1.msra.mxu0 0.0
        %1059 = vmatprep.subr.mxu0 0.0
        %1060 = vmatpush1.msra.mxu0 0.0
        %1061 = vmatprep.subr.mxu0 0.0
        %1062 = vmatpush1.msra.mxu0 0.0
        %1063 = vmatprep.subr.mxu0 0.0
        %1064 = vmatpush1.msra.mxu0 0.0
        %1065 = vmatprep.subr.mxu0 0.0
        %1066 = vmatpush1.msra.mxu0 0.0
        %1067 = vmatprep.subr.mxu0 0.0
        %1068 = vmatpush1.msra.mxu0 0.0
        %1069 = vmatprep.subr.mxu0 0.0
        %1070 = vmatpush1.msra.mxu0 0.0
        %1071 = vmatprep.subr.mxu0 0.0
        %1072 = vmatpush1.msra.mxu0 0.0
        %1073 = vmatprep.subr.mxu0 0.0
        %1074 = vmatpush1.msra.mxu0 0.0
        %1075 = vmatprep.subr.mxu0 0.0
        %1076 = vmatpush1.msra.mxu0 %v1042
        %1077 = vmatprep.subr.mxu0 0.0
        %1078 = vmatpush1.msra.mxu0 %v1041
        %1079 = vmatprep.subr.mxu0 0.0
        %1080 = vmatpush1.msra.mxu0 %v1040
        %1081 = vmatprep.subr.mxu0 0.0
        %1082 = vmatpush1.msra.mxu0 %v1039
        %1083 = vmatprep.subr.mxu0 0.0
        %1084 = vmatpush2.msra.mxu0 0.0
        %1085 = vmatprep.subr.mxu0 0.0
        %1086 = vmatpush2.msra.mxu0 0.0
        %1087 = vmatprep.subr.mxu0 0.0
        %1088 = vmatpush2.msra.mxu0 0.0
        %1089 = vmatprep.subr.mxu0 0.0
        %1090 = vmatpush2.msra.mxu0 0.0
        %1091 = vmatprep.subr.mxu0 0.0
        %1092 = vmatpush2.msra.mxu0 0.0
        %1093 = vmatprep.subr.mxu0 0.0
        %1094 = vmatpush2.msra.mxu0 0.0
        %1095 = vmatprep.subr.mxu0 0.0
        %1096 = vmatpush2.msra.mxu0 0.0
        %1097 = vmatprep.subr.mxu0 0.0
        %1098 = vmatpush2.msra.mxu0 0.0
        %1099 = vmatprep.subr.mxu0 0.0
        %1100 = vmatpush2.msra.mxu0 0.0
        %1101 = vmatprep.subr.mxu0 0.0
        %1102 = vmatpush2.msra.mxu0 0.0
        %1103 = vmatprep.subr.mxu0 0.0
        %1104 = vmatpush2.msra.mxu0 0.0
        %1105 = vmatprep.subr.mxu0 0.0
        %1106 = vmatpush2.msra.mxu0 0.0
        %1107 = vmatprep.subr.mxu0 0.0
        %1108 = vmatpush2.msra.mxu0 0.0
        %1109 = vmatprep.subr.mxu0 0.0
        %1110 = vmatpush2.msra.mxu0 0.0
        %1111 = vmatprep.subr.mxu0 0.0
        %1112 = vmatpush2.msra.mxu0 0.0
        %1113 = vmatprep.subr.mxu0 0.0
        %1114 = vmatpush2.msra.mxu0 0.0
        %1115 = vmatprep.mubr.f32.mxu0 0.0
        %1116 = vmatmul.mubr.f32.gmra.mxu0 %v558
        %v1117 = vpop.f32.mrf.mxu0
        %v1118 = vadd.f32 %v1049, %v1117
        %v1119 = vpop.f32.mrf.mxu0
        %1120 = vdwg.mxu0
        %s1121 = scalar_lea.vmem %s5, 32
        %v1122 = vld [vmem:[%s1121] sm:$0xff]
        %v1123 = vld [vmem:[%s1121 + $0x8] sm:$0xff]
        %v1124 = vld [vmem:[%s1121 + $0x10] sm:$0xff]
        %v1125 = vld [vmem:[%s1121 + $0x18] sm:$0xff]
        %s1126 = scalar_lea.vmem %s6, 1
        %v1127 = vld [vmem:[%s1126] sm:$0x1]
        %v1129 = vlaneseq
        %v1130 = vshrl.u32 %v1129, 7
        %v1131 = vsub.s32 0, %v1130
        %v1132 = vrot.slane %v1127, %v1131
        %1134 = vmatprep.subr.mxu0 0.0
        %1135 = vmatpush1.msra.mxu0 0.0
        %1136 = vmatprep.subr.mxu0 0.0
        %1137 = vmatpush1.msra.mxu0 0.0
        %1138 = vmatprep.subr.mxu0 0.0
        %1139 = vmatpush1.msra.mxu0 0.0
        %1140 = vmatprep.subr.mxu0 0.0
        %1141 = vmatpush1.msra.mxu0 0.0
        %1142 = vmatprep.subr.mxu0 0.0
        %1143 = vmatpush1.msra.mxu0 0.0
        %1144 = vmatprep.subr.mxu0 0.0
        %1145 = vmatpush1.msra.mxu0 0.0
        %1146 = vmatprep.subr.mxu0 0.0
        %1147 = vmatpush1.msra.mxu0 0.0
        %1148 = vmatprep.subr.mxu0 0.0
        %1149 = vmatpush1.msra.mxu0 0.0
        %1150 = vmatprep.subr.mxu0 0.0
        %1151 = vmatpush1.msra.mxu0 0.0
        %1152 = vmatprep.subr.mxu0 0.0
        %1153 = vmatpush1.msra.mxu0 0.0
        %1154 = vmatprep.subr.mxu0 0.0
        %1155 = vmatpush1.msra.mxu0 0.0
        %1156 = vmatprep.subr.mxu0 0.0
        %1157 = vmatpush1.msra.mxu0 0.0
        %1158 = vmatprep.subr.mxu0 0.0
        %1159 = vmatpush1.msra.mxu0 %v1125
        %1160 = vmatprep.subr.mxu0 0.0
        %1161 = vmatpush1.msra.mxu0 %v1124
        %1162 = vmatprep.subr.mxu0 0.0
        %1163 = vmatpush1.msra.mxu0 %v1123
        %1164 = vmatprep.subr.mxu0 0.0
        %1165 = vmatpush1.msra.mxu0 %v1122
        %1166 = vmatprep.subr.mxu0 0.0
        %1167 = vmatpush2.msra.mxu0 0.0
        %1168 = vmatprep.subr.mxu0 0.0
        %1169 = vmatpush2.msra.mxu0 0.0
        %1170 = vmatprep.subr.mxu0 0.0
        %1171 = vmatpush2.msra.mxu0 0.0
        %1172 = vmatprep.subr.mxu0 0.0
        %1173 = vmatpush2.msra.mxu0 0.0
        %1174 = vmatprep.subr.mxu0 0.0
        %1175 = vmatpush2.msra.mxu0 0.0
        %1176 = vmatprep.subr.mxu0 0.0
        %1177 = vmatpush2.msra.mxu0 0.0
        %1178 = vmatprep.subr.mxu0 0.0
        %1179 = vmatpush2.msra.mxu0 0.0
        %1180 = vmatprep.subr.mxu0 0.0
        %1181 = vmatpush2.msra.mxu0 0.0
        %1182 = vmatprep.subr.mxu0 0.0
        %1183 = vmatpush2.msra.mxu0 0.0
        %1184 = vmatprep.subr.mxu0 0.0
        %1185 = vmatpush2.msra.mxu0 0.0
        %1186 = vmatprep.subr.mxu0 0.0
        %1187 = vmatpush2.msra.mxu0 0.0
        %1188 = vmatprep.subr.mxu0 0.0
        %1189 = vmatpush2.msra.mxu0 0.0
        %1190 = vmatprep.subr.mxu0 0.0
        %1191 = vmatpush2.msra.mxu0 0.0
        %1192 = vmatprep.subr.mxu0 0.0
        %1193 = vmatpush2.msra.mxu0 0.0
        %1194 = vmatprep.subr.mxu0 0.0
        %1195 = vmatpush2.msra.mxu0 0.0
        %1196 = vmatprep.subr.mxu0 0.0
        %1197 = vmatpush2.msra.mxu0 0.0
        %1198 = vmatprep.mubr.f32.mxu0 0.0
        %1199 = vmatmul.mubr.f32.gmra.mxu0 %v558
        %v1200 = vpop.f32.mrf.mxu0
        %v1201 = vadd.f32 %v1132, %v1200
        %v1202 = vpop.f32.mrf.mxu0
        %1203 = vdwg.mxu0
        %v1205 = vsel %vm792, %v1035, 0
        %v1208 = vsel %vm792, %v1118, 0
        %1210 = vmatprep.subr.mxu0 0.0
        %1211 = vmatpush1.xpose.msra.mxu0 0.0
        %1212 = vmatprep.subr.mxu0 0.0
        %1213 = vmatpush1.xpose.msra.mxu0 0.0
        %1214 = vmatprep.subr.mxu0 0.0
        %1215 = vmatpush1.xpose.msra.mxu0 0.0
        %1216 = vmatprep.subr.mxu0 0.0
        %1217 = vmatpush1.xpose.msra.mxu0 0.0
        %1218 = vmatprep.subr.mxu0 0.0
        %1219 = vmatpush1.xpose.msra.mxu0 0.0
        %1220 = vmatprep.subr.mxu0 0.0
        %1221 = vmatpush1.xpose.msra.mxu0 0.0
        %1222 = vmatprep.subr.mxu0 0.0
        %1223 = vmatpush1.xpose.msra.mxu0 0.0
        %1224 = vmatprep.subr.mxu0 0.0
        %1225 = vmatpush1.xpose.msra.mxu0 0.0
        %1226 = vmatprep.subr.mxu0 0.0
        %1227 = vmatpush1.xpose.msra.mxu0 0.0
        %1228 = vmatprep.subr.mxu0 0.0
        %1229 = vmatpush1.xpose.msra.mxu0 0.0
        %1230 = vmatprep.subr.mxu0 0.0
        %1231 = vmatpush1.xpose.msra.mxu0 0.0
        %1232 = vmatprep.subr.mxu0 0.0
        %1233 = vmatpush1.xpose.msra.mxu0 0.0
        %1234 = vmatprep.subr.mxu0 0.0
        %1235 = vmatpush1.xpose.msra.mxu0 0.0
        %1236 = vmatprep.subr.mxu0 0.0
        %1237 = vmatpush1.xpose.msra.mxu0 0.0
        %1238 = vmatprep.subr.mxu0 0.0
        %1239 = vmatpush1.xpose.msra.mxu0 0.0
        %1240 = vmatprep.subr.mxu0 0.0
        %1241 = vmatpush1.xpose.msra.mxu0 %v1208
        %1242 = vmatprep.subr.mxu0 0.0
        %1243 = vmatpush2.xpose.msra.mxu0 0.0
        %1244 = vmatprep.subr.mxu0 0.0
        %1245 = vmatpush2.xpose.msra.mxu0 0.0
        %1246 = vmatprep.subr.mxu0 0.0
        %1247 = vmatpush2.xpose.msra.mxu0 0.0
        %1248 = vmatprep.subr.mxu0 0.0
        %1249 = vmatpush2.xpose.msra.mxu0 0.0
        %1250 = vmatprep.subr.mxu0 0.0
        %1251 = vmatpush2.xpose.msra.mxu0 0.0
        %1252 = vmatprep.subr.mxu0 0.0
        %1253 = vmatpush2.xpose.msra.mxu0 0.0
        %1254 = vmatprep.subr.mxu0 0.0
        %1255 = vmatpush2.xpose.msra.mxu0 0.0
        %1256 = vmatprep.subr.mxu0 0.0
        %1257 = vmatpush2.xpose.msra.mxu0 0.0
        %1258 = vmatprep.subr.mxu0 0.0
        %1259 = vmatpush2.xpose.msra.mxu0 0.0
        %1260 = vmatprep.subr.mxu0 0.0
        %1261 = vmatpush2.xpose.msra.mxu0 0.0
        %1262 = vmatprep.subr.mxu0 0.0
        %1263 = vmatpush2.xpose.msra.mxu0 0.0
        %1264 = vmatprep.subr.mxu0 0.0
        %1265 = vmatpush2.xpose.msra.mxu0 0.0
        %1266 = vmatprep.subr.mxu0 0.0
        %1267 = vmatpush2.xpose.msra.mxu0 0.0
        %1268 = vmatprep.subr.mxu0 0.0
        %1269 = vmatpush2.xpose.msra.mxu0 0.0
        %1270 = vmatprep.subr.mxu0 0.0
        %1271 = vmatpush2.xpose.msra.mxu0 0.0
        %1272 = vmatprep.subr.mxu0 0.0
        %1273 = vmatpush2.xpose.msra.mxu0 0.0
        %1274 = vmatprep.mubr.f32.mxu0 0.0
        %1275 = vmatmul.mubr.f32.gmra.mxu0 %v1205
        %v1276 = vpop.f32.mrf.mxu0
        %v1277 = vadd.f32 0.0, %v1276
        %v1278 = vpop.f32.mrf.mxu0
        %1279 = vdwg.mxu0
        %v1280 = vmul.f32 %v1277, 0.35355338
        %v1281 = vsel %vm792, %v1280, -inf
        %1282 = vmax.xlane.f32.xlu0 %v1281
        %v1283 = vpop.xlane.xlu0 %1282
        %v1284 = vsub.f32 %v1280, %v1283
        %v1285 = vmul.f32 %v1284, 1.442695
        %v1286 = vpow.pop %v1285
        %v1287 = vsel %vm792, %v1286, 0.0
        %1288 = vadd.xlane.f32.xlu0 %v1287
        %v1289 = vpop.xlane.xlu0 %1288
        %v1290 = vrcp.pop %v1289
        %v1291 = vmul.f32 %v1286, %v1290
        %v1293 = vsel %vm792, %v1291, 0
        %1295 = vmatprep.subr.mxu0 0.0
        %1296 = vmatpush1.msra.mxu0 0.0
        %1297 = vmatprep.subr.mxu0 0.0
        %1298 = vmatpush1.msra.mxu0 0.0
        %1299 = vmatprep.subr.mxu0 0.0
        %1300 = vmatpush1.msra.mxu0 0.0
        %1301 = vmatprep.subr.mxu0 0.0
        %1302 = vmatpush1.msra.mxu0 0.0
        %1303 = vmatprep.subr.mxu0 0.0
        %1304 = vmatpush1.msra.mxu0 0.0
        %1305 = vmatprep.subr.mxu0 0.0
        %1306 = vmatpush1.msra.mxu0 0.0
        %1307 = vmatprep.subr.mxu0 0.0
        %1308 = vmatpush1.msra.mxu0 0.0
        %1309 = vmatprep.subr.mxu0 0.0
        %1310 = vmatpush1.msra.mxu0 0.0
        %1311 = vmatprep.subr.mxu0 0.0
        %1312 = vmatpush1.msra.mxu0 0.0
        %1313 = vmatprep.subr.mxu0 0.0
        %1314 = vmatpush1.msra.mxu0 0.0
        %1315 = vmatprep.subr.mxu0 0.0
        %1316 = vmatpush1.msra.mxu0 0.0
        %1317 = vmatprep.subr.mxu0 0.0
        %1318 = vmatpush1.msra.mxu0 0.0
        %1319 = vmatprep.subr.mxu0 0.0
        %1320 = vmatpush1.msra.mxu0 0.0
        %1321 = vmatprep.subr.mxu0 0.0
        %1322 = vmatpush1.msra.mxu0 0.0
        %1323 = vmatprep.subr.mxu0 0.0
        %1324 = vmatpush1.msra.mxu0 0.0
        %1325 = vmatprep.subr.mxu0 0.0
        %1326 = vmatpush1.msra.mxu0 %v1201
        %1327 = vmatprep.subr.mxu0 0.0
        %1328 = vmatpush2.msra.mxu0 0.0
        %1329 = vmatprep.subr.mxu0 0.0
        %1330 = vmatpush2.msra.mxu0 0.0
        %1331 = vmatprep.subr.mxu0 0.0
        %1332 = vmatpush2.msra.mxu0 0.0
        %1333 = vmatprep.subr.mxu0 0.0
        %1334 = vmatpush2.msra.mxu0 0.0
        %1335 = vmatprep.subr.mxu0 0.0
        %1336 = vmatpush2.msra.mxu0 0.0
        %1337 = vmatprep.subr.mxu0 0.0
        %1338 = vmatpush2.msra.mxu0 0.0
        %1339 = vmatprep.subr.mxu0 0.0
        %1340 = vmatpush2.msra.mxu0 0.0
        %1341 = vmatprep.subr.mxu0 0.0
        %1342 = vmatpush2.msra.mxu0 0.0
        %1343 = vmatprep.subr.mxu0 0.0
        %1344 = vmatpush2.msra.mxu0 0.0
        %1345 = vmatprep.subr.mxu0 0.0
        %1346 = vmatpush2.msra.mxu0 0.0
        %1347 = vmatprep.subr.mxu0 0.0
        %1348 = vmatpush2.msra.mxu0 0.0
        %1349 = vmatprep.subr.mxu0 0.0
        %1350 = vmatpush2.msra.mxu0 0.0
        %1351 = vmatprep.subr.mxu0 0.0
        %1352 = vmatpush2.msra.mxu0 0.0
        %1353 = vmatprep.subr.mxu0 0.0
        %1354 = vmatpush2.msra.mxu0 0.0
        %1355 = vmatprep.subr.mxu0 0.0
        %1356 = vmatpush2.msra.mxu0 0.0
        %1357 = vmatprep.subr.mxu0 0.0
        %1358 = vmatpush2.msra.mxu0 0.0
        %1359 = vmatprep.mubr.f32.mxu0 0.0
        %1360 = vmatmul.mubr.f32.gmra.mxu0 %v1293
        %v1361 = vpop.f32.mrf.mxu0
        %v1362 = vadd.f32 0.0, %v1361
        %v1363 = vpop.f32.mrf.mxu0
        %1364 = vdwg.mxu0
        %s1365 = scalar_lea.vmem %s7, 8
        %v1366 = vld [vmem:[%s1365] sm:$0xff]
        %v1368 = vsel %vm792, %v1362, 0
        %1370 = vmatprep.subr.mxu0 0.0
        %1371 = vmatpush1.msra.mxu0 0.0
        %1372 = vmatprep.subr.mxu0 0.0
        %1373 = vmatpush1.msra.mxu0 0.0
        %1374 = vmatprep.subr.mxu0 0.0
        %1375 = vmatpush1.msra.mxu0 0.0
        %1376 = vmatprep.subr.mxu0 0.0
        %1377 = vmatpush1.msra.mxu0 0.0
        %1378 = vmatprep.subr.mxu0 0.0
        %1379 = vmatpush1.msra.mxu0 0.0
        %1380 = vmatprep.subr.mxu0 0.0
        %1381 = vmatpush1.msra.mxu0 0.0
        %1382 = vmatprep.subr.mxu0 0.0
        %1383 = vmatpush1.msra.mxu0 0.0
        %1384 = vmatprep.subr.mxu0 0.0
        %1385 = vmatpush1.msra.mxu0 0.0
        %1386 = vmatprep.subr.mxu0 0.0
        %1387 = vmatpush1.msra.mxu0 0.0
        %1388 = vmatprep.subr.mxu0 0.0
        %1389 = vmatpush1.msra.mxu0 0.0
        %1390 = vmatprep.subr.mxu0 0.0
        %1391 = vmatpush1.msra.mxu0 0.0
        %1392 = vmatprep.subr.mxu0 0.0
        %1393 = vmatpush1.msra.mxu0 0.0
        %1394 = vmatprep.subr.mxu0 0.0
        %1395 = vmatpush1.msra.mxu0 0.0
        %1396 = vmatprep.subr.mxu0 0.0
        %1397 = vmatpush1.msra.mxu0 0.0
        %1398 = vmatprep.subr.mxu0 0.0
        %1399 = vmatpush1.msra.mxu0 0.0
        %1400 = vmatprep.subr.mxu0 0.0
        %1401 = vmatpush1.msra.mxu0 %v1366
        %1402 = vmatprep.subr.mxu0 0.0
        %1403 = vmatpush2.msra.mxu0 0.0
        %1404 = vmatprep.subr.mxu0 0.0
        %1405 = vmatpush2.msra.mxu0 0.0
        %1406 = vmatprep.subr.mxu0 0.0
        %1407 = vmatpush2.msra.mxu0 0.0
        %1408 = vmatprep.subr.mxu0 0.0
        %1409 = vmatpush2.msra.mxu0 0.0
        %1410 = vmatprep.subr.mxu0 0.0
        %1411 = vmatpush2.msra.mxu0 0.0
        %1412 = vmatprep.subr.mxu0 0.0
        %1413 = vmatpush2.msra.mxu0 0.0
        %1414 = vmatprep.subr.mxu0 0.0
        %1415 = vmatpush2.msra.mxu0 0.0
        %1416 = vmatprep.subr.mxu0 0.0
        %1417 = vmatpush2.msra.mxu0 0.0
        %1418 = vmatprep.subr.mxu0 0.0
        %1419 = vmatpush2.msra.mxu0 0.0
        %1420 = vmatprep.subr.mxu0 0.0
        %1421 = vmatpush2.msra.mxu0 0.0
        %1422 = vmatprep.subr.mxu0 0.0
        %1423 = vmatpush2.msra.mxu0 0.0
        %1424 = vmatprep.subr.mxu0 0.0
        %1425 = vmatpush2.msra.mxu0 0.0
        %1426 = vmatprep.subr.mxu0 0.0
        %1427 = vmatpush2.msra.mxu0 0.0
        %1428 = vmatprep.subr.mxu0 0.0
        %1429 = vmatpush2.msra.mxu0 0.0
        %1430 = vmatprep.subr.mxu0 0.0
        %1431 = vmatpush2.msra.mxu0 0.0
        %1432 = vmatprep.subr.mxu0 0.0
        %1433 = vmatpush2.msra.mxu0 0.0
        %1434 = vmatprep.mubr.f32.mxu0 0.0
        %1435 = vmatmul.mubr.f32.gmra.mxu0 %v1368
        %v1436 = vpop.f32.mrf.mxu0
        %v1437 = vadd.f32 0.0, %v1436
        %v1438 = vpop.f32.mrf.mxu0
        %1439 = vdwg.mxu0
        %v1441 = vsel %vm792, %v951, 0
        %1443 = vmatprep.subr.mxu0 0.0
        %1444 = vmatpush1.msra.mxu0 0.0
        %1445 = vmatprep.subr.mxu0 0.0
        %1446 = vmatpush1.msra.mxu0 0.0
        %1447 = vmatprep.subr.mxu0 0.0
        %1448 = vmatpush1.msra.mxu0 0.0
        %1449 = vmatprep.subr.mxu0 0.0
        %1450 = vmatpush1.msra.mxu0 0.0
        %1451 = vmatprep.subr.mxu0 0.0
        %1452 = vmatpush1.msra.mxu0 0.0
        %1453 = vmatprep.subr.mxu0 0.0
        %1454 = vmatpush1.msra.mxu0 0.0
        %1455 = vmatprep.subr.mxu0 0.0
        %1456 = vmatpush1.msra.mxu0 0.0
        %1457 = vmatprep.subr.mxu0 0.0
        %1458 = vmatpush1.msra.mxu0 0.0
        %1459 = vmatprep.subr.mxu0 0.0
        %1460 = vmatpush1.msra.mxu0 0.0
        %1461 = vmatprep.subr.mxu0 0.0
        %1462 = vmatpush1.msra.mxu0 0.0
        %1463 = vmatprep.subr.mxu0 0.0
        %1464 = vmatpush1.msra.mxu0 0.0
        %1465 = vmatprep.subr.mxu0 0.0
        %1466 = vmatpush1.msra.mxu0 0.0
        %1467 = vmatprep.subr.mxu0 0.0
        %1468 = vmatpush1.msra.mxu0 0.0
        %1469 = vmatprep.subr.mxu0 0.0
        %1470 = vmatpush1.msra.mxu0 0.0
        %1471 = vmatprep.subr.mxu0 0.0
        %1472 = vmatpush1.msra.mxu0 0.0
        %1473 = vmatprep.subr.mxu0 0.0
        %1474 = vmatpush1.msra.mxu0 %v954
        %1475 = vmatprep.subr.mxu0 0.0
        %1476 = vmatpush2.msra.mxu0 0.0
        %1477 = vmatprep.subr.mxu0 0.0
        %1478 = vmatpush2.msra.mxu0 0.0
        %1479 = vmatprep.subr.mxu0 0.0
        %1480 = vmatpush2.msra.mxu0 0.0
        %1481 = vmatprep.subr.mxu0 0.0
        %1482 = vmatpush2.msra.mxu0 0.0
        %1483 = vmatprep.subr.mxu0 0.0
        %1484 = vmatpush2.msra.mxu0 0.0
        %1485 = vmatprep.subr.mxu0 0.0
        %1486 = vmatpush2.msra.mxu0 0.0
        %1487 = vmatprep.subr.mxu0 0.0
        %1488 = vmatpush2.msra.mxu0 0.0
        %1489 = vmatprep.subr.mxu0 0.0
        %1490 = vmatpush2.msra.mxu0 0.0
        %1491 = vmatprep.subr.mxu0 0.0
        %1492 = vmatpush2.msra.mxu0 0.0
        %1493 = vmatprep.subr.mxu0 0.0
        %1494 = vmatpush2.msra.mxu0 0.0
        %1495 = vmatprep.subr.mxu0 0.0
        %1496 = vmatpush2.msra.mxu0 0.0
        %1497 = vmatprep.subr.mxu0 0.0
        %1498 = vmatpush2.msra.mxu0 0.0
        %1499 = vmatprep.subr.mxu0 0.0
        %1500 = vmatpush2.msra.mxu0 0.0
        %1501 = vmatprep.subr.mxu0 0.0
        %1502 = vmatpush2.msra.mxu0 0.0
        %1503 = vmatprep.subr.mxu0 0.0
        %1504 = vmatpush2.msra.mxu0 0.0
        %1505 = vmatprep.subr.mxu0 0.0
        %1506 = vmatpush2.msra.mxu0 0.0
        %1507 = vmatprep.mubr.f32.mxu0 0.0
        %1508 = vmatmul.mubr.f32.gmra.mxu0 %v1441
        %v1509 = vpop.f32.mrf.mxu0
        %v1510 = vadd.f32 %v1437, %v1509
        %v1511 = vpop.f32.mrf.mxu0
        %1512 = vdwg.mxu0
        %s1513 = scalar_lea.vmem %s1, 64
        %v1514 = vld [vmem:[%s1513] sm:$0xff]
        %v1515 = vld [vmem:[%s1513 + $0x8] sm:$0xff]
        %v1516 = vld [vmem:[%s1513 + $0x10] sm:$0xff]
        %v1517 = vld [vmem:[%s1513 + $0x18] sm:$0xff]
        %s1518 = scalar_lea.vmem %s2, 2
        %v1519 = vld [vmem:[%s1518] sm:$0x1]
        %v1521 = vlaneseq
        %v1522 = vshrl.u32 %v1521, 7
        %v1523 = vsub.s32 0, %v1522
        %v1524 = vrot.slane %v1519, %v1523
        %1526 = vmatprep.subr.mxu0 0.0
        %1527 = vmatpush1.msra.mxu0 0.0
        %1528 = vmatprep.subr.mxu0 0.0
        %1529 = vmatpush1.msra.mxu0 0.0
        %1530 = vmatprep.subr.mxu0 0.0
        %1531 = vmatpush1.msra.mxu0 0.0
        %1532 = vmatprep.subr.mxu0 0.0
        %1533 = vmatpush1.msra.mxu0 0.0
        %1534 = vmatprep.subr.mxu0 0.0
        %1535 = vmatpush1.msra.mxu0 0.0
        %1536 = vmatprep.subr.mxu0 0.0
        %1537 = vmatpush1.msra.mxu0 0.0
        %1538 = vmatprep.subr.mxu0 0.0
        %1539 = vmatpush1.msra.mxu0 0.0
        %1540 = vmatprep.subr.mxu0 0.0
        %1541 = vmatpush1.msra.mxu0 0.0
        %1542 = vmatprep.subr.mxu0 0.0
        %1543 = vmatpush1.msra.mxu0 0.0
        %1544 = vmatprep.subr.mxu0 0.0
        %1545 = vmatpush1.msra.mxu0 0.0
        %1546 = vmatprep.subr.mxu0 0.0
        %1547 = vmatpush1.msra.mxu0 0.0
        %1548 = vmatprep.subr.mxu0 0.0
        %1549 = vmatpush1.msra.mxu0 0.0
        %1550 = vmatprep.subr.mxu0 0.0
        %1551 = vmatpush1.msra.mxu0 %v1517
        %1552 = vmatprep.subr.mxu0 0.0
        %1553 = vmatpush1.msra.mxu0 %v1516
        %1554 = vmatprep.subr.mxu0 0.0
        %1555 = vmatpush1.msra.mxu0 %v1515
        %1556 = vmatprep.subr.mxu0 0.0
        %1557 = vmatpush1.msra.mxu0 %v1514
        %1558 = vmatprep.subr.mxu0 0.0
        %1559 = vmatpush2.msra.mxu0 0.0
        %1560 = vmatprep.subr.mxu0 0.0
        %1561 = vmatpush2.msra.mxu0 0.0
        %1562 = vmatprep.subr.mxu0 0.0
        %1563 = vmatpush2.msra.mxu0 0.0
        %1564 = vmatprep.subr.mxu0 0.0
        %1565 = vmatpush2.msra.mxu0 0.0
        %1566 = vmatprep.subr.mxu0 0.0
        %1567 = vmatpush2.msra.mxu0 0.0
        %1568 = vmatprep.subr.mxu0 0.0
        %1569 = vmatpush2.msra.mxu0 0.0
        %1570 = vmatprep.subr.mxu0 0.0
        %1571 = vmatpush2.msra.mxu0 0.0
        %1572 = vmatprep.subr.mxu0 0.0
        %1573 = vmatpush2.msra.mxu0 0.0
        %1574 = vmatprep.subr.mxu0 0.0
        %1575 = vmatpush2.msra.mxu0 0.0
        %1576 = vmatprep.subr.mxu0 0.0
        %1577 = vmatpush2.msra.mxu0 0.0
        %1578 = vmatprep.subr.mxu0 0.0
        %1579 = vmatpush2.msra.mxu0 0.0
        %1580 = vmatprep.subr.mxu0 0.0
        %1581 = vmatpush2.msra.mxu0 0.0
        %1582 = vmatprep.subr.mxu0 0.0
        %1583 = vmatpush2.msra.mxu0 0.0
        %1584 = vmatprep.subr.mxu0 0.0
        %1585 = vmatpush2.msra.mxu0 0.0
        %1586 = vmatprep.subr.mxu0 0.0
        %1587 = vmatpush2.msra.mxu0 0.0
        %1588 = vmatprep.subr.mxu0 0.0
        %1589 = vmatpush2.msra.mxu0 0.0
        %1590 = vmatprep.mubr.f32.mxu0 0.0
        %1591 = vmatmul.mubr.f32.gmra.mxu0 %v558
        %v1592 = vpop.f32.mrf.mxu0
        %v1593 = vadd.f32 %v1524, %v1592
        %v1594 = vpop.f32.mrf.mxu0
        %1595 = vdwg.mxu0
        %s1596 = scalar_lea.vmem %s3, 64
        %v1597 = vld [vmem:[%s1596] sm:$0xff]
        %v1598 = vld [vmem:[%s1596 + $0x8] sm:$0xff]
        %v1599 = vld [vmem:[%s1596 + $0x10] sm:$0xff]
        %v1600 = vld [vmem:[%s1596 + $0x18] sm:$0xff]
        %s1601 = scalar_lea.vmem %s4, 2
        %v1602 = vld [vmem:[%s1601] sm:$0x1]
        %v1604 = vlaneseq
        %v1605 = vshrl.u32 %v1604, 7
        %v1606 = vsub.s32 0, %v1605
        %v1607 = vrot.slane %v1602, %v1606
        %1609 = vmatprep.subr.mxu0 0.0
        %1610 = vmatpush1.msra.mxu0 0.0
        %1611 = vmatprep.subr.mxu0 0.0
        %1612 = vmatpush1.msra.mxu0 0.0
        %1613 = vmatprep.subr.mxu0 0.0
        %1614 = vmatpush1.msra.mxu0 0.0
        %1615 = vmatprep.subr.mxu0 0.0
        %1616 = vmatpush1.msra.mxu0 0.0
        %1617 = vmatprep.subr.mxu0 0.0
        %1618 = vmatpush1.msra.mxu0 0.0
        %1619 = vmatprep.subr.mxu0 0.0
        %1620 = vmatpush1.msra.mxu0 0.0
        %1621 = vmatprep.subr.mxu0 0.0
        %1622 = vmatpush1.msra.mxu0 0.0
        %1623 = vmatprep.subr.mxu0 0.0
        %1624 = vmatpush1.msra.mxu0 0.0
        %1625 = vmatprep.subr.mxu0 0.0
        %1626 = vmatpush1.msra.mxu0 0.0
        %1627 = vmatprep.subr.mxu0 0.0
        %1628 = vmatpush1.msra.mxu0 0.0
        %1629 = vmatprep.subr.mxu0 0.0
        %1630 = vmatpush1.msra.mxu0 0.0
        %1631 = vmatprep.subr.mxu0 0.0
        %1632 = vmatpush1.msra.mxu0 0.0
        %1633 = vmatprep.subr.mxu0 0.0
        %1634 = vmatpush1.msra.mxu0 %v1600
        %1635 = vmatprep.subr.mxu0 0.0
        %1636 = vmatpush1.msra.mxu0 %v1599
        %1637 = vmatprep.subr.mxu0 0.0
        %1638 = vmatpush1.msra.mxu0 %v1598
        %1639 = vmatprep.subr.mxu0 0.0
        %1640 = vmatpush1.msra.mxu0 %v1597
        %1641 = vmatprep.subr.mxu0 0.0
        %1642 = vmatpush2.msra.mxu0 0.0
        %1643 = vmatprep.subr.mxu0 0.0
        %1644 = vmatpush2.msra.mxu0 0.0
        %1645 = vmatprep.subr.mxu0 0.0
        %1646 = vmatpush2.msra.mxu0 0.0
        %1647 = vmatprep.subr.mxu0 0.0
        %1648 = vmatpush2.msra.mxu0 0.0
        %1649 = vmatprep.subr.mxu0 0.0
        %1650 = vmatpush2.msra.mxu0 0.0
        %1651 = vmatprep.subr.mxu0 0.0
        %1652 = vmatpush2.msra.mxu0 0.0
        %1653 = vmatprep.subr.mxu0 0.0
        %1654 = vmatpush2.msra.mxu0 0.0
        %1655 = vmatprep.subr.mxu0 0.0
        %1656 = vmatpush2.msra.mxu0 0.0
        %1657 = vmatprep.subr.mxu0 0.0
        %1658 = vmatpush2.msra.mxu0 0.0
        %1659 = vmatprep.subr.mxu0 0.0
        %1660 = vmatpush2.msra.mxu0 0.0
        %1661 = vmatprep.subr.mxu0 0.0
        %1662 = vmatpush2.msra.mxu0 0.0
        %1663 = vmatprep.subr.mxu0 0.0
        %1664 = vmatpush2.msra.mxu0 0.0
        %1665 = vmatprep.subr.mxu0 0.0
        %1666 = vmatpush2.msra.mxu0 0.0
        %1667 = vmatprep.subr.mxu0 0.0
        %1668 = vmatpush2.msra.mxu0 0.0
        %1669 = vmatprep.subr.mxu0 0.0
        %1670 = vmatpush2.msra.mxu0 0.0
        %1671 = vmatprep.subr.mxu0 0.0
        %1672 = vmatpush2.msra.mxu0 0.0
        %1673 = vmatprep.mubr.f32.mxu0 0.0
        %1674 = vmatmul.mubr.f32.gmra.mxu0 %v558
        %v1675 = vpop.f32.mrf.mxu0
        %v1676 = vadd.f32 %v1607, %v1675
        %v1677 = vpop.f32.mrf.mxu0
        %1678 = vdwg.mxu0
        %s1679 = scalar_lea.vmem %s5, 64
        %v1680 = vld [vmem:[%s1679] sm:$0xff]
        %v1681 = vld [vmem:[%s1679 + $0x8] sm:$0xff]
        %v1682 = vld [vmem:[%s1679 + $0x10] sm:$0xff]
        %v1683 = vld [vmem:[%s1679 + $0x18] sm:$0xff]
        %s1684 = scalar_lea.vmem %s6, 2
        %v1685 = vld [vmem:[%s1684] sm:$0x1]
        %v1687 = vlaneseq
        %v1688 = vshrl.u32 %v1687, 7
        %v1689 = vsub.s32 0, %v1688
        %v1690 = vrot.slane %v1685, %v1689
        %1692 = vmatprep.subr.mxu0 0.0
        %1693 = vmatpush1.msra.mxu0 0.0
        %1694 = vmatprep.subr.mxu0 0.0
        %1695 = vmatpush1.msra.mxu0 0.0
        %1696 = vmatprep.subr.mxu0 0.0
        %1697 = vmatpush1.msra.mxu0 0.0
        %1698 = vmatprep.subr.mxu0 0.0
        %1699 = vmatpush1.msra.mxu0 0.0
        %1700 = vmatprep.subr.mxu0 0.0
        %1701 = vmatpush1.msra.mxu0 0.0
        %1702 = vmatprep.subr.mxu0 0.0
        %1703 = vmatpush1.msra.mxu0 0.0
        %1704 = vmatprep.subr.mxu0 0.0
        %1705 = vmatpush1.msra.mxu0 0.0
        %1706 = vmatprep.subr.mxu0 0.0
        %1707 = vmatpush1.msra.mxu0 0.0
        %1708 = vmatprep.subr.mxu0 0.0
        %1709 = vmatpush1.msra.mxu0 0.0
        %1710 = vmatprep.subr.mxu0 0.0
        %1711 = vmatpush1.msra.mxu0 0.0
        %1712 = vmatprep.subr.mxu0 0.0
        %1713 = vmatpush1.msra.mxu0 0.0
        %1714 = vmatprep.subr.mxu0 0.0
        %1715 = vmatpush1.msra.mxu0 0.0
        %1716 = vmatprep.subr.mxu0 0.0
        %1717 = vmatpush1.msra.mxu0 %v1683
        %1718 = vmatprep.subr.mxu0 0.0
        %1719 = vmatpush1.msra.mxu0 %v1682
        %1720 = vmatprep.subr.mxu0 0.0
        %1721 = vmatpush1.msra.mxu0 %v1681
        %1722 = vmatprep.subr.mxu0 0.0
        %1723 = vmatpush1.msra.mxu0 %v1680
        %1724 = vmatprep.subr.mxu0 0.0
        %1725 = vmatpush2.msra.mxu0 0.0
        %1726 = vmatprep.subr.mxu0 0.0
        %1727 = vmatpush2.msra.mxu0 0.0
        %1728 = vmatprep.subr.mxu0 0.0
        %1729 = vmatpush2.msra.mxu0 0.0
        %1730 = vmatprep.subr.mxu0 0.0
        %1731 = vmatpush2.msra.mxu0 0.0
        %1732 = vmatprep.subr.mxu0 0.0
        %1733 = vmatpush2.msra.mxu0 0.0
        %1734 = vmatprep.subr.mxu0 0.0
        %1735 = vmatpush2.msra.mxu0 0.0
        %1736 = vmatprep.subr.mxu0 0.0
        %1737 = vmatpush2.msra.mxu0 0.0
        %1738 = vmatprep.subr.mxu0 0.0
        %1739 = vmatpush2.msra.mxu0 0.0
        %1740 = vmatprep.subr.mxu0 0.0
        %1741 = vmatpush2.msra.mxu0 0.0
        %1742 = vmatprep.subr.mxu0 0.0
        %1743 = vmatpush2.msra.mxu0 0.0
        %1744 = vmatprep.subr.mxu0 0.0
        %1745 = vmatpush2.msra.mxu0 0.0
        %1746 = vmatprep.subr.mxu0 0.0
        %1747 = vmatpush2.msra.mxu0 0.0
        %1748 = vmatprep.subr.mxu0 0.0
        %1749 = vmatpush2.msra.mxu0 0.0
        %1750 = vmatprep.subr.mxu0 0.0
        %1751 = vmatpush2.msra.mxu0 0.0
        %1752 = vmatprep.subr.mxu0 0.0
        %1753 = vmatpush2.msra.mxu0 0.0
        %1754 = vmatprep.subr.mxu0 0.0
        %1755 = vmatpush2.msra.mxu0 0.0
        %1756 = vmatprep.mubr.f32.mxu0 0.0
        %1757 = vmatmul.mubr.f32.gmra.mxu0 %v558
        %v1758 = vpop.f32.mrf.mxu0
        %v1759 = vadd.f32 %v1690, %v1758
        %v1760 = vpop.f32.mrf.mxu0
        %1761 = vdwg.mxu0
        %v1763 = vsel %vm792, %v1593, 0
        %v1766 = vsel %vm792, %v1676, 0
        %1768 = vmatprep.subr.mxu0 0.0
        %1769 = vmatpush1.xpose.msra.mxu0 0.0
        %1770 = vmatprep.subr.mxu0 0.0
        %1771 = vmatpush1.xpose.msra.mxu0 0.0
        %1772 = vmatprep.subr.mxu0 0.0
        %1773 = vmatpush1.xpose.msra.mxu0 0.0
        %1774 = vmatprep.subr.mxu0 0.0
        %1775 = vmatpush1.xpose.msra.mxu0 0.0
        %1776 = vmatprep.subr.mxu0 0.0
        %1777 = vmatpush1.xpose.msra.mxu0 0.0
        %1778 = vmatprep.subr.mxu0 0.0
        %1779 = vmatpush1.xpose.msra.mxu0 0.0
        %1780 = vmatprep.subr.mxu0 0.0
        %1781 = vmatpush1.xpose.msra.mxu0 0.0
        %1782 = vmatprep.subr.mxu0 0.0
        %1783 = vmatpush1.xpose.msra.mxu0 0.0
        %1784 = vmatprep.subr.mxu0 0.0
        %1785 = vmatpush1.xpose.msra.mxu0 0.0
        %1786 = vmatprep.subr.mxu0 0.0
        %1787 = vmatpush1.xpose.msra.mxu0 0.0
        %1788 = vmatprep.subr.mxu0 0.0
        %1789 = vmatpush1.xpose.msra.mxu0 0.0
        %1790 = vmatprep.subr.mxu0 0.0
        %1791 = vmatpush1.xpose.msra.mxu0 0.0
        %1792 = vmatprep.subr.mxu0 0.0
        %1793 = vmatpush1.xpose.msra.mxu0 0.0
        %1794 = vmatprep.subr.mxu0 0.0
        %1795 = vmatpush1.xpose.msra.mxu0 0.0
        %1796 = vmatprep.subr.mxu0 0.0
        %1797 = vmatpush1.xpose.msra.mxu0 0.0
        %1798 = vmatprep.subr.mxu0 0.0
        %1799 = vmatpush1.xpose.msra.mxu0 %v1766
        %1800 = vmatprep.subr.mxu0 0.0
        %1801 = vmatpush2.xpose.msra.mxu0 0.0
        %1802 = vmatprep.subr.mxu0 0.0
        %1803 = vmatpush2.xpose.msra.mxu0 0.0
        %1804 = vmatprep.subr.mxu0 0.0
        %1805 = vmatpush2.xpose.msra.mxu0 0.0
        %1806 = vmatprep.subr.mxu0 0.0
        %1807 = vmatpush2.xpose.msra.mxu0 0.0
        %1808 = vmatprep.subr.mxu0 0.0
        %1809 = vmatpush2.xpose.msra.mxu0 0.0
        %1810 = vmatprep.subr.mxu0 0.0
        %1811 = vmatpush2.xpose.msra.mxu0 0.0
        %1812 = vmatprep.subr.mxu0 0.0
        %1813 = vmatpush2.xpose.msra.mxu0 0.0
        %1814 = vmatprep.subr.mxu0 0.0
        %1815 = vmatpush2.xpose.msra.mxu0 0.0
        %1816 = vmatprep.subr.mxu0 0.0
        %1817 = vmatpush2.xpose.msra.mxu0 0.0
        %1818 = vmatprep.subr.mxu0 0.0
        %1819 = vmatpush2.xpose.msra.mxu0 0.0
        %1820 = vmatprep.subr.mxu0 0.0
        %1821 = vmatpush2.xpose.msra.mxu0 0.0
        %1822 = vmatprep.subr.mxu0 0.0
        %1823 = vmatpush2.xpose.msra.mxu0 0.0
        %1824 = vmatprep.subr.mxu0 0.0
        %1825 = vmatpush2.xpose.msra.mxu0 0.0
        %1826 = vmatprep.subr.mxu0 0.0
        %1827 = vmatpush2.xpose.msra.mxu0 0.0
        %1828 = vmatprep.subr.mxu0 0.0
        %1829 = vmatpush2.xpose.msra.mxu0 0.0
        %1830 = vmatprep.subr.mxu0 0.0
        %1831 = vmatpush2.xpose.msra.mxu0 0.0
        %1832 = vmatprep.mubr.f32.mxu0 0.0
        %1833 = vmatmul.mubr.f32.gmra.mxu0 %v1763
        %v1834 = vpop.f32.mrf.mxu0
        %v1835 = vadd.f32 0.0, %v1834
        %v1836 = vpop.f32.mrf.mxu0
        %1837 = vdwg.mxu0
        %v1838 = vmul.f32 %v1835, 0.35355338
        %v1839 = vsel %vm792, %v1838, -inf
        %1840 = vmax.xlane.f32.xlu0 %v1839
        %v1841 = vpop.xlane.xlu0 %1840
        %v1842 = vsub.f32 %v1838, %v1841
        %v1843 = vmul.f32 %v1842, 1.442695
        %v1844 = vpow.pop %v1843
        %v1845 = vsel %vm792, %v1844, 0.0
        %1846 = vadd.xlane.f32.xlu0 %v1845
        %v1847 = vpop.xlane.xlu0 %1846
        %v1848 = vrcp.pop %v1847
        %v1849 = vmul.f32 %v1844, %v1848
        %v1851 = vsel %vm792, %v1849, 0
        %1853 = vmatprep.subr.mxu0 0.0
        %1854 = vmatpush1.msra.mxu0 0.0
        %1855 = vmatprep.subr.mxu0 0.0
        %1856 = vmatpush1.msra.mxu0 0.0
        %1857 = vmatprep.subr.mxu0 0.0
        %1858 = vmatpush1.msra.mxu0 0.0
        %1859 = vmatprep.subr.mxu0 0.0
        %1860 = vmatpush1.msra.mxu0 0.0
        %1861 = vmatprep.subr.mxu0 0.0
        %1862 = vmatpush1.msra.mxu0 0.0
        %1863 = vmatprep.subr.mxu0 0.0
        %1864 = vmatpush1.msra.mxu0 0.0
        %1865 = vmatprep.subr.mxu0 0.0
        %1866 = vmatpush1.msra.mxu0 0.0
        %1867 = vmatprep.subr.mxu0 0.0
        %1868 = vmatpush1.msra.mxu0 0.0
        %1869 = vmatprep.subr.mxu0 0.0
        %1870 = vmatpush1.msra.mxu0 0.0
        %1871 = vmatprep.subr.mxu0 0.0
        %1872 = vmatpush1.msra.mxu0 0.0
        %1873 = vmatprep.subr.mxu0 0.0
        %1874 = vmatpush1.msra.mxu0 0.0
        %1875 = vmatprep.subr.mxu0 0.0
        %1876 = vmatpush1.msra.mxu0 0.0
        %1877 = vmatprep.subr.mxu0 0.0
        %1878 = vmatpush1.msra.mxu0 0.0
        %1879 = vmatprep.subr.mxu0 0.0
        %1880 = vmatpush1.msra.mxu0 0.0
        %1881 = vmatprep.subr.mxu0 0.0
        %1882 = vmatpush1.msra.mxu0 0.0
        %1883 = vmatprep.subr.mxu0 0.0
        %1884 = vmatpush1.msra.mxu0 %v1759
        %1885 = vmatprep.subr.mxu0 0.0
        %1886 = vmatpush2.msra.mxu0 0.0
        %1887 = vmatprep.subr.mxu0 0.0
        %1888 = vmatpush2.msra.mxu0 0.0
        %1889 = vmatprep.subr.mxu0 0.0
        %1890 = vmatpush2.msra.mxu0 0.0
        %1891 = vmatprep.subr.mxu0 0.0
        %1892 = vmatpush2.msra.mxu0 0.0
        %1893 = vmatprep.subr.mxu0 0.0
        %1894 = vmatpush2.msra.mxu0 0.0
        %1895 = vmatprep.subr.mxu0 0.0
        %1896 = vmatpush2.msra.mxu0 0.0
        %1897 = vmatprep.subr.mxu0 0.0
        %1898 = vmatpush2.msra.mxu0 0.0
        %1899 = vmatprep.subr.mxu0 0.0
        %1900 = vmatpush2.msra.mxu0 0.0
        %1901 = vmatprep.subr.mxu0 0.0
        %1902 = vmatpush2.msra.mxu0 0.0
        %1903 = vmatprep.subr.mxu0 0.0
        %1904 = vmatpush2.msra.mxu0 0.0
        %1905 = vmatprep.subr.mxu0 0.0
        %1906 = vmatpush2.msra.mxu0 0.0
        %1907 = vmatprep.subr.mxu0 0.0
        %1908 = vmatpush2.msra.mxu0 0.0
        %1909 = vmatprep.subr.mxu0 0.0
        %1910 = vmatpush2.msra.mxu0 0.0
        %1911 = vmatprep.subr.mxu0 0.0
        %1912 = vmatpush2.msra.mxu0 0.0
        %1913 = vmatprep.subr.mxu0 0.0
        %1914 = vmatpush2.msra.mxu0 0.0
        %1915 = vmatprep.subr.mxu0 0.0
        %1916 = vmatpush2.msra.mxu0 0.0
        %1917 = vmatprep.mubr.f32.mxu0 0.0
        %1918 = vmatmul.mubr.f32.gmra.mxu0 %v1851
        %v1919 = vpop.f32.mrf.mxu0
        %v1920 = vadd.f32 0.0, %v1919
        %v1921 = vpop.f32.mrf.mxu0
        %1922 = vdwg.mxu0
        %s1923 = scalar_lea.vmem %s7, 16
        %v1924 = vld [vmem:[%s1923] sm:$0xff]
        %v1926 = vsel %vm792, %v1920, 0
        %1928 = vmatprep.subr.mxu0 0.0
        %1929 = vmatpush1.msra.mxu0 0.0
        %1930 = vmatprep.subr.mxu0 0.0
        %1931 = vmatpush1.msra.mxu0 0.0
        %1932 = vmatprep.subr.mxu0 0.0
        %1933 = vmatpush1.msra.mxu0 0.0
        %1934 = vmatprep.subr.mxu0 0.0
        %1935 = vmatpush1.msra.mxu0 0.0
        %1936 = vmatprep.subr.mxu0 0.0
        %1937 = vmatpush1.msra.mxu0 0.0
        %1938 = vmatprep.subr.mxu0 0.0
        %1939 = vmatpush1.msra.mxu0 0.0
        %1940 = vmatprep.subr.mxu0 0.0
        %1941 = vmatpush1.msra.mxu0 0.0
        %1942 = vmatprep.subr.mxu0 0.0
        %1943 = vmatpush1.msra.mxu0 0.0
        %1944 = vmatprep.subr.mxu0 0.0
        %1945 = vmatpush1.msra.mxu0 0.0
        %1946 = vmatprep.subr.mxu0 0.0
        %1947 = vmatpush1.msra.mxu0 0.0
        %1948 = vmatprep.subr.mxu0 0.0
        %1949 = vmatpush1.msra.mxu0 0.0
        %1950 = vmatprep.subr.mxu0 0.0
        %1951 = vmatpush1.msra.mxu0 0.0
        %1952 = vmatprep.subr.mxu0 0.0
        %1953 = vmatpush1.msra.mxu0 0.0
        %1954 = vmatprep.subr.mxu0 0.0
        %1955 = vmatpush1.msra.mxu0 0.0
        %1956 = vmatprep.subr.mxu0 0.0
        %1957 = vmatpush1.msra.mxu0 0.0
        %1958 = vmatprep.subr.mxu0 0.0
        %1959 = vmatpush1.msra.mxu0 %v1924
        %1960 = vmatprep.subr.mxu0 0.0
        %1961 = vmatpush2.msra.mxu0 0.0
        %1962 = vmatprep.subr.mxu0 0.0
        %1963 = vmatpush2.msra.mxu0 0.0
        %1964 = vmatprep.subr.mxu0 0.0
        %1965 = vmatpush2.msra.mxu0 0.0
        %1966 = vmatprep.subr.mxu0 0.0
        %1967 = vmatpush2.msra.mxu0 0.0
        %1968 = vmatprep.subr.mxu0 0.0
        %1969 = vmatpush2.msra.mxu0 0.0
        %1970 = vmatprep.subr.mxu0 0.0
        %1971 = vmatpush2.msra.mxu0 0.0
        %1972 = vmatprep.subr.mxu0 0.0
        %1973 = vmatpush2.msra.mxu0 0.0
        %1974 = vmatprep.subr.mxu0 0.0
        %1975 = vmatpush2.msra.mxu0 0.0
        %1976 = vmatprep.subr.mxu0 0.0
        %1977 = vmatpush2.msra.mxu0 0.0
        %1978 = vmatprep.subr.mxu0 0.0
        %1979 = vmatpush2.msra.mxu0 0.0
        %1980 = vmatprep.subr.mxu0 0.0
        %1981 = vmatpush2.msra.mxu0 0.0
        %1982 = vmatprep.subr.mxu0 0.0
        %1983 = vmatpush2.msra.mxu0 0.0
        %1984 = vmatprep.subr.mxu0 0.0
        %1985 = vmatpush2.msra.mxu0 0.0
        %1986 = vmatprep.subr.mxu0 0.0
        %1987 = vmatpush2.msra.mxu0 0.0
        %1988 = vmatprep.subr.mxu0 0.0
        %1989 = vmatpush2.msra.mxu0 0.0
        %1990 = vmatprep.subr.mxu0 0.0
        %1991 = vmatpush2.msra.mxu0 0.0
        %1992 = vmatprep.mubr.f32.mxu0 0.0
        %1993 = vmatmul.mubr.f32.gmra.mxu0 %v1926
        %v1994 = vpop.f32.mrf.mxu0
        %v1995 = vadd.f32 0.0, %v1994
        %v1996 = vpop.f32.mrf.mxu0
        %1997 = vdwg.mxu0
        %v1998 = vadd.f32 %v1510, %v1995
        %s1999 = scalar_lea.vmem %s1, 96
        %v2000 = vld [vmem:[%s1999] sm:$0xff]
        %v2001 = vld [vmem:[%s1999 + $0x8] sm:$0xff]
        %v2002 = vld [vmem:[%s1999 + $0x10] sm:$0xff]
        %v2003 = vld [vmem:[%s1999 + $0x18] sm:$0xff]
        %s2004 = scalar_lea.vmem %s2, 3
        %v2005 = vld [vmem:[%s2004] sm:$0x1]
        %v2007 = vlaneseq
        %v2008 = vshrl.u32 %v2007, 7
        %v2009 = vsub.s32 0, %v2008
        %v2010 = vrot.slane %v2005, %v2009
        %2012 = vmatprep.subr.mxu0 0.0
        %2013 = vmatpush1.msra.mxu0 0.0
        %2014 = vmatprep.subr.mxu0 0.0
        %2015 = vmatpush1.msra.mxu0 0.0
        %2016 = vmatprep.subr.mxu0 0.0
        %2017 = vmatpush1.msra.mxu0 0.0
        %2018 = vmatprep.subr.mxu0 0.0
        %2019 = vmatpush1.msra.mxu0 0.0
        %2020 = vmatprep.subr.mxu0 0.0
        %2021 = vmatpush1.msra.mxu0 0.0
        %2022 = vmatprep.subr.mxu0 0.0
        %2023 = vmatpush1.msra.mxu0 0.0
        %2024 = vmatprep.subr.mxu0 0.0
        %2025 = vmatpush1.msra.mxu0 0.0
        %2026 = vmatprep.subr.mxu0 0.0
        %2027 = vmatpush1.msra.mxu0 0.0
        %2028 = vmatprep.subr.mxu0 0.0
        %2029 = vmatpush1.msra.mxu0 0.0
        %2030 = vmatprep.subr.mxu0 0.0
        %2031 = vmatpush1.msra.mxu0 0.0
        %2032 = vmatprep.subr.mxu0 0.0
        %2033 = vmatpush1.msra.mxu0 0.0
        %2034 = vmatprep.subr.mxu0 0.0
        %2035 = vmatpush1.msra.mxu0 0.0
        %2036 = vmatprep.subr.mxu0 0.0
        %2037 = vmatpush1.msra.mxu0 %v2003
        %2038 = vmatprep.subr.mxu0 0.0
        %2039 = vmatpush1.msra.mxu0 %v2002
        %2040 = vmatprep.subr.mxu0 0.0
        %2041 = vmatpush1.msra.mxu0 %v2001
        %2042 = vmatprep.subr.mxu0 0.0
        %2043 = vmatpush1.msra.mxu0 %v2000
        %2044 = vmatprep.subr.mxu0 0.0
        %2045 = vmatpush2.msra.mxu0 0.0
        %2046 = vmatprep.subr.mxu0 0.0
        %2047 = vmatpush2.msra.mxu0 0.0
        %2048 = vmatprep.subr.mxu0 0.0
        %2049 = vmatpush2.msra.mxu0 0.0
        %2050 = vmatprep.subr.mxu0 0.0
        %2051 = vmatpush2.msra.mxu0 0.0
        %2052 = vmatprep.subr.mxu0 0.0
        %2053 = vmatpush2.msra.mxu0 0.0
        %2054 = vmatprep.subr.mxu0 0.0
        %2055 = vmatpush2.msra.mxu0 0.0
        %2056 = vmatprep.subr.mxu0 0.0
        %2057 = vmatpush2.msra.mxu0 0.0
        %2058 = vmatprep.subr.mxu0 0.0
        %2059 = vmatpush2.msra.mxu0 0.0
        %2060 = vmatprep.subr.mxu0 0.0
        %2061 = vmatpush2.msra.mxu0 0.0
        %2062 = vmatprep.subr.mxu0 0.0
        %2063 = vmatpush2.msra.mxu0 0.0
        %2064 = vmatprep.subr.mxu0 0.0
        %2065 = vmatpush2.msra.mxu0 0.0
        %2066 = vmatprep.subr.mxu0 0.0
        %2067 = vmatpush2.msra.mxu0 0.0
        %2068 = vmatprep.subr.mxu0 0.0
        %2069 = vmatpush2.msra.mxu0 0.0
        %2070 = vmatprep.subr.mxu0 0.0
        %2071 = vmatpush2.msra.mxu0 0.0
        %2072 = vmatprep.subr.mxu0 0.0
        %2073 = vmatpush2.msra.mxu0 0.0
        %2074 = vmatprep.subr.mxu0 0.0
        %2075 = vmatpush2.msra.mxu0 0.0
        %2076 = vmatprep.mubr.f32.mxu0 0.0
        %2077 = vmatmul.mubr.f32.gmra.mxu0 %v558
        %v2078 = vpop.f32.mrf.mxu0
        %v2079 = vadd.f32 %v2010, %v2078
        %v2080 = vpop.f32.mrf.mxu0
        %2081 = vdwg.mxu0
        %s2082 = scalar_lea.vmem %s3, 96
        %v2083 = vld [vmem:[%s2082] sm:$0xff]
        %v2084 = vld [vmem:[%s2082 + $0x8] sm:$0xff]
        %v2085 = vld [vmem:[%s2082 + $0x10] sm:$0xff]
        %v2086 = vld [vmem:[%s2082 + $0x18] sm:$0xff]
        %s2087 = scalar_lea.vmem %s4, 3
        %v2088 = vld [vmem:[%s2087] sm:$0x1]
        %v2090 = vlaneseq
        %v2091 = vshrl.u32 %v2090, 7
        %v2092 = vsub.s32 0, %v2091
        %v2093 = vrot.slane %v2088, %v2092
        %2095 = vmatprep.subr.mxu0 0.0
        %2096 = vmatpush1.msra.mxu0 0.0
        %2097 = vmatprep.subr.mxu0 0.0
        %2098 = vmatpush1.msra.mxu0 0.0
        %2099 = vmatprep.subr.mxu0 0.0
        %2100 = vmatpush1.msra.mxu0 0.0
        %2101 = vmatprep.subr.mxu0 0.0
        %2102 = vmatpush1.msra.mxu0 0.0
        %2103 = vmatprep.subr.mxu0 0.0
        %2104 = vmatpush1.msra.mxu0 0.0
        %2105 = vmatprep.subr.mxu0 0.0
        %2106 = vmatpush1.msra.mxu0 0.0
        %2107 = vmatprep.subr.mxu0 0.0
        %2108 = vmatpush1.msra.mxu0 0.0
        %2109 = vmatprep.subr.mxu0 0.0
        %2110 = vmatpush1.msra.mxu0 0.0
        %2111 = vmatprep.subr.mxu0 0.0
        %2112 = vmatpush1.msra.mxu0 0.0
        %2113 = vmatprep.subr.mxu0 0.0
        %2114 = vmatpush1.msra.mxu0 0.0
        %2115 = vmatprep.subr.mxu0 0.0
        %2116 = vmatpush1.msra.mxu0 0.0
        %2117 = vmatprep.subr.mxu0 0.0
        %2118 = vmatpush1.msra.mxu0 0.0
        %2119 = vmatprep.subr.mxu0 0.0
        %2120 = vmatpush1.msra.mxu0 %v2086
        %2121 = vmatprep.subr.mxu0 0.0
        %2122 = vmatpush1.msra.mxu0 %v2085
        %2123 = vmatprep.subr.mxu0 0.0
        %2124 = vmatpush1.msra.mxu0 %v2084
        %2125 = vmatprep.subr.mxu0 0.0
        %2126 = vmatpush1.msra.mxu0 %v2083
        %2127 = vmatprep.subr.mxu0 0.0
        %2128 = vmatpush2.msra.mxu0 0.0
        %2129 = vmatprep.subr.mxu0 0.0
        %2130 = vmatpush2.msra.mxu0 0.0
        %2131 = vmatprep.subr.mxu0 0.0
        %2132 = vmatpush2.msra.mxu0 0.0
        %2133 = vmatprep.subr.mxu0 0.0
        %2134 = vmatpush2.msra.mxu0 0.0
        %2135 = vmatprep.subr.mxu0 0.0
        %2136 = vmatpush2.msra.mxu0 0.0
        %2137 = vmatprep.subr.mxu0 0.0
        %2138 = vmatpush2.msra.mxu0 0.0
        %2139 = vmatprep.subr.mxu0 0.0
        %2140 = vmatpush2.msra.mxu0 0.0
        %2141 = vmatprep.subr.mxu0 0.0
        %2142 = vmatpush2.msra.mxu0 0.0
        %2143 = vmatprep.subr.mxu0 0.0
        %2144 = vmatpush2.msra.mxu0 0.0
        %2145 = vmatprep.subr.mxu0 0.0
        %2146 = vmatpush2.msra.mxu0 0.0
        %2147 = vmatprep.subr.mxu0 0.0
        %2148 = vmatpush2.msra.mxu0 0.0
        %2149 = vmatprep.subr.mxu0 0.0
        %2150 = vmatpush2.msra.mxu0 0.0
        %2151 = vmatprep.subr.mxu0 0.0
        %2152 = vmatpush2.msra.mxu0 0.0
        %2153 = vmatprep.subr.mxu0 0.0
        %2154 = vmatpush2.msra.mxu0 0.0
        %2155 = vmatprep.subr.mxu0 0.0
        %2156 = vmatpush2.msra.mxu0 0.0
        %2157 = vmatprep.subr.mxu0 0.0
        %2158 = vmatpush2.msra.mxu0 0.0
        %2159 = vmatprep.mubr.f32.mxu0 0.0
        %2160 = vmatmul.mubr.f32.gmra.mxu0 %v558
        %v2161 = vpop.f32.mrf.mxu0
        %v2162 = vadd.f32 %v2093, %v2161
        %v2163 = vpop.f32.mrf.mxu0
        %2164 = vdwg.mxu0
        %s2165 = scalar_lea.vmem %s5, 96
        %v2166 = vld [vmem:[%s2165] sm:$0xff]
        %v2167 = vld [vmem:[%s2165 + $0x8] sm:$0xff]
        %v2168 = vld [vmem:[%s2165 + $0x10] sm:$0xff]
        %v2169 = vld [vmem:[%s2165 + $0x18] sm:$0xff]
        %s2170 = scalar_lea.vmem %s6, 3
        %v2171 = vld [vmem:[%s2170] sm:$0x1]
        %v2173 = vlaneseq
        %v2174 = vshrl.u32 %v2173, 7
        %v2175 = vsub.s32 0, %v2174
        %v2176 = vrot.slane %v2171, %v2175
        %2178 = vmatprep.subr.mxu0 0.0
        %2179 = vmatpush1.msra.mxu0 0.0
        %2180 = vmatprep.subr.mxu0 0.0
        %2181 = vmatpush1.msra.mxu0 0.0
        %2182 = vmatprep.subr.mxu0 0.0
        %2183 = vmatpush1.msra.mxu0 0.0
        %2184 = vmatprep.subr.mxu0 0.0
        %2185 = vmatpush1.msra.mxu0 0.0
        %2186 = vmatprep.subr.mxu0 0.0
        %2187 = vmatpush1.msra.mxu0 0.0
        %2188 = vmatprep.subr.mxu0 0.0
        %2189 = vmatpush1.msra.mxu0 0.0
        %2190 = vmatprep.subr.mxu0 0.0
        %2191 = vmatpush1.msra.mxu0 0.0
        %2192 = vmatprep.subr.mxu0 0.0
        %2193 = vmatpush1.msra.mxu0 0.0
        %2194 = vmatprep.subr.mxu0 0.0
        %2195 = vmatpush1.msra.mxu0 0.0
        %2196 = vmatprep.subr.mxu0 0.0
        %2197 = vmatpush1.msra.mxu0 0.0
        %2198 = vmatprep.subr.mxu0 0.0
        %2199 = vmatpush1.msra.mxu0 0.0
        %2200 = vmatprep.subr.mxu0 0.0
        %2201 = vmatpush1.msra.mxu0 0.0
        %2202 = vmatprep.subr.mxu0 0.0
        %2203 = vmatpush1.msra.mxu0 %v2169
        %2204 = vmatprep.subr.mxu0 0.0
        %2205 = vmatpush1.msra.mxu0 %v2168
        %2206 = vmatprep.subr.mxu0 0.0
        %2207 = vmatpush1.msra.mxu0 %v2167
        %2208 = vmatprep.subr.mxu0 0.0
        %2209 = vmatpush1.msra.mxu0 %v2166
        %2210 = vmatprep.subr.mxu0 0.0
        %2211 = vmatpush2.msra.mxu0 0.0
        %2212 = vmatprep.subr.mxu0 0.0
        %2213 = vmatpush2.msra.mxu0 0.0
        %2214 = vmatprep.subr.mxu0 0.0
        %2215 = vmatpush2.msra.mxu0 0.0
        %2216 = vmatprep.subr.mxu0 0.0
        %2217 = vmatpush2.msra.mxu0 0.0
        %2218 = vmatprep.subr.mxu0 0.0
        %2219 = vmatpush2.msra.mxu0 0.0
        %2220 = vmatprep.subr.mxu0 0.0
        %2221 = vmatpush2.msra.mxu0 0.0
        %2222 = vmatprep.subr.mxu0 0.0
        %2223 = vmatpush2.msra.mxu0 0.0
        %2224 = vmatprep.subr.mxu0 0.0
        %2225 = vmatpush2.msra.mxu0 0.0
        %2226 = vmatprep.subr.mxu0 0.0
        %2227 = vmatpush2.msra.mxu0 0.0
        %2228 = vmatprep.subr.mxu0 0.0
        %2229 = vmatpush2.msra.mxu0 0.0
        %2230 = vmatprep.subr.mxu0 0.0
        %2231 = vmatpush2.msra.mxu0 0.0
        %2232 = vmatprep.subr.mxu0 0.0
        %2233 = vmatpush2.msra.mxu0 0.0
        %2234 = vmatprep.subr.mxu0 0.0
        %2235 = vmatpush2.msra.mxu0 0.0
        %2236 = vmatprep.subr.mxu0 0.0
        %2237 = vmatpush2.msra.mxu0 0.0
        %2238 = vmatprep.subr.mxu0 0.0
        %2239 = vmatpush2.msra.mxu0 0.0
        %2240 = vmatprep.subr.mxu0 0.0
        %2241 = vmatpush2.msra.mxu0 0.0
        %2242 = vmatprep.mubr.f32.mxu0 0.0
        %2243 = vmatmul.mubr.f32.gmra.mxu0 %v558
        %v2244 = vpop.f32.mrf.mxu0
        %v2245 = vadd.f32 %v2176, %v2244
        %v2246 = vpop.f32.mrf.mxu0
        %2247 = vdwg.mxu0
        %v2249 = vsel %vm792, %v2079, 0
        %v2252 = vsel %vm792, %v2162, 0
        %2254 = vmatprep.subr.mxu0 0.0
        %2255 = vmatpush1.xpose.msra.mxu0 0.0
        %2256 = vmatprep.subr.mxu0 0.0
        %2257 = vmatpush1.xpose.msra.mxu0 0.0
        %2258 = vmatprep.subr.mxu0 0.0
        %2259 = vmatpush1.xpose.msra.mxu0 0.0
        %2260 = vmatprep.subr.mxu0 0.0
        %2261 = vmatpush1.xpose.msra.mxu0 0.0
        %2262 = vmatprep.subr.mxu0 0.0
        %2263 = vmatpush1.xpose.msra.mxu0 0.0
        %2264 = vmatprep.subr.mxu0 0.0
        %2265 = vmatpush1.xpose.msra.mxu0 0.0
        %2266 = vmatprep.subr.mxu0 0.0
        %2267 = vmatpush1.xpose.msra.mxu0 0.0
        %2268 = vmatprep.subr.mxu0 0.0
        %2269 = vmatpush1.xpose.msra.mxu0 0.0
        %2270 = vmatprep.subr.mxu0 0.0
        %2271 = vmatpush1.xpose.msra.mxu0 0.0
        %2272 = vmatprep.subr.mxu0 0.0
        %2273 = vmatpush1.xpose.msra.mxu0 0.0
        %2274 = vmatprep.subr.mxu0 0.0
        %2275 = vmatpush1.xpose.msra.mxu0 0.0
        %2276 = vmatprep.subr.mxu0 0.0
        %2277 = vmatpush1.xpose.msra.mxu0 0.0
        %2278 = vmatprep.subr.mxu0 0.0
        %2279 = vmatpush1.xpose.msra.mxu0 0.0
        %2280 = vmatprep.subr.mxu0 0.0
        %2281 = vmatpush1.xpose.msra.mxu0 0.0
        %2282 = vmatprep.subr.mxu0 0.0
        %2283 = vmatpush1.xpose.msra.mxu0 0.0
        %2284 = vmatprep.subr.mxu0 0.0
        %2285 = vmatpush1.xpose.msra.mxu0 %v2252
        %2286 = vmatprep.subr.mxu0 0.0
        %2287 = vmatpush2.xpose.msra.mxu0 0.0
        %2288 = vmatprep.subr.mxu0 0.0
        %2289 = vmatpush2.xpose.msra.mxu0 0.0
        %2290 = vmatprep.subr.mxu0 0.0
        %2291 = vmatpush2.xpose.msra.mxu0 0.0
        %2292 = vmatprep.subr.mxu0 0.0
        %2293 = vmatpush2.xpose.msra.mxu0 0.0
        %2294 = vmatprep.subr.mxu0 0.0
        %2295 = vmatpush2.xpose.msra.mxu0 0.0
        %2296 = vmatprep.subr.mxu0 0.0
        %2297 = vmatpush2.xpose.msra.mxu0 0.0
        %2298 = vmatprep.subr.mxu0 0.0
        %2299 = vmatpush2.xpose.msra.mxu0 0.0
        %2300 = vmatprep.subr.mxu0 0.0
        %2301 = vmatpush2.xpose.msra.mxu0 0.0
        %2302 = vmatprep.subr.mxu0 0.0
        %2303 = vmatpush2.xpose.msra.mxu0 0.0
        %2304 = vmatprep.subr.mxu0 0.0
        %2305 = vmatpush2.xpose.msra.mxu0 0.0
        %2306 = vmatprep.subr.mxu0 0.0
        %2307 = vmatpush2.xpose.msra.mxu0 0.0
        %2308 = vmatprep.subr.mxu0 0.0
        %2309 = vmatpush2.xpose.msra.mxu0 0.0
        %2310 = vmatprep.subr.mxu0 0.0
        %2311 = vmatpush2.xpose.msra.mxu0 0.0
        %2312 = vmatprep.subr.mxu0 0.0
        %2313 = vmatpush2.xpose.msra.mxu0 0.0
        %2314 = vmatprep.subr.mxu0 0.0
        %2315 = vmatpush2.xpose.msra.mxu0 0.0
        %2316 = vmatprep.subr.mxu0 0.0
        %2317 = vmatpush2.xpose.msra.mxu0 0.0
        %2318 = vmatprep.mubr.f32.mxu0 0.0
        %2319 = vmatmul.mubr.f32.gmra.mxu0 %v2249
        %v2320 = vpop.f32.mrf.mxu0
        %v2321 = vadd.f32 0.0, %v2320
        %v2322 = vpop.f32.mrf.mxu0
        %2323 = vdwg.mxu0
        %v2324 = vmul.f32 %v2321, 0.35355338
        %v2325 = vsel %vm792, %v2324, -inf
        %2326 = vmax.xlane.f32.xlu0 %v2325
        %v2327 = vpop.xlane.xlu0 %2326
        %v2328 = vsub.f32 %v2324, %v2327
        %v2329 = vmul.f32 %v2328, 1.442695
        %v2330 = vpow.pop %v2329
        %v2331 = vsel %vm792, %v2330, 0.0
        %2332 = vadd.xlane.f32.xlu0 %v2331
        %v2333 = vpop.xlane.xlu0 %2332
        %v2334 = vrcp.pop %v2333
        %v2335 = vmul.f32 %v2330, %v2334
        %v2337 = vsel %vm792, %v2335, 0
        %2339 = vmatprep.subr.mxu0 0.0
        %2340 = vmatpush1.msra.mxu0 0.0
        %2341 = vmatprep.subr.mxu0 0.0
        %2342 = vmatpush1.msra.mxu0 0.0
        %2343 = vmatprep.subr.mxu0 0.0
        %2344 = vmatpush1.msra.mxu0 0.0
        %2345 = vmatprep.subr.mxu0 0.0
        %2346 = vmatpush1.msra.mxu0 0.0
        %2347 = vmatprep.subr.mxu0 0.0
        %2348 = vmatpush1.msra.mxu0 0.0
        %2349 = vmatprep.subr.mxu0 0.0
        %2350 = vmatpush1.msra.mxu0 0.0
        %2351 = vmatprep.subr.mxu0 0.0
        %2352 = vmatpush1.msra.mxu0 0.0
        %2353 = vmatprep.subr.mxu0 0.0
        %2354 = vmatpush1.msra.mxu0 0.0
        %2355 = vmatprep.subr.mxu0 0.0
        %2356 = vmatpush1.msra.mxu0 0.0
        %2357 = vmatprep.subr.mxu0 0.0
        %2358 = vmatpush1.msra.mxu0 0.0
        %2359 = vmatprep.subr.mxu0 0.0
        %2360 = vmatpush1.msra.mxu0 0.0
        %2361 = vmatprep.subr.mxu0 0.0
        %2362 = vmatpush1.msra.mxu0 0.0
        %2363 = vmatprep.subr.mxu0 0.0
        %2364 = vmatpush1.msra.mxu0 0.0
        %2365 = vmatprep.subr.mxu0 0.0
        %2366 = vmatpush1.msra.mxu0 0.0
        %2367 = vmatprep.subr.mxu0 0.0
        %2368 = vmatpush1.msra.mxu0 0.0
        %2369 = vmatprep.subr.mxu0 0.0
        %2370 = vmatpush1.msra.mxu0 %v2245
        %2371 = vmatprep.subr.mxu0 0.0
        %2372 = vmatpush2.msra.mxu0 0.0
        %2373 = vmatprep.subr.mxu0 0.0
        %2374 = vmatpush2.msra.mxu0 0.0
        %2375 = vmatprep.subr.mxu0 0.0
        %2376 = vmatpush2.msra.mxu0 0.0
        %2377 = vmatprep.subr.mxu0 0.0
        %2378 = vmatpush2.msra.mxu0 0.0
        %2379 = vmatprep.subr.mxu0 0.0
        %2380 = vmatpush2.msra.mxu0 0.0
        %2381 = vmatprep.subr.mxu0 0.0
        %2382 = vmatpush2.msra.mxu0 0.0
        %2383 = vmatprep.subr.mxu0 0.0
        %2384 = vmatpush2.msra.mxu0 0.0
        %2385 = vmatprep.subr.mxu0 0.0
        %2386 = vmatpush2.msra.mxu0 0.0
        %2387 = vmatprep.subr.mxu0 0.0
        %2388 = vmatpush2.msra.mxu0 0.0
        %2389 = vmatprep.subr.mxu0 0.0
        %2390 = vmatpush2.msra.mxu0 0.0
        %2391 = vmatprep.subr.mxu0 0.0
        %2392 = vmatpush2.msra.mxu0 0.0
        %2393 = vmatprep.subr.mxu0 0.0
        %2394 = vmatpush2.msra.mxu0 0.0
        %2395 = vmatprep.subr.mxu0 0.0
        %2396 = vmatpush2.msra.mxu0 0.0
        %2397 = vmatprep.subr.mxu0 0.0
        %2398 = vmatpush2.msra.mxu0 0.0
        %2399 = vmatprep.subr.mxu0 0.0
        %2400 = vmatpush2.msra.mxu0 0.0
        %2401 = vmatprep.subr.mxu0 0.0
        %2402 = vmatpush2.msra.mxu0 0.0
        %2403 = vmatprep.mubr.f32.mxu0 0.0
        %2404 = vmatmul.mubr.f32.gmra.mxu0 %v2337
        %v2405 = vpop.f32.mrf.mxu0
        %v2406 = vadd.f32 0.0, %v2405
        %v2407 = vpop.f32.mrf.mxu0
        %2408 = vdwg.mxu0
        %s2409 = scalar_lea.vmem %s7, 24
        %v2410 = vld [vmem:[%s2409] sm:$0xff]
        %v2412 = vsel %vm792, %v2406, 0
        %2414 = vmatprep.subr.mxu0 0.0
        %2415 = vmatpush1.msra.mxu0 0.0
        %2416 = vmatprep.subr.mxu0 0.0
        %2417 = vmatpush1.msra.mxu0 0.0
        %2418 = vmatprep.subr.mxu0 0.0
        %2419 = vmatpush1.msra.mxu0 0.0
        %2420 = vmatprep.subr.mxu0 0.0
        %2421 = vmatpush1.msra.mxu0 0.0
        %2422 = vmatprep.subr.mxu0 0.0
        %2423 = vmatpush1.msra.mxu0 0.0
        %2424 = vmatprep.subr.mxu0 0.0
        %2425 = vmatpush1.msra.mxu0 0.0
        %2426 = vmatprep.subr.mxu0 0.0
        %2427 = vmatpush1.msra.mxu0 0.0
        %2428 = vmatprep.subr.mxu0 0.0
        %2429 = vmatpush1.msra.mxu0 0.0
        %2430 = vmatprep.subr.mxu0 0.0
        %2431 = vmatpush1.msra.mxu0 0.0
        %2432 = vmatprep.subr.mxu0 0.0
        %2433 = vmatpush1.msra.mxu0 0.0
        %2434 = vmatprep.subr.mxu0 0.0
        %2435 = vmatpush1.msra.mxu0 0.0
        %2436 = vmatprep.subr.mxu0 0.0
        %2437 = vmatpush1.msra.mxu0 0.0
        %2438 = vmatprep.subr.mxu0 0.0
        %2439 = vmatpush1.msra.mxu0 0.0
        %2440 = vmatprep.subr.mxu0 0.0
        %2441 = vmatpush1.msra.mxu0 0.0
        %2442 = vmatprep.subr.mxu0 0.0
        %2443 = vmatpush1.msra.mxu0 0.0
        %2444 = vmatprep.subr.mxu0 0.0
        %2445 = vmatpush1.msra.mxu0 %v2410
        %2446 = vmatprep.subr.mxu0 0.0
        %2447 = vmatpush2.msra.mxu0 0.0
        %2448 = vmatprep.subr.mxu0 0.0
        %2449 = vmatpush2.msra.mxu0 0.0
        %2450 = vmatprep.subr.mxu0 0.0
        %2451 = vmatpush2.msra.mxu0 0.0
        %2452 = vmatprep.subr.mxu0 0.0
        %2453 = vmatpush2.msra.mxu0 0.0
        %2454 = vmatprep.subr.mxu0 0.0
        %2455 = vmatpush2.msra.mxu0 0.0
        %2456 = vmatprep.subr.mxu0 0.0
        %2457 = vmatpush2.msra.mxu0 0.0
        %2458 = vmatprep.subr.mxu0 0.0
        %2459 = vmatpush2.msra.mxu0 0.0
        %2460 = vmatprep.subr.mxu0 0.0
        %2461 = vmatpush2.msra.mxu0 0.0
        %2462 = vmatprep.subr.mxu0 0.0
        %2463 = vmatpush2.msra.mxu0 0.0
        %2464 = vmatprep.subr.mxu0 0.0
        %2465 = vmatpush2.msra.mxu0 0.0
        %2466 = vmatprep.subr.mxu0 0.0
        %2467 = vmatpush2.msra.mxu0 0.0
        %2468 = vmatprep.subr.mxu0 0.0
        %2469 = vmatpush2.msra.mxu0 0.0
        %2470 = vmatprep.subr.mxu0 0.0
        %2471 = vmatpush2.msra.mxu0 0.0
        %2472 = vmatprep.subr.mxu0 0.0
        %2473 = vmatpush2.msra.mxu0 0.0
        %2474 = vmatprep.subr.mxu0 0.0
        %2475 = vmatpush2.msra.mxu0 0.0
        %2476 = vmatprep.subr.mxu0 0.0
        %2477 = vmatpush2.msra.mxu0 0.0
        %2478 = vmatprep.mubr.f32.mxu0 0.0
        %2479 = vmatmul.mubr.f32.gmra.mxu0 %v2412
        %v2480 = vpop.f32.mrf.mxu0
        %v2481 = vadd.f32 0.0, %v2480
        %v2482 = vpop.f32.mrf.mxu0
        %2483 = vdwg.mxu0
        %v2484 = vadd.f32 %v1998, %v2481
        %v2485 = vld [vmem:[%s8] sm:$0x1]
        %v2487 = vlaneseq
        %v2488 = vshrl.u32 %v2487, 7
        %v2489 = vsub.s32 0, %v2488
        %v2490 = vrot.slane %v2485, %v2489
        %v2492 = vadd.f32 %v2484, %v2490
        %v2493 = vadd.f32 %v544, %v2492
        %v2494 = vld [vmem:[%s13] sm:$0x1]
        %v2495 = vld [vmem:[%s14] sm:$0x1]
        %v2496 = vsel %vm556, %v2493, 0.0
        %2497 = vadd.xlane.f32.xlu0 %v2496
        %v2498 = vpop.xlane.xlu0 %2497
        %v2499 = vrcp.pop 32.0
        %v2500 = vmul.f32 %v2498, %v2499
        %v2501 = vsub.f32 %v2493, %v2500
        %v2502 = vmul.f32 %v2501, %v2501
        %v2503 = vsel %vm556, %v2502, 0.0
        %2504 = vadd.xlane.f32.xlu0 %v2503
        %v2505 = vpop.xlane.xlu0 %2504
        %v2506 = vmul.f32 %v2505, %v2499
        %v2507 = vadd.f32 %v2506, 1e-05
        %v2508 = vrsqrt.pop %v2507
        %v2509 = vmul.f32 %v2501, %v2508
        %v2511 = vlaneseq
        %v2512 = vshrl.u32 %v2511, 7
        %v2513 = vsub.s32 0, %v2512
        %v2514 = vrot.slane %v2494, %v2513
        %v2516 = vmul.f32 %v2509, %v2514
        %v2518 = vlaneseq
        %v2519 = vshrl.u32 %v2518, 7
        %v2520 = vsub.s32 0, %v2519
        %v2521 = vrot.slane %v2495, %v2520
        %v2523 = vadd.f32 %v2516, %v2521
        %v2524 = vld [vmem:[%s9] sm:$0xff]
        %v2525 = vld [vmem:[%s9 + $0x8] sm:$0xff]
        %v2526 = vld [vmem:[%s9 + $0x10] sm:$0xff]
        %v2527 = vld [vmem:[%s9 + $0x18] sm:$0xff]
        %v2528 = vld [vmem:[%s10] sm:$0x1]
        %v2530 = vlaneseq
        %v2531 = vshrl.u32 %v2530, 7
        %v2532 = vsub.s32 0, %v2531
        %v2533 = vrot.slane %v2528, %v2532
        %v2536 = vsel %vm556, %v2523, 0
        %2538 = vmatprep.subr.mxu0 0.0
        %2539 = vmatpush1.msra.mxu0 0.0
        %2540 = vmatprep.subr.mxu0 0.0
        %2541 = vmatpush1.msra.mxu0 0.0
        %2542 = vmatprep.subr.mxu0 0.0
        %2543 = vmatpush1.msra.mxu0 0.0
        %2544 = vmatprep.subr.mxu0 0.0
        %2545 = vmatpush1.msra.mxu0 0.0
        %2546 = vmatprep.subr.mxu0 0.0
        %2547 = vmatpush1.msra.mxu0 0.0
        %2548 = vmatprep.subr.mxu0 0.0
        %2549 = vmatpush1.msra.mxu0 0.0
        %2550 = vmatprep.subr.mxu0 0.0
        %2551 = vmatpush1.msra.mxu0 0.0
        %2552 = vmatprep.subr.mxu0 0.0
        %2553 = vmatpush1.msra.mxu0 0.0
        %2554 = vmatprep.subr.mxu0 0.0
        %2555 = vmatpush1.msra.mxu0 0.0
        %2556 = vmatprep.subr.mxu0 0.0
        %2557 = vmatpush1.msra.mxu0 0.0
        %2558 = vmatprep.subr.mxu0 0.0
        %2559 = vmatpush1.msra.mxu0 0.0
        %2560 = vmatprep.subr.mxu0 0.0
        %2561 = vmatpush1.msra.mxu0 0.0
        %2562 = vmatprep.subr.mxu0 0.0
        %2563 = vmatpush1.msra.mxu0 %v2527
        %2564 = vmatprep.subr.mxu0 0.0
        %2565 = vmatpush1.msra.mxu0 %v2526
        %2566 = vmatprep.subr.mxu0 0.0
        %2567 = vmatpush1.msra.mxu0 %v2525
        %2568 = vmatprep.subr.mxu0 0.0
        %2569 = vmatpush1.msra.mxu0 %v2524
        %2570 = vmatprep.subr.mxu0 0.0
        %2571 = vmatpush2.msra.mxu0 0.0
        %2572 = vmatprep.subr.mxu0 0.0
        %2573 = vmatpush2.msra.mxu0 0.0
        %2574 = vmatprep.subr.mxu0 0.0
        %2575 = vmatpush2.msra.mxu0 0.0
        %2576 = vmatprep.subr.mxu0 0.0
        %2577 = vmatpush2.msra.mxu0 0.0
        %2578 = vmatprep.subr.mxu0 0.0
        %2579 = vmatpush2.msra.mxu0 0.0
        %2580 = vmatprep.subr.mxu0 0.0
        %2581 = vmatpush2.msra.mxu0 0.0
        %2582 = vmatprep.subr.mxu0 0.0
        %2583 = vmatpush2.msra.mxu0 0.0
        %2584 = vmatprep.subr.mxu0 0.0
        %2585 = vmatpush2.msra.mxu0 0.0
        %2586 = vmatprep.subr.mxu0 0.0
        %2587 = vmatpush2.msra.mxu0 0.0
        %2588 = vmatprep.subr.mxu0 0.0
        %2589 = vmatpush2.msra.mxu0 0.0
        %2590 = vmatprep.subr.mxu0 0.0
        %2591 = vmatpush2.msra.mxu0 0.0
        %2592 = vmatprep.subr.mxu0 0.0
        %2593 = vmatpush2.msra.mxu0 0.0
        %2594 = vmatprep.subr.mxu0 0.0
        %2595 = vmatpush2.msra.mxu0 0.0
        %2596 = vmatprep.subr.mxu0 0.0
        %2597 = vmatpush2.msra.mxu0 0.0
        %2598 = vmatprep.subr.mxu0 0.0
        %2599 = vmatpush2.msra.mxu0 0.0
        %2600 = vmatprep.subr.mxu0 0.0
        %2601 = vmatpush2.msra.mxu0 0.0
        %2602 = vmatprep.mubr.f32.mxu0 0.0
        %2603 = vmatmul.mubr.f32.gmra.mxu0 %v2536
        %v2604 = vpop.f32.mrf.mxu0
        %v2605 = vadd.f32 %v2533, %v2604
        %v2606 = vpop.f32.mrf.mxu0
        %2607 = vdwg.mxu0
        %v2608 = vmax.f32 %v2605, 0.0
        %v2609 = vld [vmem:[%s11] sm:$0xff]
        %v2610 = vld [vmem:[%s11 + $0x8] sm:$0xff]
        %v2611 = vld [vmem:[%s11 + $0x10] sm:$0xff]
        %v2612 = vld [vmem:[%s11 + $0x18] sm:$0xff]
        %v2613 = vld [vmem:[%s11 + $0x20] sm:$0xff]
        %v2614 = vld [vmem:[%s11 + $0x28] sm:$0xff]
        %v2615 = vld [vmem:[%s11 + $0x30] sm:$0xff]
        %v2616 = vld [vmem:[%s11 + $0x38] sm:$0xff]
        %v2617 = vld [vmem:[%s11 + $0x40] sm:$0xff]
        %v2618 = vld [vmem:[%s11 + $0x48] sm:$0xff]
        %v2619 = vld [vmem:[%s11 + $0x50] sm:$0xff]
        %v2620 = vld [vmem:[%s11 + $0x58] sm:$0xff]
        %v2621 = vld [vmem:[%s11 + $0x60] sm:$0xff]
        %v2622 = vld [vmem:[%s11 + $0x68] sm:$0xff]
        %v2623 = vld [vmem:[%s11 + $0x70] sm:$0xff]
        %v2624 = vld [vmem:[%s11 + $0x78] sm:$0xff]
        %v2625 = vld [vmem:[%s12] sm:$0x1]
        %v2627 = vlaneseq
        %v2628 = vshrl.u32 %v2627, 7
        %v2629 = vsub.s32 0, %v2628
        %v2630 = vrot.slane %v2625, %v2629
        %2632 = vmatprep.subr.mxu0 0.0
        %2633 = vmatpush1.msra.mxu0 %v2624
        %2634 = vmatprep.subr.mxu0 0.0
        %2635 = vmatpush1.msra.mxu0 %v2623
        %2636 = vmatprep.subr.mxu0 0.0
        %2637 = vmatpush1.msra.mxu0 %v2622
        %2638 = vmatprep.subr.mxu0 0.0
        %2639 = vmatpush1.msra.mxu0 %v2621
        %2640 = vmatprep.subr.mxu0 0.0
        %2641 = vmatpush1.msra.mxu0 %v2620
        %2642 = vmatprep.subr.mxu0 0.0
        %2643 = vmatpush1.msra.mxu0 %v2619
        %2644 = vmatprep.subr.mxu0 0.0
        %2645 = vmatpush1.msra.mxu0 %v2618
        %2646 = vmatprep.subr.mxu0 0.0
        %2647 = vmatpush1.msra.mxu0 %v2617
        %2648 = vmatprep.subr.mxu0 0.0
        %2649 = vmatpush1.msra.mxu0 %v2616
        %2650 = vmatprep.subr.mxu0 0.0
        %2651 = vmatpush1.msra.mxu0 %v2615
        %2652 = vmatprep.subr.mxu0 0.0
        %2653 = vmatpush1.msra.mxu0 %v2614
        %2654 = vmatprep.subr.mxu0 0.0
        %2655 = vmatpush1.msra.mxu0 %v2613
        %2656 = vmatprep.subr.mxu0 0.0
        %2657 = vmatpush1.msra.mxu0 %v2612
        %2658 = vmatprep.subr.mxu0 0.0
        %2659 = vmatpush1.msra.mxu0 %v2611
        %2660 = vmatprep.subr.mxu0 0.0
        %2661 = vmatpush1.msra.mxu0 %v2610
        %2662 = vmatprep.subr.mxu0 0.0
        %2663 = vmatpush1.msra.mxu0 %v2609
        %2664 = vmatprep.subr.mxu0 0.0
        %2665 = vmatpush2.msra.mxu0 0.0
        %2666 = vmatprep.subr.mxu0 0.0
        %2667 = vmatpush2.msra.mxu0 0.0
        %2668 = vmatprep.subr.mxu0 0.0
        %2669 = vmatpush2.msra.mxu0 0.0
        %2670 = vmatprep.subr.mxu0 0.0
        %2671 = vmatpush2.msra.mxu0 0.0
        %2672 = vmatprep.subr.mxu0 0.0
        %2673 = vmatpush2.msra.mxu0 0.0
        %2674 = vmatprep.subr.mxu0 0.0
        %2675 = vmatpush2.msra.mxu0 0.0
        %2676 = vmatprep.subr.mxu0 0.0
        %2677 = vmatpush2.msra.mxu0 0.0
        %2678 = vmatprep.subr.mxu0 0.0
        %2679 = vmatpush2.msra.mxu0 0.0
        %2680 = vmatprep.subr.mxu0 0.0
        %2681 = vmatpush2.msra.mxu0 0.0
        %2682 = vmatprep.subr.mxu0 0.0
        %2683 = vmatpush2.msra.mxu0 0.0
        %2684 = vmatprep.subr.mxu0 0.0
        %2685 = vmatpush2.msra.mxu0 0.0
        %2686 = vmatprep.subr.mxu0 0.0
        %2687 = vmatpush2.msra.mxu0 0.0
        %2688 = vmatprep.subr.mxu0 0.0
        %2689 = vmatpush2.msra.mxu0 0.0
        %2690 = vmatprep.subr.mxu0 0.0
        %2691 = vmatpush2.msra.mxu0 0.0
        %2692 = vmatprep.subr.mxu0 0.0
        %2693 = vmatpush2.msra.mxu0 0.0
        %2694 = vmatprep.subr.mxu0 0.0
        %2695 = vmatpush2.msra.mxu0 0.0
        %2696 = vmatprep.mubr.f32.mxu0 0.0
        %2697 = vmatmul.mubr.f32.gmra.mxu0 %v2608
        %v2698 = vpop.f32.mrf.mxu0
        %v2699 = vadd.f32 %v2630, %v2698
        %v2700 = vpop.f32.mrf.mxu0
        %2701 = vdwg.mxu0
        %v2702 = vadd.f32 %v2523, %v2699
        %v2703 = vld [vmem:[%s15] sm:$0x1]
        %v2704 = vld [vmem:[%s16] sm:$0x1]
        %v2705 = vsel %vm556, %v2702, 0.0
        %2706 = vadd.xlane.f32.xlu0 %v2705
        %v2707 = vpop.xlane.xlu0 %2706
        %v2708 = vmul.f32 %v2707, %v2499
        %v2709 = vsub.f32 %v2702, %v2708
        %v2710 = vmul.f32 %v2709, %v2709
        %v2711 = vsel %vm556, %v2710, 0.0
        %2712 = vadd.xlane.f32.xlu0 %v2711
        %v2713 = vpop.xlane.xlu0 %2712
        %v2714 = vmul.f32 %v2713, %v2499
        %v2715 = vadd.f32 %v2714, 1e-05
        %v2716 = vrsqrt.pop %v2715
        %v2717 = vmul.f32 %v2709, %v2716
        %v2719 = vlaneseq
        %v2720 = vshrl.u32 %v2719, 7
        %v2721 = vsub.s32 0, %v2720
        %v2722 = vrot.slane %v2703, %v2721
        %v2724 = vmul.f32 %v2717, %v2722
        %v2726 = vlaneseq
        %v2727 = vshrl.u32 %v2726, 7
        %v2728 = vsub.s32 0, %v2727
        %v2729 = vrot.slane %v2704, %v2728
        %v2731 = vadd.f32 %v2724, %v2729
        %2732 = vst.msk [vmem:[%s539] sm:$0xff] %vm556, %v2731
        %s2733 = sand.u32 %s401, 1
        %s2734 = scalar_lea.sflag [#allocation3], %s2733
        %s2735 = sand.u32 %s401, 1
        %s2736 = smul.addr %s2735, 8
        %s2737 = scalar_lea.vmem [#allocation2], %s2736
        // Predicated region
        $region89: #{tpu_custom_call.1} parent=87 // pred_check
          %p2738 = pneg %p411
        $region90: #{tpu_custom_call.1} parent=87 // pred_check_branch
          %2740 = sbr.rel (%p2738) target = $region92
        $region91: #{tpu_custom_call.1} parent=87 // pred_region
          %s2742 = ssub.s32 128, 128
          %2743 = vsyncadd %s2734, %s2742
          %s2744 = smul.addr %s31, 128
          %s2745 = scalar_lea.hbm %s17, %s2744
          %s2747 = sshll.u32 %s2737, 4
          %s2748 = int_to_ptr.vmem [resolvable:$true] %s2747
          %2750 = dma.vmem_to_hbm [thread:$0]  %s2748, 128, %s2745, %s2734
        $region92: #{tpu_custom_call.1} parent=87 // pred_fallthru
          _
      $region88: #{tpu_custom_call.1} parent=5 // pred_fallthru
        _
      %p2751 = scmp.le.s32.totalorder 2, %s26
      // Predicated region
      $region93: #{tpu_custom_call.1} parent=5 // pred_check
        %p2752 = pneg %p2751
      $region94: #{tpu_custom_call.1} parent=5 // pred_check_branch
        %2754 = sbr.rel (%p2752) target = $region96
      $region95: #{tpu_custom_call.1} parent=5 // pred_region
        %s2755 = ssub.s32 %s26, 2
        // Predicated region
        $region97: #{tpu_custom_call.1} parent=95 // pred_check
          %p2756 = pneg %p417
        $region98: #{tpu_custom_call.1} parent=95 // pred_check_branch
          %2758 = sbr.rel (%p2756) target = $region100
        $region99: #{tpu_custom_call.1} parent=95 // pred_region
          %s2759 = sand.u32 %s402, 1
          %s2760 = scalar_lea.sflag [#allocation3], %s2759
          %s2761 = sand.u32 %s402, 1
          %s2762 = smul.addr %s2761, 8
          %s2763 = scalar_lea.vmem [#allocation2], %s2762
          %2764 = dma.done %s2760, 128
        $region100: #{tpu_custom_call.1} parent=95 // pred_fallthru
          _
      $region96: #{tpu_custom_call.1} parent=5 // pred_fallthru
        _
    $region6: #{tpu_custom_call.1} parent=1 // loop_footer
      %s30 = sadd.s32 1, %s26
    $region7: #{tpu_custom_call.1} parent=1 // loop_footer_branch
      %25 = sbr.rel target = $region3
    $region8: #{tpu_custom_call.1} parent=1 // loop_exit
      _
    %2765 = vsyncpa [#allocation3], 1
    %s2766 = scalar_lea.sflag [#allocation3], 1
    %2767 = vsyncpa %s2766, 1

</llo_original>
